<compile_context>
chip_gen: v5e
topology: v5e:2x2
jax: 0.10.0
libtpu: 0.0.40
codegen_flags: <defaults>
</compile_context>

<pallas_src>
import math
import functools

import jax
import jax.numpy as jnp
from jax.experimental import pallas as pl
from jax.experimental.pallas import tpu as pltpu


def _round_up(x: int, m: int) -> int:
    return m * pl.cdiv(x, m)


def _pick_batch_tile(batch: int, cap: int, mult: int) -> int:
    """Batch tile: multiple of `mult` (sublane tile of the MXU dtype), capped
    (the unrolled f32 h/c state costs ~Bt/2 vregs), and sized so the grid has
    >= 2 steps when the batch allows (v7x megacore sharding across 2 TCs)."""
    cap = max(_round_up(cap, mult), mult)
    if batch <= cap:
        return _round_up(batch, mult)
    n_tiles = pl.cdiv(batch, cap)
    return _round_up(pl.cdiv(batch, n_tiles), mult)


def _lstm_stack_kernel(xproj_ref,   # (T, Bt, 4Hp) mxu dtype: x@W1x^T + b1, gates [i,f,o,g]
                       w1h_ref,     # (Hp, 4Hp)    mxu dtype
                       w2x_ref,     # (Hp, 4Hp)    mxu dtype
                       w2h_ref,     # (Hp, 4Hp)    mxu dtype
                       b2_ref,      # (1, 4Hp)     f32  (b_ih + b_hh, layer 2)
                       wfc_ref,     # (Hp, Op)     mxu dtype
                       bfc_ref,     # (1, Op)      f32
                       out_ref,     # (Bt, Op)     f32
                       *, hidden_pad: int, batch_tile: int, time_steps: int):
    Hp, Bt, T = hidden_pad, batch_tile, time_steps
    dt = w1h_ref.dtype            # MXU operand dtype for the recurrence

    # Hoisted loads / broadcasts (JAX does not CSE broadcast_in_dim).
    w1h = w1h_ref[...]
    w2x = w2x_ref[...]
    w2h = w2h_ref[...]
    b2 = jnp.broadcast_to(b2_ref[...], (Bt, 4 * Hp))

    def gates_to_hc(gates, c):
        # Packed gate order [i, f, o, g]: one wide sigmoid over the first three
        # contiguous gate blocks (single EUP launch), tanh on the last block.
        # Hp is a lane multiple, so every slice is a free tile-aligned view.
        sig = jax.nn.sigmoid(gates[:, :3 * Hp])
        i = sig[:, 0 * Hp:1 * Hp]
        f = sig[:, 1 * Hp:2 * Hp]
        o = sig[:, 2 * Hp:3 * Hp]
        g = jnp.tanh(gates[:, 3 * Hp:4 * Hp])
        c_new = f * c + i * g
        return o * jnp.tanh(c_new), c_new

    h1 = c1 = h2 = c2 = jnp.zeros((Bt, Hp), jnp.float32)

    # Fully unrolled time loop (T is small & static): static slices and full
    # cross-iteration visibility for the scheduler.
    for t in range(T):
        # Layer-2 recurrent contribution: depends only on h2_{t-1}, so this MXU
        # push can overlap layer-1's sigmoid/tanh (EUP) on the critical path.
        a2 = b2 + jnp.dot(h2.astype(dt), w2h, preferred_element_type=jnp.float32)

        # Layer 1: precomputed x-projection (bias folded) + recurrent matmul.
        g1 = (xproj_ref[t].astype(jnp.float32)
              + jnp.dot(h1.astype(dt), w1h, preferred_element_type=jnp.float32))
        h1, c1 = gates_to_hc(g1, c1)

        # Layer 2: input contribution on the fresh h1_t.
        g2 = a2 + jnp.dot(h1.astype(dt), w2x, preferred_element_type=jnp.float32)
        h2, c2 = gates_to_hc(g2, c2)

    # fc on the last timestep of layer-2 output (== h2 after the final step).
    out_ref[...] = (
        jnp.dot(h2.astype(dt), wfc_ref[...], preferred_element_type=jnp.float32)
        + bfc_ref[...])


# Packed gate block order; PyTorch packs LSTM gates as [i, f, g, o].
_GATE_ORDER = (0, 1, 3, 2)   # packed block k <- PyTorch gate _GATE_ORDER[k]


def lstm_model_forward(x_btd, params, *, hidden_dim,
                       mxu_dtype=jnp.bfloat16, max_block_b=64):
    """x_btd: (B, T, D) float32, batch_first like the PyTorch module.

    mxu_dtype:   dtype of MXU operands (bf16 on v5e/v6e/v7x; f32 for bit-close
                 checking).  State / accumulation / biases stay f32.
    max_block_b: cap on the per-grid-step batch tile (unrolled f32 state costs
                 ~Bt/2 vregs, so keep <= ~64 to avoid spills).
    """
    B, T, D = x_btd.shape
    H = hidden_dim
    O = params["w_fc"].shape[0]
    f32 = jnp.float32

    Hp = _round_up(H, 128)                 # lane-tile-aligned gate slices
    Op = _round_up(O, 128)                 # lane-dense output store
    sub = 8 * 4 // jnp.dtype(mxu_dtype).itemsize   # sublane tile: 8 f32 / 16 bf16
    Bt = _pick_batch_tile(B, max_block_b, sub)
    Bp = _round_up(B, Bt)

    # ---- glue: gate reorder / padding + tiny input projection (plain XLA) ----
    def pack_gate_cols(w_t):
        # (in, 4H) -> (in, 4Hp): packed gate block k takes PyTorch gate
        # _GATE_ORDER[k]; padded columns stay exactly zero.
        out = jnp.zeros((w_t.shape[0], 4 * Hp), f32)
        for k, src in enumerate(_GATE_ORDER):
            out = out.at[:, k * Hp:k * Hp + H].set(w_t[:, src * H:(src + 1) * H])
        return out

    def pad_rows(w, rows):
        return jnp.zeros((rows, w.shape[1]), f32).at[:w.shape[0]].set(w)

    # Layer-1 input projection precomputed outside the kernel (K = D = 3 is a
    # trivial matmul; doing it here removes the D->128 padding waste and the
    # in-kernel projection + xproj scratch entirely).
    b1 = (params["b_ih_l1"] + params["b_hh_l1"]).astype(f32)                 # (4H,)
    xproj = jnp.einsum("btd,gd->btg", x_btd.astype(f32),
                       params["w_ih_l1"].astype(f32)) + b1                   # (B,T,4H)
    xproj = jnp.transpose(xproj, (1, 0, 2))                                  # (T,B,4H)
    xproj_p = jnp.zeros((T, Bp, 4 * Hp), f32)
    for k, src in enumerate(_GATE_ORDER):
        xproj_p = xproj_p.at[:, :B, k * Hp:k * Hp + H].set(
            xproj[:, :, src * H:(src + 1) * H])
    xproj_p = xproj_p.astype(mxu_dtype)    # halves HBM/VMEM traffic when bf16

    w1h = pad_rows(pack_gate_cols(params["w_hh_l1"].T.astype(f32)), Hp)      # (Hp,4Hp)
    w2x = pad_rows(pack_gate_cols(params["w_ih_l2"].T.astype(f32)), Hp)      # (Hp,4Hp)
    w2h = pad_rows(pack_gate_cols(params["w_hh_l2"].T.astype(f32)), Hp)      # (Hp,4Hp)
    b2 = pack_gate_cols(
        (params["b_ih_l2"] + params["b_hh_l2"]).reshape(1, -1).astype(f32))
    wfc = jnp.zeros((Hp, Op), f32).at[:H, :O].set(params["w_fc"].T.astype(f32))
    bfc = jnp.zeros((1, Op), f32).at[:, :O].set(
        params["b_fc"].reshape(1, -1).astype(f32))

    w1h, w2x, w2h, wfc = (w.astype(mxu_dtype) for w in (w1h, w2x, w2h, wfc))

    kernel = functools.partial(_lstm_stack_kernel, hidden_pad=Hp,
                               batch_tile=Bt, time_steps=T)

    def const_spec(shape):
        zeros = (0,) * len(shape)
        return pl.BlockSpec(shape, lambda b: zeros)

    out_pad = pl.pallas_call(
        kernel,
        out_shape=jax.ShapeDtypeStruct((Bp, Op), f32),
        grid=(Bp // Bt,),                                     # batch-parallel grid
        in_specs=[
            pl.BlockSpec((T, Bt, 4 * Hp), lambda b: (0, b, 0)),  # xproj batch tile
            const_spec((Hp, 4 * Hp)),                            # w1h
            const_spec((Hp, 4 * Hp)),                            # w2x
            const_spec((Hp, 4 * Hp)),                            # w2h
            const_spec((1, 4 * Hp)),                             # b2
            const_spec((Hp, Op)),                                # wfc
            const_spec((1, Op)),                                 # bfc
        ],
        out_specs=pl.BlockSpec((Bt, Op), lambda b: (b, 0)),
        # Weight blocks total < 1 MiB here, so default double-buffering is
        # harmless.  If H or T grow (esp. v7x's 64 MiB VMEM): single-buffer the
        # constant blocks (pipeline_mode=pl.Buffered(1)) and/or chunk T with an
        # extra "arbitrary" grid axis carrying h/c in VMEM scratch.
        compiler_params=pltpu.CompilerParams(
            dimension_semantics=("parallel",)),
    )(xproj_p, w1h, w2x, w2h, b2, wfc, bfc)

    return out_pad[:B, :O]


def init_params(key, input_dim, hidden_dim, output_dim):
    """Deterministic init mirroring PyTorch's uniform(-1/sqrt(H), 1/sqrt(H))."""
    H = hidden_dim
    k = 1.0 / math.sqrt(H)
    names_shapes = [
        ("w_ih_l1", (4 * H, input_dim)),
        ("w_hh_l1", (4 * H, H)),
        ("b_ih_l1", (4 * H,)),
        ("b_hh_l1", (4 * H,)),
        ("w_ih_l2", (4 * H, H)),
        ("w_hh_l2", (4 * H, H)),
        ("b_ih_l2", (4 * H,)),
        ("b_hh_l2", (4 * H,)),
        ("w_fc", (output_dim, H)),
        ("b_fc", (output_dim,)),
    ]
    keys = jax.random.split(key, len(names_shapes))
    return {
        name: jax.random.uniform(kk, shape, jnp.float32, minval=-k, maxval=k)
        for kk, (name, shape) in zip(keys, names_shapes)
    }


def reference_forward(x_btd, params, hidden_dim):
    """Pure-JAX reference of the PyTorch forward (for a quick sanity check)."""
    H = hidden_dim
    B = x_btd.shape[0]

    def cell(x_t, h, c, wx, wh, b):
        g = x_t @ wx.T + h @ wh.T + b
        i = jax.nn.sigmoid(g[:, :H])
        f = jax.nn.sigmoid(g[:, H:2 * H])
        gg = jnp.tanh(g[:, 2 * H:3 * H])
        o = jax.nn.sigmoid(g[:, 3 * H:])
        c = f * c + i * gg
        return o * jnp.tanh(c), c

    h1 = c1 = h2 = c2 = jnp.zeros((B, H), jnp.float32)
    b1 = params["b_ih_l1"] + params["b_hh_l1"]
    b2 = params["b_ih_l2"] + params["b_hh_l2"]
    for t in range(x_btd.shape[1]):
        h1, c1 = cell(x_btd[:, t, :], h1, c1, params["w_ih_l1"], params["w_hh_l1"], b1)
        h2, c2 = cell(h1, h2, c2, params["w_ih_l2"], params["w_hh_l2"], b2)
    return h2 @ params["w_fc"].T + params["b_fc"]


if __name__ == "__main__":
    INPUT_DIM, HIDDEN_DIM, OUTPUT_DIM = 3, 40, 2
    BATCH, TIME = 2, 8

    key = jax.random.PRNGKey(0)
    k_params, k_x = jax.random.split(key)
    params = init_params(k_params, INPUT_DIM, HIDDEN_DIM, OUTPUT_DIM)
    x = jax.random.normal(k_x, (BATCH, TIME, INPUT_DIM), dtype=jnp.float32)

    ref = reference_forward(x, params, HIDDEN_DIM)

    # 1) exactness check: f32 MXU operands (bit-close to the reference).
    out_f32 = jax.block_until_ready(
        lstm_model_forward(x, params, hidden_dim=HIDDEN_DIM,
                           mxu_dtype=jnp.float32))
    assert out_f32.shape == (BATCH, OUTPUT_DIM)
    assert jnp.allclose(out_f32, ref, atol=1e-4, rtol=1e-4), (out_f32, ref)

    # 2) fast path: bf16 MXU operands / bf16 xproj, f32 accumulation & state.
    #    (bf16 rounding compounds over the T-step recurrence; loose tolerance.)
    out_bf16 = jax.block_until_ready(
        lstm_model_forward(x, params, hidden_dim=HIDDEN_DIM,
                           mxu_dtype=jnp.bfloat16))
    assert out_bf16.shape == (BATCH, OUTPUT_DIM)
    assert jnp.allclose(out_bf16, ref, atol=5e-2, rtol=5e-2), (out_bf16, ref)

    print("KERNEL_OK")
</pallas_src>

<mosaic_0001>
module attributes {stable_mosaic.version = 11 : i64} {
  func.func @_lstm_stack_kernel(%arg0: i32, %arg1: memref<8x8x512xf32, #tpu.memory_space<vmem>>, %arg2: memref<128x512xf32, #tpu.memory_space<vmem>>, %arg3: memref<128x512xf32, #tpu.memory_space<vmem>>, %arg4: memref<128x512xf32, #tpu.memory_space<vmem>>, %arg5: memref<1x512xf32, #tpu.memory_space<vmem>>, %arg6: memref<128x128xf32, #tpu.memory_space<vmem>>, %arg7: memref<1x128xf32, #tpu.memory_space<vmem>>, %arg8: memref<8x128xf32, #tpu.memory_space<vmem>>) attributes {dimension_semantics = [#tpu.dimension_semantics<parallel>], iteration_bounds = array<i64: 1>, scalar_prefetch = 0 : i64, scratch_operands = 0 : i64, tpu.core_type = #tpu.core_type<tc>, window_params = [{transform_indices = @transform_0, window_bounds = array<i64: 8, 8, 512>}, {pipeline_mode = #tpu.pipeline_mode<synchronous>, transform_indices = @transform_1, window_bounds = array<i64: 128, 512>}, {pipeline_mode = #tpu.pipeline_mode<synchronous>, transform_indices = @transform_2, window_bounds = array<i64: 128, 512>}, {pipeline_mode = #tpu.pipeline_mode<synchronous>, transform_indices = @transform_3, window_bounds = array<i64: 128, 512>}, {pipeline_mode = #tpu.pipeline_mode<synchronous>, transform_indices = @transform_4, window_bounds = array<i64: 1, 512>}, {pipeline_mode = #tpu.pipeline_mode<synchronous>, transform_indices = @transform_5, window_bounds = array<i64: 128, 128>}, {pipeline_mode = #tpu.pipeline_mode<synchronous>, transform_indices = @transform_6, window_bounds = array<i64: 1, 128>}, {transform_indices = @transform_7, window_bounds = array<i64: 8, 128>}]} {
    %c0 = arith.constant 0 : index
    %c0_0 = arith.constant 0 : index
    %0 = vector.load %arg2[%c0, %c0_0] : memref<128x512xf32, #tpu.memory_space<vmem>>, vector<128x512xf32>
    %c0_1 = arith.constant 0 : index
    %c0_2 = arith.constant 0 : index
    %1 = vector.load %arg3[%c0_1, %c0_2] : memref<128x512xf32, #tpu.memory_space<vmem>>, vector<128x512xf32>
    %c0_3 = arith.constant 0 : index
    %c0_4 = arith.constant 0 : index
    %2 = vector.load %arg4[%c0_3, %c0_4] : memref<128x512xf32, #tpu.memory_space<vmem>>, vector<128x512xf32>
    %c0_5 = arith.constant 0 : index
    %c0_6 = arith.constant 0 : index
    %3 = vector.load %arg5[%c0_5, %c0_6] : memref<1x512xf32, #tpu.memory_space<vmem>>, vector<1x512xf32>
    %4 = vector.shape_cast %3 : vector<1x512xf32> to vector<1x512xf32>
    %5 = vector.broadcast %4 : vector<1x512xf32> to vector<8x512xf32>
    %cst = arith.constant 0.000000e+00 : f32
    %6 = vector.broadcast %cst : f32 to vector<8x128xf32>
    %cst_7 = arith.constant dense<0.000000e+00> : vector<8x512xf32>
    %7 = tpu.matmul %6, %2, %cst_7 {dimension_numbers = #tpu.dot_dimension_numbers<[1], [0], [0], [1], [0, 0, 1, 1], [], []>} : vector<8x128xf32>, vector<128x512xf32>, vector<8x512xf32> -> vector<8x512xf32>
    %8 = arith.addf %5, %7 : vector<8x512xf32>
    %c0_8 = arith.constant 0 : index
    %c0_9 = arith.constant 0 : index
    %c0_10 = arith.constant 0 : index
    %9 = vector.load %arg1[%c0_8, %c0_9, %c0_10] : memref<8x8x512xf32, #tpu.memory_space<vmem>>, vector<1x8x512xf32>
    %10 = vector.shape_cast %9 : vector<1x8x512xf32> to vector<8x512xf32>
    %cst_11 = arith.constant dense<0.000000e+00> : vector<8x512xf32>
    %11 = tpu.matmul %6, %0, %cst_11 {dimension_numbers = #tpu.dot_dimension_numbers<[1], [0], [0], [1], [0, 0, 1, 1], [], []>} : vector<8x128xf32>, vector<128x512xf32>, vector<8x512xf32> -> vector<8x512xf32>
    %12 = arith.addf %10, %11 : vector<8x512xf32>
    %13 = vector.extract_strided_slice %12 {offsets = [0, 0], sizes = [8, 384], strides = [1, 1]} : vector<8x512xf32> to vector<8x384xf32>
    %14 = arith.negf %13 : vector<8x384xf32>
    %15 = math.exp %14 : vector<8x384xf32>
    %cst_12 = arith.constant 1.000000e+00 : f32
    %16 = vector.broadcast %cst_12 : f32 to vector<8x384xf32>
    %17 = arith.addf %16, %15 : vector<8x384xf32>
    %18 = arith.divf %16, %17 : vector<8x384xf32>
    %19 = vector.extract_strided_slice %18 {offsets = [0, 0], sizes = [8, 128], strides = [1, 1]} : vector<8x384xf32> to vector<8x128xf32>
    %20 = vector.extract_strided_slice %18 {offsets = [0, 128], sizes = [8, 128], strides = [1, 1]} : vector<8x384xf32> to vector<8x128xf32>
    %21 = vector.extract_strided_slice %18 {offsets = [0, 256], sizes = [8, 128], strides = [1, 1]} : vector<8x384xf32> to vector<8x128xf32>
    %22 = vector.extract_strided_slice %12 {offsets = [0, 384], sizes = [8, 128], strides = [1, 1]} : vector<8x512xf32> to vector<8x128xf32>
    %23 = math.tanh %22 : vector<8x128xf32>
    %24 = arith.mulf %20, %6 : vector<8x128xf32>
    %25 = arith.mulf %19, %23 : vector<8x128xf32>
    %26 = arith.addf %24, %25 : vector<8x128xf32>
    %27 = math.tanh %26 : vector<8x128xf32>
    %28 = arith.mulf %21, %27 : vector<8x128xf32>
    %cst_13 = arith.constant dense<0.000000e+00> : vector<8x512xf32>
    %29 = tpu.matmul %28, %1, %cst_13 {dimension_numbers = #tpu.dot_dimension_numbers<[1], [0], [0], [1], [0, 0, 1, 1], [], []>} : vector<8x128xf32>, vector<128x512xf32>, vector<8x512xf32> -> vector<8x512xf32>
    %30 = arith.addf %8, %29 : vector<8x512xf32>
    %31 = vector.extract_strided_slice %30 {offsets = [0, 0], sizes = [8, 384], strides = [1, 1]} : vector<8x512xf32> to vector<8x384xf32>
    %32 = arith.negf %31 : vector<8x384xf32>
    %33 = math.exp %32 : vector<8x384xf32>
    %cst_14 = arith.constant 1.000000e+00 : f32
    %34 = vector.broadcast %cst_14 : f32 to vector<8x384xf32>
    %35 = arith.addf %34, %33 : vector<8x384xf32>
    %36 = arith.divf %34, %35 : vector<8x384xf32>
    %37 = vector.extract_strided_slice %36 {offsets = [0, 0], sizes = [8, 128], strides = [1, 1]} : vector<8x384xf32> to vector<8x128xf32>
    %38 = vector.extract_strided_slice %36 {offsets = [0, 128], sizes = [8, 128], strides = [1, 1]} : vector<8x384xf32> to vector<8x128xf32>
    %39 = vector.extract_strided_slice %36 {offsets = [0, 256], sizes = [8, 128], strides = [1, 1]} : vector<8x384xf32> to vector<8x128xf32>
    %40 = vector.extract_strided_slice %30 {offsets = [0, 384], sizes = [8, 128], strides = [1, 1]} : vector<8x512xf32> to vector<8x128xf32>
    %41 = math.tanh %40 : vector<8x128xf32>
    %42 = arith.mulf %38, %6 : vector<8x128xf32>
    %43 = arith.mulf %37, %41 : vector<8x128xf32>
    %44 = arith.addf %42, %43 : vector<8x128xf32>
    %45 = math.tanh %44 : vector<8x128xf32>
    %46 = arith.mulf %39, %45 : vector<8x128xf32>
    %cst_15 = arith.constant dense<0.000000e+00> : vector<8x512xf32>
    %47 = tpu.matmul %46, %2, %cst_15 {dimension_numbers = #tpu.dot_dimension_numbers<[1], [0], [0], [1], [0, 0, 1, 1], [], []>} : vector<8x128xf32>, vector<128x512xf32>, vector<8x512xf32> -> vector<8x512xf32>
    %48 = arith.addf %5, %47 : vector<8x512xf32>
    %c1 = arith.constant 1 : index
    %c0_16 = arith.constant 0 : index
    %c0_17 = arith.constant 0 : index
    %49 = vector.load %arg1[%c1, %c0_16, %c0_17] : memref<8x8x512xf32, #tpu.memory_space<vmem>>, vector<1x8x512xf32>
    %50 = vector.shape_cast %49 : vector<1x8x512xf32> to vector<8x512xf32>
    %cst_18 = arith.constant dense<0.000000e+00> : vector<8x512xf32>
    %51 = tpu.matmul %28, %0, %cst_18 {dimension_numbers = #tpu.dot_dimension_numbers<[1], [0], [0], [1], [0, 0, 1, 1], [], []>} : vector<8x128xf32>, vector<128x512xf32>, vector<8x512xf32> -> vector<8x512xf32>
    %52 = arith.addf %50, %51 : vector<8x512xf32>
    %53 = vector.extract_strided_slice %52 {offsets = [0, 0], sizes = [8, 384], strides = [1, 1]} : vector<8x512xf32> to vector<8x384xf32>
    %54 = arith.negf %53 : vector<8x384xf32>
    %55 = math.exp %54 : vector<8x384xf32>
    %cst_19 = arith.constant 1.000000e+00 : f32
    %56 = vector.broadcast %cst_19 : f32 to vector<8x384xf32>
    %57 = arith.addf %56, %55 : vector<8x384xf32>
    %58 = arith.divf %56, %57 : vector<8x384xf32>
    %59 = vector.extract_strided_slice %58 {offsets = [0, 0], sizes = [8, 128], strides = [1, 1]} : vector<8x384xf32> to vector<8x128xf32>
    %60 = vector.extract_strided_slice %58 {offsets = [0, 128], sizes = [8, 128], strides = [1, 1]} : vector<8x384xf32> to vector<8x128xf32>
    %61 = vector.extract_strided_slice %58 {offsets = [0, 256], sizes = [8, 128], strides = [1, 1]} : vector<8x384xf32> to vector<8x128xf32>
    %62 = vector.extract_strided_slice %52 {offsets = [0, 384], sizes = [8, 128], strides = [1, 1]} : vector<8x512xf32> to vector<8x128xf32>
    %63 = math.tanh %62 : vector<8x128xf32>
    %64 = arith.mulf %60, %26 : vector<8x128xf32>
    %65 = arith.mulf %59, %63 : vector<8x128xf32>
    %66 = arith.addf %64, %65 : vector<8x128xf32>
    %67 = math.tanh %66 : vector<8x128xf32>
    %68 = arith.mulf %61, %67 : vector<8x128xf32>
    %cst_20 = arith.constant dense<0.000000e+00> : vector<8x512xf32>
    %69 = tpu.matmul %68, %1, %cst_20 {dimension_numbers = #tpu.dot_dimension_numbers<[1], [0], [0], [1], [0, 0, 1, 1], [], []>} : vector<8x128xf32>, vector<128x512xf32>, vector<8x512xf32> -> vector<8x512xf32>
    %70 = arith.addf %48, %69 : vector<8x512xf32>
    %71 = vector.extract_strided_slice %70 {offsets = [0, 0], sizes = [8, 384], strides = [1, 1]} : vector<8x512xf32> to vector<8x384xf32>
    %72 = arith.negf %71 : vector<8x384xf32>
    %73 = math.exp %72 : vector<8x384xf32>
    %cst_21 = arith.constant 1.000000e+00 : f32
    %74 = vector.broadcast %cst_21 : f32 to vector<8x384xf32>
    %75 = arith.addf %74, %73 : vector<8x384xf32>
    %76 = arith.divf %74, %75 : vector<8x384xf32>
    %77 = vector.extract_strided_slice %76 {offsets = [0, 0], sizes = [8, 128], strides = [1, 1]} : vector<8x384xf32> to vector<8x128xf32>
    %78 = vector.extract_strided_slice %76 {offsets = [0, 128], sizes = [8, 128], strides = [1, 1]} : vector<8x384xf32> to vector<8x128xf32>
    %79 = vector.extract_strided_slice %76 {offsets = [0, 256], sizes = [8, 128], strides = [1, 1]} : vector<8x384xf32> to vector<8x128xf32>
    %80 = vector.extract_strided_slice %70 {offsets = [0, 384], sizes = [8, 128], strides = [1, 1]} : vector<8x512xf32> to vector<8x128xf32>
    %81 = math.tanh %80 : vector<8x128xf32>
    %82 = arith.mulf %78, %44 : vector<8x128xf32>
    %83 = arith.mulf %77, %81 : vector<8x128xf32>
    %84 = arith.addf %82, %83 : vector<8x128xf32>
    %85 = math.tanh %84 : vector<8x128xf32>
    %86 = arith.mulf %79, %85 : vector<8x128xf32>
    %cst_22 = arith.constant dense<0.000000e+00> : vector<8x512xf32>
    %87 = tpu.matmul %86, %2, %cst_22 {dimension_numbers = #tpu.dot_dimension_numbers<[1], [0], [0], [1], [0, 0, 1, 1], [], []>} : vector<8x128xf32>, vector<128x512xf32>, vector<8x512xf32> -> vector<8x512xf32>
    %88 = arith.addf %5, %87 : vector<8x512xf32>
    %c2 = arith.constant 2 : index
    %c0_23 = arith.constant 0 : index
    %c0_24 = arith.constant 0 : index
    %89 = vector.load %arg1[%c2, %c0_23, %c0_24] : memref<8x8x512xf32, #tpu.memory_space<vmem>>, vector<1x8x512xf32>
    %90 = vector.shape_cast %89 : vector<1x8x512xf32> to vector<8x512xf32>
    %cst_25 = arith.constant dense<0.000000e+00> : vector<8x512xf32>
    %91 = tpu.matmul %68, %0, %cst_25 {dimension_numbers = #tpu.dot_dimension_numbers<[1], [0], [0], [1], [0, 0, 1, 1], [], []>} : vector<8x128xf32>, vector<128x512xf32>, vector<8x512xf32> -> vector<8x512xf32>
    %92 = arith.addf %90, %91 : vector<8x512xf32>
    %93 = vector.extract_strided_slice %92 {offsets = [0, 0], sizes = [8, 384], strides = [1, 1]} : vector<8x512xf32> to vector<8x384xf32>
    %94 = arith.negf %93 : vector<8x384xf32>
    %95 = math.exp %94 : vector<8x384xf32>
    %cst_26 = arith.constant 1.000000e+00 : f32
    %96 = vector.broadcast %cst_26 : f32 to vector<8x384xf32>
    %97 = arith.addf %96, %95 : vector<8x384xf32>
    %98 = arith.divf %96, %97 : vector<8x384xf32>
    %99 = vector.extract_strided_slice %98 {offsets = [0, 0], sizes = [8, 128], strides = [1, 1]} : vector<8x384xf32> to vector<8x128xf32>
    %100 = vector.extract_strided_slice %98 {offsets = [0, 128], sizes = [8, 128], strides = [1, 1]} : vector<8x384xf32> to vector<8x128xf32>
    %101 = vector.extract_strided_slice %98 {offsets = [0, 256], sizes = [8, 128], strides = [1, 1]} : vector<8x384xf32> to vector<8x128xf32>
    %102 = vector.extract_strided_slice %92 {offsets = [0, 384], sizes = [8, 128], strides = [1, 1]} : vector<8x512xf32> to vector<8x128xf32>
    %103 = math.tanh %102 : vector<8x128xf32>
    %104 = arith.mulf %100, %66 : vector<8x128xf32>
    %105 = arith.mulf %99, %103 : vector<8x128xf32>
    %106 = arith.addf %104, %105 : vector<8x128xf32>
    %107 = math.tanh %106 : vector<8x128xf32>
    %108 = arith.mulf %101, %107 : vector<8x128xf32>
    %cst_27 = arith.constant dense<0.000000e+00> : vector<8x512xf32>
    %109 = tpu.matmul %108, %1, %cst_27 {dimension_numbers = #tpu.dot_dimension_numbers<[1], [0], [0], [1], [0, 0, 1, 1], [], []>} : vector<8x128xf32>, vector<128x512xf32>, vector<8x512xf32> -> vector<8x512xf32>
    %110 = arith.addf %88, %109 : vector<8x512xf32>
    %111 = vector.extract_strided_slice %110 {offsets = [0, 0], sizes = [8, 384], strides = [1, 1]} : vector<8x512xf32> to vector<8x384xf32>
    %112 = arith.negf %111 : vector<8x384xf32>
    %113 = math.exp %112 : vector<8x384xf32>
    %cst_28 = arith.constant 1.000000e+00 : f32
    %114 = vector.broadcast %cst_28 : f32 to vector<8x384xf32>
    %115 = arith.addf %114, %113 : vector<8x384xf32>
    %116 = arith.divf %114, %115 : vector<8x384xf32>
    %117 = vector.extract_strided_slice %116 {offsets = [0, 0], sizes = [8, 128], strides = [1, 1]} : vector<8x384xf32> to vector<8x128xf32>
    %118 = vector.extract_strided_slice %116 {offsets = [0, 128], sizes = [8, 128], strides = [1, 1]} : vector<8x384xf32> to vector<8x128xf32>
    %119 = vector.extract_strided_slice %116 {offsets = [0, 256], sizes = [8, 128], strides = [1, 1]} : vector<8x384xf32> to vector<8x128xf32>
    %120 = vector.extract_strided_slice %110 {offsets = [0, 384], sizes = [8, 128], strides = [1, 1]} : vector<8x512xf32> to vector<8x128xf32>
    %121 = math.tanh %120 : vector<8x128xf32>
    %122 = arith.mulf %118, %84 : vector<8x128xf32>
    %123 = arith.mulf %117, %121 : vector<8x128xf32>
    %124 = arith.addf %122, %123 : vector<8x128xf32>
    %125 = math.tanh %124 : vector<8x128xf32>
    %126 = arith.mulf %119, %125 : vector<8x128xf32>
    %cst_29 = arith.constant dense<0.000000e+00> : vector<8x512xf32>
    %127 = tpu.matmul %126, %2, %cst_29 {dimension_numbers = #tpu.dot_dimension_numbers<[1], [0], [0], [1], [0, 0, 1, 1], [], []>} : vector<8x128xf32>, vector<128x512xf32>, vector<8x512xf32> -> vector<8x512xf32>
    %128 = arith.addf %5, %127 : vector<8x512xf32>
    %c3 = arith.constant 3 : index
    %c0_30 = arith.constant 0 : index
    %c0_31 = arith.constant 0 : index
    %129 = vector.load %arg1[%c3, %c0_30, %c0_31] : memref<8x8x512xf32, #tpu.memory_space<vmem>>, vector<1x8x512xf32>
    %130 = vector.shape_cast %129 : vector<1x8x512xf32> to vector<8x512xf32>
    %cst_32 = arith.constant dense<0.000000e+00> : vector<8x512xf32>
    %131 = tpu.matmul %108, %0, %cst_32 {dimension_numbers = #tpu.dot_dimension_numbers<[1], [0], [0], [1], [0, 0, 1, 1], [], []>} : vector<8x128xf32>, vector<128x512xf32>, vector<8x512xf32> -> vector<8x512xf32>
    %132 = arith.addf %130, %131 : vector<8x512xf32>
    %133 = vector.extract_strided_slice %132 {offsets = [0, 0], sizes = [8, 384], strides = [1, 1]} : vector<8x512xf32> to vector<8x384xf32>
    %134 = arith.negf %133 : vector<8x384xf32>
    %135 = math.exp %134 : vector<8x384xf32>
    %cst_33 = arith.constant 1.000000e+00 : f32
    %136 = vector.broadcast %cst_33 : f32 to vector<8x384xf32>
    %137 = arith.addf %136, %135 : vector<8x384xf32>
    %138 = arith.divf %136, %137 : vector<8x384xf32>
    %139 = vector.extract_strided_slice %138 {offsets = [0, 0], sizes = [8, 128], strides = [1, 1]} : vector<8x384xf32> to vector<8x128xf32>
    %140 = vector.extract_strided_slice %138 {offsets = [0, 128], sizes = [8, 128], strides = [1, 1]} : vector<8x384xf32> to vector<8x128xf32>
    %141 = vector.extract_strided_slice %138 {offsets = [0, 256], sizes = [8, 128], strides = [1, 1]} : vector<8x384xf32> to vector<8x128xf32>
    %142 = vector.extract_strided_slice %132 {offsets = [0, 384], sizes = [8, 128], strides = [1, 1]} : vector<8x512xf32> to vector<8x128xf32>
    %143 = math.tanh %142 : vector<8x128xf32>
    %144 = arith.mulf %140, %106 : vector<8x128xf32>
    %145 = arith.mulf %139, %143 : vector<8x128xf32>
    %146 = arith.addf %144, %145 : vector<8x128xf32>
    %147 = math.tanh %146 : vector<8x128xf32>
    %148 = arith.mulf %141, %147 : vector<8x128xf32>
    %cst_34 = arith.constant dense<0.000000e+00> : vector<8x512xf32>
    %149 = tpu.matmul %148, %1, %cst_34 {dimension_numbers = #tpu.dot_dimension_numbers<[1], [0], [0], [1], [0, 0, 1, 1], [], []>} : vector<8x128xf32>, vector<128x512xf32>, vector<8x512xf32> -> vector<8x512xf32>
    %150 = arith.addf %128, %149 : vector<8x512xf32>
    %151 = vector.extract_strided_slice %150 {offsets = [0, 0], sizes = [8, 384], strides = [1, 1]} : vector<8x512xf32> to vector<8x384xf32>
    %152 = arith.negf %151 : vector<8x384xf32>
    %153 = math.exp %152 : vector<8x384xf32>
    %cst_35 = arith.constant 1.000000e+00 : f32
    %154 = vector.broadcast %cst_35 : f32 to vector<8x384xf32>
    %155 = arith.addf %154, %153 : vector<8x384xf32>
    %156 = arith.divf %154, %155 : vector<8x384xf32>
    %157 = vector.extract_strided_slice %156 {offsets = [0, 0], sizes = [8, 128], strides = [1, 1]} : vector<8x384xf32> to vector<8x128xf32>
    %158 = vector.extract_strided_slice %156 {offsets = [0, 128], sizes = [8, 128], strides = [1, 1]} : vector<8x384xf32> to vector<8x128xf32>
    %159 = vector.extract_strided_slice %156 {offsets = [0, 256], sizes = [8, 128], strides = [1, 1]} : vector<8x384xf32> to vector<8x128xf32>
    %160 = vector.extract_strided_slice %150 {offsets = [0, 384], sizes = [8, 128], strides = [1, 1]} : vector<8x512xf32> to vector<8x128xf32>
    %161 = math.tanh %160 : vector<8x128xf32>
    %162 = arith.mulf %158, %124 : vector<8x128xf32>
    %163 = arith.mulf %157, %161 : vector<8x128xf32>
    %164 = arith.addf %162, %163 : vector<8x128xf32>
    %165 = math.tanh %164 : vector<8x128xf32>
    %166 = arith.mulf %159, %165 : vector<8x128xf32>
    %cst_36 = arith.constant dense<0.000000e+00> : vector<8x512xf32>
    %167 = tpu.matmul %166, %2, %cst_36 {dimension_numbers = #tpu.dot_dimension_numbers<[1], [0], [0], [1], [0, 0, 1, 1], [], []>} : vector<8x128xf32>, vector<128x512xf32>, vector<8x512xf32> -> vector<8x512xf32>
    %168 = arith.addf %5, %167 : vector<8x512xf32>
    %c4 = arith.constant 4 : index
    %c0_37 = arith.constant 0 : index
    %c0_38 = arith.constant 0 : index
    %169 = vector.load %arg1[%c4, %c0_37, %c0_38] : memref<8x8x512xf32, #tpu.memory_space<vmem>>, vector<1x8x512xf32>
    %170 = vector.shape_cast %169 : vector<1x8x512xf32> to vector<8x512xf32>
    %cst_39 = arith.constant dense<0.000000e+00> : vector<8x512xf32>
    %171 = tpu.matmul %148, %0, %cst_39 {dimension_numbers = #tpu.dot_dimension_numbers<[1], [0], [0], [1], [0, 0, 1, 1], [], []>} : vector<8x128xf32>, vector<128x512xf32>, vector<8x512xf32> -> vector<8x512xf32>
    %172 = arith.addf %170, %171 : vector<8x512xf32>
    %173 = vector.extract_strided_slice %172 {offsets = [0, 0], sizes = [8, 384], strides = [1, 1]} : vector<8x512xf32> to vector<8x384xf32>
    %174 = arith.negf %173 : vector<8x384xf32>
    %175 = math.exp %174 : vector<8x384xf32>
    %cst_40 = arith.constant 1.000000e+00 : f32
    %176 = vector.broadcast %cst_40 : f32 to vector<8x384xf32>
    %177 = arith.addf %176, %175 : vector<8x384xf32>
    %178 = arith.divf %176, %177 : vector<8x384xf32>
    %179 = vector.extract_strided_slice %178 {offsets = [0, 0], sizes = [8, 128], strides = [1, 1]} : vector<8x384xf32> to vector<8x128xf32>
    %180 = vector.extract_strided_slice %178 {offsets = [0, 128], sizes = [8, 128], strides = [1, 1]} : vector<8x384xf32> to vector<8x128xf32>
    %181 = vector.extract_strided_slice %178 {offsets = [0, 256], sizes = [8, 128], strides = [1, 1]} : vector<8x384xf32> to vector<8x128xf32>
    %182 = vector.extract_strided_slice %172 {offsets = [0, 384], sizes = [8, 128], strides = [1, 1]} : vector<8x512xf32> to vector<8x128xf32>
    %183 = math.tanh %182 : vector<8x128xf32>
    %184 = arith.mulf %180, %146 : vector<8x128xf32>
    %185 = arith.mulf %179, %183 : vector<8x128xf32>
    %186 = arith.addf %184, %185 : vector<8x128xf32>
    %187 = math.tanh %186 : vector<8x128xf32>
    %188 = arith.mulf %181, %187 : vector<8x128xf32>
    %cst_41 = arith.constant dense<0.000000e+00> : vector<8x512xf32>
    %189 = tpu.matmul %188, %1, %cst_41 {dimension_numbers = #tpu.dot_dimension_numbers<[1], [0], [0], [1], [0, 0, 1, 1], [], []>} : vector<8x128xf32>, vector<128x512xf32>, vector<8x512xf32> -> vector<8x512xf32>
    %190 = arith.addf %168, %189 : vector<8x512xf32>
    %191 = vector.extract_strided_slice %190 {offsets = [0, 0], sizes = [8, 384], strides = [1, 1]} : vector<8x512xf32> to vector<8x384xf32>
    %192 = arith.negf %191 : vector<8x384xf32>
    %193 = math.exp %192 : vector<8x384xf32>
    %cst_42 = arith.constant 1.000000e+00 : f32
    %194 = vector.broadcast %cst_42 : f32 to vector<8x384xf32>
    %195 = arith.addf %194, %193 : vector<8x384xf32>
    %196 = arith.divf %194, %195 : vector<8x384xf32>
    %197 = vector.extract_strided_slice %196 {offsets = [0, 0], sizes = [8, 128], strides = [1, 1]} : vector<8x384xf32> to vector<8x128xf32>
    %198 = vector.extract_strided_slice %196 {offsets = [0, 128], sizes = [8, 128], strides = [1, 1]} : vector<8x384xf32> to vector<8x128xf32>
    %199 = vector.extract_strided_slice %196 {offsets = [0, 256], sizes = [8, 128], strides = [1, 1]} : vector<8x384xf32> to vector<8x128xf32>
    %200 = vector.extract_strided_slice %190 {offsets = [0, 384], sizes = [8, 128], strides = [1, 1]} : vector<8x512xf32> to vector<8x128xf32>
    %201 = math.tanh %200 : vector<8x128xf32>
    %202 = arith.mulf %198, %164 : vector<8x128xf32>
    %203 = arith.mulf %197, %201 : vector<8x128xf32>
    %204 = arith.addf %202, %203 : vector<8x128xf32>
    %205 = math.tanh %204 : vector<8x128xf32>
    %206 = arith.mulf %199, %205 : vector<8x128xf32>
    %cst_43 = arith.constant dense<0.000000e+00> : vector<8x512xf32>
    %207 = tpu.matmul %206, %2, %cst_43 {dimension_numbers = #tpu.dot_dimension_numbers<[1], [0], [0], [1], [0, 0, 1, 1], [], []>} : vector<8x128xf32>, vector<128x512xf32>, vector<8x512xf32> -> vector<8x512xf32>
    %208 = arith.addf %5, %207 : vector<8x512xf32>
    %c5 = arith.constant 5 : index
    %c0_44 = arith.constant 0 : index
    %c0_45 = arith.constant 0 : index
    %209 = vector.load %arg1[%c5, %c0_44, %c0_45] : memref<8x8x512xf32, #tpu.memory_space<vmem>>, vector<1x8x512xf32>
    %210 = vector.shape_cast %209 : vector<1x8x512xf32> to vector<8x512xf32>
    %cst_46 = arith.constant dense<0.000000e+00> : vector<8x512xf32>
    %211 = tpu.matmul %188, %0, %cst_46 {dimension_numbers = #tpu.dot_dimension_numbers<[1], [0], [0], [1], [0, 0, 1, 1], [], []>} : vector<8x128xf32>, vector<128x512xf32>, vector<8x512xf32> -> vector<8x512xf32>
    %212 = arith.addf %210, %211 : vector<8x512xf32>
    %213 = vector.extract_strided_slice %212 {offsets = [0, 0], sizes = [8, 384], strides = [1, 1]} : vector<8x512xf32> to vector<8x384xf32>
    %214 = arith.negf %213 : vector<8x384xf32>
    %215 = math.exp %214 : vector<8x384xf32>
    %cst_47 = arith.constant 1.000000e+00 : f32
    %216 = vector.broadcast %cst_47 : f32 to vector<8x384xf32>
    %217 = arith.addf %216, %215 : vector<8x384xf32>
    %218 = arith.divf %216, %217 : vector<8x384xf32>
    %219 = vector.extract_strided_slice %218 {offsets = [0, 0], sizes = [8, 128], strides = [1, 1]} : vector<8x384xf32> to vector<8x128xf32>
    %220 = vector.extract_strided_slice %218 {offsets = [0, 128], sizes = [8, 128], strides = [1, 1]} : vector<8x384xf32> to vector<8x128xf32>
    %221 = vector.extract_strided_slice %218 {offsets = [0, 256], sizes = [8, 128], strides = [1, 1]} : vector<8x384xf32> to vector<8x128xf32>
    %222 = vector.extract_strided_slice %212 {offsets = [0, 384], sizes = [8, 128], strides = [1, 1]} : vector<8x512xf32> to vector<8x128xf32>
    %223 = math.tanh %222 : vector<8x128xf32>
    %224 = arith.mulf %220, %186 : vector<8x128xf32>
    %225 = arith.mulf %219, %223 : vector<8x128xf32>
    %226 = arith.addf %224, %225 : vector<8x128xf32>
    %227 = math.tanh %226 : vector<8x128xf32>
    %228 = arith.mulf %221, %227 : vector<8x128xf32>
    %cst_48 = arith.constant dense<0.000000e+00> : vector<8x512xf32>
    %229 = tpu.matmul %228, %1, %cst_48 {dimension_numbers = #tpu.dot_dimension_numbers<[1], [0], [0], [1], [0, 0, 1, 1], [], []>} : vector<8x128xf32>, vector<128x512xf32>, vector<8x512xf32> -> vector<8x512xf32>
    %230 = arith.addf %208, %229 : vector<8x512xf32>
    %231 = vector.extract_strided_slice %230 {offsets = [0, 0], sizes = [8, 384], strides = [1, 1]} : vector<8x512xf32> to vector<8x384xf32>
    %232 = arith.negf %231 : vector<8x384xf32>
    %233 = math.exp %232 : vector<8x384xf32>
    %cst_49 = arith.constant 1.000000e+00 : f32
    %234 = vector.broadcast %cst_49 : f32 to vector<8x384xf32>
    %235 = arith.addf %234, %233 : vector<8x384xf32>
    %236 = arith.divf %234, %235 : vector<8x384xf32>
    %237 = vector.extract_strided_slice %236 {offsets = [0, 0], sizes = [8, 128], strides = [1, 1]} : vector<8x384xf32> to vector<8x128xf32>
    %238 = vector.extract_strided_slice %236 {offsets = [0, 128], sizes = [8, 128], strides = [1, 1]} : vector<8x384xf32> to vector<8x128xf32>
    %239 = vector.extract_strided_slice %236 {offsets = [0, 256], sizes = [8, 128], strides = [1, 1]} : vector<8x384xf32> to vector<8x128xf32>
    %240 = vector.extract_strided_slice %230 {offsets = [0, 384], sizes = [8, 128], strides = [1, 1]} : vector<8x512xf32> to vector<8x128xf32>
    %241 = math.tanh %240 : vector<8x128xf32>
    %242 = arith.mulf %238, %204 : vector<8x128xf32>
    %243 = arith.mulf %237, %241 : vector<8x128xf32>
    %244 = arith.addf %242, %243 : vector<8x128xf32>
    %245 = math.tanh %244 : vector<8x128xf32>
    %246 = arith.mulf %239, %245 : vector<8x128xf32>
    %cst_50 = arith.constant dense<0.000000e+00> : vector<8x512xf32>
    %247 = tpu.matmul %246, %2, %cst_50 {dimension_numbers = #tpu.dot_dimension_numbers<[1], [0], [0], [1], [0, 0, 1, 1], [], []>} : vector<8x128xf32>, vector<128x512xf32>, vector<8x512xf32> -> vector<8x512xf32>
    %248 = arith.addf %5, %247 : vector<8x512xf32>
    %c6 = arith.constant 6 : index
    %c0_51 = arith.constant 0 : index
    %c0_52 = arith.constant 0 : index
    %249 = vector.load %arg1[%c6, %c0_51, %c0_52] : memref<8x8x512xf32, #tpu.memory_space<vmem>>, vector<1x8x512xf32>
    %250 = vector.shape_cast %249 : vector<1x8x512xf32> to vector<8x512xf32>
    %cst_53 = arith.constant dense<0.000000e+00> : vector<8x512xf32>
    %251 = tpu.matmul %228, %0, %cst_53 {dimension_numbers = #tpu.dot_dimension_numbers<[1], [0], [0], [1], [0, 0, 1, 1], [], []>} : vector<8x128xf32>, vector<128x512xf32>, vector<8x512xf32> -> vector<8x512xf32>
    %252 = arith.addf %250, %251 : vector<8x512xf32>
    %253 = vector.extract_strided_slice %252 {offsets = [0, 0], sizes = [8, 384], strides = [1, 1]} : vector<8x512xf32> to vector<8x384xf32>
    %254 = arith.negf %253 : vector<8x384xf32>
    %255 = math.exp %254 : vector<8x384xf32>
    %cst_54 = arith.constant 1.000000e+00 : f32
    %256 = vector.broadcast %cst_54 : f32 to vector<8x384xf32>
    %257 = arith.addf %256, %255 : vector<8x384xf32>
    %258 = arith.divf %256, %257 : vector<8x384xf32>
    %259 = vector.extract_strided_slice %258 {offsets = [0, 0], sizes = [8, 128], strides = [1, 1]} : vector<8x384xf32> to vector<8x128xf32>
    %260 = vector.extract_strided_slice %258 {offsets = [0, 128], sizes = [8, 128], strides = [1, 1]} : vector<8x384xf32> to vector<8x128xf32>
    %261 = vector.extract_strided_slice %258 {offsets = [0, 256], sizes = [8, 128], strides = [1, 1]} : vector<8x384xf32> to vector<8x128xf32>
    %262 = vector.extract_strided_slice %252 {offsets = [0, 384], sizes = [8, 128], strides = [1, 1]} : vector<8x512xf32> to vector<8x128xf32>
    %263 = math.tanh %262 : vector<8x128xf32>
    %264 = arith.mulf %260, %226 : vector<8x128xf32>
    %265 = arith.mulf %259, %263 : vector<8x128xf32>
    %266 = arith.addf %264, %265 : vector<8x128xf32>
    %267 = math.tanh %266 : vector<8x128xf32>
    %268 = arith.mulf %261, %267 : vector<8x128xf32>
    %cst_55 = arith.constant dense<0.000000e+00> : vector<8x512xf32>
    %269 = tpu.matmul %268, %1, %cst_55 {dimension_numbers = #tpu.dot_dimension_numbers<[1], [0], [0], [1], [0, 0, 1, 1], [], []>} : vector<8x128xf32>, vector<128x512xf32>, vector<8x512xf32> -> vector<8x512xf32>
    %270 = arith.addf %248, %269 : vector<8x512xf32>
    %271 = vector.extract_strided_slice %270 {offsets = [0, 0], sizes = [8, 384], strides = [1, 1]} : vector<8x512xf32> to vector<8x384xf32>
    %272 = arith.negf %271 : vector<8x384xf32>
    %273 = math.exp %272 : vector<8x384xf32>
    %cst_56 = arith.constant 1.000000e+00 : f32
    %274 = vector.broadcast %cst_56 : f32 to vector<8x384xf32>
    %275 = arith.addf %274, %273 : vector<8x384xf32>
    %276 = arith.divf %274, %275 : vector<8x384xf32>
    %277 = vector.extract_strided_slice %276 {offsets = [0, 0], sizes = [8, 128], strides = [1, 1]} : vector<8x384xf32> to vector<8x128xf32>
    %278 = vector.extract_strided_slice %276 {offsets = [0, 128], sizes = [8, 128], strides = [1, 1]} : vector<8x384xf32> to vector<8x128xf32>
    %279 = vector.extract_strided_slice %276 {offsets = [0, 256], sizes = [8, 128], strides = [1, 1]} : vector<8x384xf32> to vector<8x128xf32>
    %280 = vector.extract_strided_slice %270 {offsets = [0, 384], sizes = [8, 128], strides = [1, 1]} : vector<8x512xf32> to vector<8x128xf32>
    %281 = math.tanh %280 : vector<8x128xf32>
    %282 = arith.mulf %278, %244 : vector<8x128xf32>
    %283 = arith.mulf %277, %281 : vector<8x128xf32>
    %284 = arith.addf %282, %283 : vector<8x128xf32>
    %285 = math.tanh %284 : vector<8x128xf32>
    %286 = arith.mulf %279, %285 : vector<8x128xf32>
    %cst_57 = arith.constant dense<0.000000e+00> : vector<8x512xf32>
    %287 = tpu.matmul %286, %2, %cst_57 {dimension_numbers = #tpu.dot_dimension_numbers<[1], [0], [0], [1], [0, 0, 1, 1], [], []>} : vector<8x128xf32>, vector<128x512xf32>, vector<8x512xf32> -> vector<8x512xf32>
    %288 = arith.addf %5, %287 : vector<8x512xf32>
    %c7 = arith.constant 7 : index
    %c0_58 = arith.constant 0 : index
    %c0_59 = arith.constant 0 : index
    %289 = vector.load %arg1[%c7, %c0_58, %c0_59] : memref<8x8x512xf32, #tpu.memory_space<vmem>>, vector<1x8x512xf32>
    %290 = vector.shape_cast %289 : vector<1x8x512xf32> to vector<8x512xf32>
    %cst_60 = arith.constant dense<0.000000e+00> : vector<8x512xf32>
    %291 = tpu.matmul %268, %0, %cst_60 {dimension_numbers = #tpu.dot_dimension_numbers<[1], [0], [0], [1], [0, 0, 1, 1], [], []>} : vector<8x128xf32>, vector<128x512xf32>, vector<8x512xf32> -> vector<8x512xf32>
    %292 = arith.addf %290, %291 : vector<8x512xf32>
    %293 = vector.extract_strided_slice %292 {offsets = [0, 0], sizes = [8, 384], strides = [1, 1]} : vector<8x512xf32> to vector<8x384xf32>
    %294 = arith.negf %293 : vector<8x384xf32>
    %295 = math.exp %294 : vector<8x384xf32>
    %cst_61 = arith.constant 1.000000e+00 : f32
    %296 = vector.broadcast %cst_61 : f32 to vector<8x384xf32>
    %297 = arith.addf %296, %295 : vector<8x384xf32>
    %298 = arith.divf %296, %297 : vector<8x384xf32>
    %299 = vector.extract_strided_slice %298 {offsets = [0, 0], sizes = [8, 128], strides = [1, 1]} : vector<8x384xf32> to vector<8x128xf32>
    %300 = vector.extract_strided_slice %298 {offsets = [0, 128], sizes = [8, 128], strides = [1, 1]} : vector<8x384xf32> to vector<8x128xf32>
    %301 = vector.extract_strided_slice %298 {offsets = [0, 256], sizes = [8, 128], strides = [1, 1]} : vector<8x384xf32> to vector<8x128xf32>
    %302 = vector.extract_strided_slice %292 {offsets = [0, 384], sizes = [8, 128], strides = [1, 1]} : vector<8x512xf32> to vector<8x128xf32>
    %303 = math.tanh %302 : vector<8x128xf32>
    %304 = arith.mulf %300, %266 : vector<8x128xf32>
    %305 = arith.mulf %299, %303 : vector<8x128xf32>
    %306 = arith.addf %304, %305 : vector<8x128xf32>
    %307 = math.tanh %306 : vector<8x128xf32>
    %308 = arith.mulf %301, %307 : vector<8x128xf32>
    %cst_62 = arith.constant dense<0.000000e+00> : vector<8x512xf32>
    %309 = tpu.matmul %308, %1, %cst_62 {dimension_numbers = #tpu.dot_dimension_numbers<[1], [0], [0], [1], [0, 0, 1, 1], [], []>} : vector<8x128xf32>, vector<128x512xf32>, vector<8x512xf32> -> vector<8x512xf32>
    %310 = arith.addf %288, %309 : vector<8x512xf32>
    %311 = vector.extract_strided_slice %310 {offsets = [0, 0], sizes = [8, 384], strides = [1, 1]} : vector<8x512xf32> to vector<8x384xf32>
    %312 = arith.negf %311 : vector<8x384xf32>
    %313 = math.exp %312 : vector<8x384xf32>
    %cst_63 = arith.constant 1.000000e+00 : f32
    %314 = vector.broadcast %cst_63 : f32 to vector<8x384xf32>
    %315 = arith.addf %314, %313 : vector<8x384xf32>
    %316 = arith.divf %314, %315 : vector<8x384xf32>
    %317 = vector.extract_strided_slice %316 {offsets = [0, 0], sizes = [8, 128], strides = [1, 1]} : vector<8x384xf32> to vector<8x128xf32>
    %318 = vector.extract_strided_slice %316 {offsets = [0, 128], sizes = [8, 128], strides = [1, 1]} : vector<8x384xf32> to vector<8x128xf32>
    %319 = vector.extract_strided_slice %316 {offsets = [0, 256], sizes = [8, 128], strides = [1, 1]} : vector<8x384xf32> to vector<8x128xf32>
    %320 = vector.extract_strided_slice %310 {offsets = [0, 384], sizes = [8, 128], strides = [1, 1]} : vector<8x512xf32> to vector<8x128xf32>
    %321 = math.tanh %320 : vector<8x128xf32>
    %322 = arith.mulf %318, %284 : vector<8x128xf32>
    %323 = arith.mulf %317, %321 : vector<8x128xf32>
    %324 = arith.addf %322, %323 : vector<8x128xf32>
    %325 = math.tanh %324 : vector<8x128xf32>
    %326 = arith.mulf %319, %325 : vector<8x128xf32>
    %c0_64 = arith.constant 0 : index
    %c0_65 = arith.constant 0 : index
    %327 = vector.load %arg6[%c0_64, %c0_65] : memref<128x128xf32, #tpu.memory_space<vmem>>, vector<128x128xf32>
    %cst_66 = arith.constant dense<0.000000e+00> : vector<8x128xf32>
    %328 = tpu.matmul %326, %327, %cst_66 {dimension_numbers = #tpu.dot_dimension_numbers<[1], [0], [0], [1], [0, 0, 1, 1], [], []>} : vector<8x128xf32>, vector<128x128xf32>, vector<8x128xf32> -> vector<8x128xf32>
    %c0_67 = arith.constant 0 : index
    %c0_68 = arith.constant 0 : index
    %329 = vector.load %arg7[%c0_67, %c0_68] : memref<1x128xf32, #tpu.memory_space<vmem>>, vector<1x128xf32>
    %330 = vector.broadcast %329 : vector<1x128xf32> to vector<8x128xf32>
    %331 = arith.addf %328, %330 : vector<8x128xf32>
    %c0_69 = arith.constant 0 : index
    %c0_70 = arith.constant 0 : index
    %332 = vector.load %arg8[%c0_69, %c0_70] : memref<8x128xf32, #tpu.memory_space<vmem>>, vector<8x128xf32>
    tpu.vector_store %arg8[%c0_69, %c0_70], %331 {strides = array<i32>} : memref<8x128xf32, #tpu.memory_space<vmem>>, vector<8x128xf32>,
    return
  }
  func.func @transform_0(%arg0: i32) -> (i32, i32, i32) {
    %c0_i32 = arith.constant 0 : i32
    %c0_i32_0 = arith.constant 0 : i32
    %c0_i32_1 = arith.constant 0 : i32
    return %c0_i32, %arg0, %c0_i32_0 : i32, i32, i32
  }
  func.func @transform_1(%arg0: i32) -> (i32, i32) {
    %c0_i32 = arith.constant 0 : i32
    %c0_i32_0 = arith.constant 0 : i32
    %c0_i32_1 = arith.constant 0 : i32
    return %c0_i32, %c0_i32_0 : i32, i32
  }
  func.func @transform_2(%arg0: i32) -> (i32, i32) {
    %c0_i32 = arith.constant 0 : i32
    %c0_i32_0 = arith.constant 0 : i32
    %c0_i32_1 = arith.constant 0 : i32
    return %c0_i32, %c0_i32_0 : i32, i32
  }
  func.func @transform_3(%arg0: i32) -> (i32, i32) {
    %c0_i32 = arith.constant 0 : i32
    %c0_i32_0 = arith.constant 0 : i32
    %c0_i32_1 = arith.constant 0 : i32
    return %c0_i32, %c0_i32_0 : i32, i32
  }
  func.func @transform_4(%arg0: i32) -> (i32, i32) {
    %c0_i32 = arith.constant 0 : i32
    %c0_i32_0 = arith.constant 0 : i32
    %c0_i32_1 = arith.constant 0 : i32
    return %c0_i32, %c0_i32_0 : i32, i32
  }
  func.func @transform_5(%arg0: i32) -> (i32, i32) {
    %c0_i32 = arith.constant 0 : i32
    %c0_i32_0 = arith.constant 0 : i32
    %c0_i32_1 = arith.constant 0 : i32
    return %c0_i32, %c0_i32_0 : i32, i32
  }
  func.func @transform_6(%arg0: i32) -> (i32, i32) {
    %c0_i32 = arith.constant 0 : i32
    %c0_i32_0 = arith.constant 0 : i32
    %c0_i32_1 = arith.constant 0 : i32
    return %c0_i32, %c0_i32_0 : i32, i32
  }
  func.func @transform_7(%arg0: i32) -> (i32, i32) {
    %c0_i32 = arith.constant 0 : i32
    %c0_i32_0 = arith.constant 0 : i32
    return %arg0, %c0_i32 : i32, i32
  }
}

</mosaic_0001>

<llo_original>
// kernel: tpu_custom_call.1
$region0: #{tpu_custom_call.1}
  #allocation0 [shape = 'u32[]', space=smem, size = 0x4, offset = 0x4, fixed_abs, tag = 'smem constant byte address 0x4 - core index']
  #allocation1 [shape = 'u32[72,128]{1,0:T(1,128)}', space=vmem, size = 0x9000, scoped, tag = 'internal scratch']
  %s0 = inlined_call_operand.hbm [shape: f32[8,8,512], index: 0, kind: input, shape index: {}]
  %s1 = inlined_call_operand.hbm [shape: f32[128,512], index: 1, kind: input, shape index: {}]
  %s2 = inlined_call_operand.hbm [shape: f32[128,512], index: 2, kind: input, shape index: {}]
  %s3 = inlined_call_operand.hbm [shape: f32[128,512], index: 3, kind: input, shape index: {}]
  %s4 = inlined_call_operand.hbm [shape: f32[1,512], index: 4, kind: input, shape index: {}]
  %s5 = inlined_call_operand.hbm [shape: f32[128,128], index: 5, kind: input, shape index: {}]
  %s6 = inlined_call_operand.vmem [shape: f32[1,128], index: 6, kind: input, shape index: {}]
  %s7 = inlined_call_operand.hbm [shape: f32[8,128], index: 7, kind: output, shape index: {}]
  %s8 = sld [smem:[#allocation0]]
  $region62: #{tpu_custom_call.1} parent=0
    _
  %s10 = ssub.s32 1, %s8
  %s11 = scalar_select 0, %s10, %s8
  $region1: #{tpu_custom_call.1} parent=0
    #allocation2 [shape = 'u8[131072]{0}', space=vmem, size = 0x20000, scoped, tag = 'input window, operand 0, single buffered']
    #allocation3 [shape = 's32[1]{0}', space=sflag, size = 0x4, scoped, tag = 'scoped memory for tpu_custom_call.1']
    #allocation4 [shape = 's32[1]{0}', space=sflag, size = 0x4, scoped, tag = 'scoped memory for tpu_custom_call.1']
    #allocation5 [shape = 'u8[262144]{0}', space=vmem, size = 0x40000, scoped, tag = 'input window, operand 1, single buffered']
    #allocation6 [shape = 's32[1]{0}', space=sflag, size = 0x4, scoped, tag = 'scoped memory for tpu_custom_call.1']
    #allocation7 [shape = 'u8[262144]{0}', space=vmem, size = 0x40000, scoped, tag = 'input window, operand 2, single buffered']
    #allocation8 [shape = 'u8[262144]{0}', space=vmem, size = 0x40000, scoped, tag = 'input window, operand 3, single buffered']
    #allocation9 [shape = 's32[1]{0}', space=sflag, size = 0x4, scoped, tag = 'scoped memory for tpu_custom_call.1']
    #allocation10 [shape = 'u8[2048]{0}', space=vmem, size = 0x800, scoped, tag = 'input window, operand 4, single buffered']
    #allocation11 [shape = 'u8[65536]{0}', space=vmem, size = 0x10000, scoped, tag = 'input window, operand 5, single buffered']
    #allocation12 [shape = 's32[1]{0}', space=sflag, size = 0x4, scoped, tag = 'scoped memory for tpu_custom_call.1']
    #allocation13 [shape = 'u8[4096]{0}', space=vmem, size = 0x1000, scoped, tag = 'output window, operand 0, single buffered']
    %12 = vsyncpa [#allocation3], 0
    %13 = vsyncpa [#allocation6], 0
    %14 = vsyncpa [#allocation9], 0
    %15 = vsyncpa [#allocation12], 0
    %16 = vsyncpa [#allocation4], 0
    // Predicated region
    $region2: #{tpu_custom_call.1} parent=1 // pred_check
      _
    $region3: #{tpu_custom_call.1} parent=1 // pred_check_branch
      %18 = sbr.rel (0) target = $region5
    $region4: #{tpu_custom_call.1} parent=1 // pred_region
      %20 = vsyncadd [#allocation3], 0
      %s21 = sshll.u32 %s0, 4
      %s22 = int_to_ptr.hbm [resolvable:$true] %s21
      %s23 = sshll.u32 [#allocation2], 4
      %s24 = int_to_ptr.vmem [resolvable:$true] %s23
      %29 = dma.hbm_to_vmem [thread:$0]  %s22, 4096, %s24, [#allocation3], 512, 512, 32
    $region5: #{tpu_custom_call.1} parent=1 // pred_fallthru
      _
    // Predicated region
    $region6: #{tpu_custom_call.1} parent=1 // pred_check
      _
    $region7: #{tpu_custom_call.1} parent=1 // pred_check_branch
      %31 = sbr.rel (0) target = $region9
    $region8: #{tpu_custom_call.1} parent=1 // pred_region
      %33 = vsyncadd [#allocation6], 0
      %s34 = sshll.u32 %s1, 4
      %s35 = int_to_ptr.hbm [resolvable:$true] %s34
      %s36 = sshll.u32 [#allocation5], 4
      %s37 = int_to_ptr.vmem [resolvable:$true] %s36
      %42 = dma.hbm_to_vmem [thread:$0]  %s35, 8192, %s37, [#allocation6], 512, 512, 32
    $region9: #{tpu_custom_call.1} parent=1 // pred_fallthru
      _
    // Predicated region
    $region10: #{tpu_custom_call.1} parent=1 // pred_check
      _
    $region11: #{tpu_custom_call.1} parent=1 // pred_check_branch
      %44 = sbr.rel (0) target = $region13
    $region12: #{tpu_custom_call.1} parent=1 // pred_region
      %46 = vsyncadd [#allocation6], 0
      %s47 = sshll.u32 %s2, 4
      %s48 = int_to_ptr.hbm [resolvable:$true] %s47
      %s49 = sshll.u32 [#allocation7], 4
      %s50 = int_to_ptr.vmem [resolvable:$true] %s49
      %55 = dma.hbm_to_vmem [thread:$0]  %s48, 8192, %s50, [#allocation6], 512, 512, 32
    $region13: #{tpu_custom_call.1} parent=1 // pred_fallthru
      _
    // Predicated region
    $region14: #{tpu_custom_call.1} parent=1 // pred_check
      _
    $region15: #{tpu_custom_call.1} parent=1 // pred_check_branch
      %57 = sbr.rel (0) target = $region17
    $region16: #{tpu_custom_call.1} parent=1 // pred_region
      %59 = vsyncadd [#allocation9], 0
      %s60 = sshll.u32 %s3, 4
      %s61 = int_to_ptr.hbm [resolvable:$true] %s60
      %s62 = sshll.u32 [#allocation8], 4
      %s63 = int_to_ptr.vmem [resolvable:$true] %s62
      %68 = dma.hbm_to_vmem [thread:$0]  %s61, 8192, %s63, [#allocation9], 512, 512, 32
    $region17: #{tpu_custom_call.1} parent=1 // pred_fallthru
      _
    // Predicated region
    $region18: #{tpu_custom_call.1} parent=1 // pred_check
      _
    $region19: #{tpu_custom_call.1} parent=1 // pred_check_branch
      %70 = sbr.rel (0) target = $region21
    $region20: #{tpu_custom_call.1} parent=1 // pred_region
      %72 = vsyncadd [#allocation9], 0
      %s74 = sshll.u32 %s4, 4
      %s75 = int_to_ptr.hbm [resolvable:$true] %s74
      %s76 = sshll.u32 [#allocation10], 4
      %s77 = int_to_ptr.vmem [resolvable:$true] %s76
      %79 = dma.hbm_to_vmem [thread:$0]  %s75, 64, %s77, [#allocation9]
    $region21: #{tpu_custom_call.1} parent=1 // pred_fallthru
      _
    // Predicated region
    $region22: #{tpu_custom_call.1} parent=1 // pred_check
      _
    $region23: #{tpu_custom_call.1} parent=1 // pred_check_branch
      %81 = sbr.rel (0) target = $region25
    $region24: #{tpu_custom_call.1} parent=1 // pred_region
      %83 = vsyncadd [#allocation12], 0
      %s84 = sshll.u32 %s5, 4
      %s85 = int_to_ptr.hbm [resolvable:$true] %s84
      %s86 = sshll.u32 [#allocation11], 4
      %s87 = int_to_ptr.vmem [resolvable:$true] %s86
      %92 = dma.hbm_to_vmem [thread:$0]  %s85, 2048, %s87, [#allocation12], 128, 128, 8
    $region25: #{tpu_custom_call.1} parent=1 // pred_fallthru
      _
    // Predicated region
    $region26: #{tpu_custom_call.1} parent=1 // pred_check
      _
    $region27: #{tpu_custom_call.1} parent=1 // pred_check_branch
      %94 = sbr.rel (0) target = $region29
    $region28: #{tpu_custom_call.1} parent=1 // pred_region
      _
    $region29: #{tpu_custom_call.1} parent=1 // pred_fallthru
      _
    // Predicated region
    $region30: #{tpu_custom_call.1} parent=1 // pred_check
      _
    $region31: #{tpu_custom_call.1} parent=1 // pred_check_branch
      %96 = sbr.rel (0) target = $region33
    $region32: #{tpu_custom_call.1} parent=1 // pred_region
      %98 = dma.done [#allocation3], 4096
    $region33: #{tpu_custom_call.1} parent=1 // pred_fallthru
      _
    // Predicated region
    $region34: #{tpu_custom_call.1} parent=1 // pred_check
      _
    $region35: #{tpu_custom_call.1} parent=1 // pred_check_branch
      %100 = sbr.rel (0) target = $region37
    $region36: #{tpu_custom_call.1} parent=1 // pred_region
      %102 = dma.done [#allocation6], 8192
    $region37: #{tpu_custom_call.1} parent=1 // pred_fallthru
      _
    // Predicated region
    $region38: #{tpu_custom_call.1} parent=1 // pred_check
      _
    $region39: #{tpu_custom_call.1} parent=1 // pred_check_branch
      %104 = sbr.rel (0) target = $region41
    $region40: #{tpu_custom_call.1} parent=1 // pred_region
      %106 = dma.done [#allocation6], 8192
    $region41: #{tpu_custom_call.1} parent=1 // pred_fallthru
      _
    // Predicated region
    $region42: #{tpu_custom_call.1} parent=1 // pred_check
      _
    $region43: #{tpu_custom_call.1} parent=1 // pred_check_branch
      %108 = sbr.rel (0) target = $region45
    $region44: #{tpu_custom_call.1} parent=1 // pred_region
      %110 = dma.done [#allocation9], 8192
    $region45: #{tpu_custom_call.1} parent=1 // pred_fallthru
      _
    // Predicated region
    $region46: #{tpu_custom_call.1} parent=1 // pred_check
      _
    $region47: #{tpu_custom_call.1} parent=1 // pred_check_branch
      %112 = sbr.rel (0) target = $region49
    $region48: #{tpu_custom_call.1} parent=1 // pred_region
      %114 = dma.done [#allocation9], 64
    $region49: #{tpu_custom_call.1} parent=1 // pred_fallthru
      _
    // Predicated region
    $region50: #{tpu_custom_call.1} parent=1 // pred_check
      _
    $region51: #{tpu_custom_call.1} parent=1 // pred_check_branch
      %116 = sbr.rel (0) target = $region53
    $region52: #{tpu_custom_call.1} parent=1 // pred_region
      %118 = dma.done [#allocation12], 2048
    $region53: #{tpu_custom_call.1} parent=1 // pred_fallthru
      _
    %v119 = vld [vmem:[#allocation5] sm:$0xff]
    %v120 = vld [vmem:[#allocation5 + $0x8] sm:$0xff]
    %v121 = vld [vmem:[#allocation5 + $0x10] sm:$0xff]
    %v122 = vld [vmem:[#allocation5 + $0x18] sm:$0xff]
    %v123 = vld [vmem:[#allocation5 + $0x20] sm:$0xff]
    %v124 = vld [vmem:[#allocation5 + $0x28] sm:$0xff]
    %v125 = vld [vmem:[#allocation5 + $0x30] sm:$0xff]
    %v126 = vld [vmem:[#allocation5 + $0x38] sm:$0xff]
    %v127 = vld [vmem:[#allocation5 + $0x40] sm:$0xff]
    %v128 = vld [vmem:[#allocation5 + $0x48] sm:$0xff]
    %v129 = vld [vmem:[#allocation5 + $0x50] sm:$0xff]
    %v130 = vld [vmem:[#allocation5 + $0x58] sm:$0xff]
    %v131 = vld [vmem:[#allocation5 + $0x60] sm:$0xff]
    %v132 = vld [vmem:[#allocation5 + $0x68] sm:$0xff]
    %v133 = vld [vmem:[#allocation5 + $0x70] sm:$0xff]
    %v134 = vld [vmem:[#allocation5 + $0x78] sm:$0xff]
    %v135 = vld [vmem:[#allocation5 + $0x80] sm:$0xff]
    %v136 = vld [vmem:[#allocation5 + $0x88] sm:$0xff]
    %v137 = vld [vmem:[#allocation5 + $0x90] sm:$0xff]
    %v138 = vld [vmem:[#allocation5 + $0x98] sm:$0xff]
    %v139 = vld [vmem:[#allocation5 + $0xa0] sm:$0xff]
    %v140 = vld [vmem:[#allocation5 + $0xa8] sm:$0xff]
    %v141 = vld [vmem:[#allocation5 + $0xb0] sm:$0xff]
    %v142 = vld [vmem:[#allocation5 + $0xb8] sm:$0xff]
    %v143 = vld [vmem:[#allocation5 + $0xc0] sm:$0xff]
    %v144 = vld [vmem:[#allocation5 + $0xc8] sm:$0xff]
    %v145 = vld [vmem:[#allocation5 + $0xd0] sm:$0xff]
    %v146 = vld [vmem:[#allocation5 + $0xd8] sm:$0xff]
    %v147 = vld [vmem:[#allocation5 + $0xe0] sm:$0xff]
    %v148 = vld [vmem:[#allocation5 + $0xe8] sm:$0xff]
    %v149 = vld [vmem:[#allocation5 + $0xf0] sm:$0xff]
    %v150 = vld [vmem:[#allocation5 + $0xf8] sm:$0xff]
    %v151 = vld [vmem:[#allocation5 + $0x100] sm:$0xff]
    %v152 = vld [vmem:[#allocation5 + $0x108] sm:$0xff]
    %v153 = vld [vmem:[#allocation5 + $0x110] sm:$0xff]
    %v154 = vld [vmem:[#allocation5 + $0x118] sm:$0xff]
    %v155 = vld [vmem:[#allocation5 + $0x120] sm:$0xff]
    %v156 = vld [vmem:[#allocation5 + $0x128] sm:$0xff]
    %v157 = vld [vmem:[#allocation5 + $0x130] sm:$0xff]
    %v158 = vld [vmem:[#allocation5 + $0x138] sm:$0xff]
    %v159 = vld [vmem:[#allocation5 + $0x140] sm:$0xff]
    %v160 = vld [vmem:[#allocation5 + $0x148] sm:$0xff]
    %v161 = vld [vmem:[#allocation5 + $0x150] sm:$0xff]
    %v162 = vld [vmem:[#allocation5 + $0x158] sm:$0xff]
    %v163 = vld [vmem:[#allocation5 + $0x160] sm:$0xff]
    %v164 = vld [vmem:[#allocation5 + $0x168] sm:$0xff]
    %v165 = vld [vmem:[#allocation5 + $0x170] sm:$0xff]
    %v166 = vld [vmem:[#allocation5 + $0x178] sm:$0xff]
    %v167 = vld [vmem:[#allocation5 + $0x180] sm:$0xff]
    %v168 = vld [vmem:[#allocation5 + $0x188] sm:$0xff]
    %v169 = vld [vmem:[#allocation5 + $0x190] sm:$0xff]
    %v170 = vld [vmem:[#allocation5 + $0x198] sm:$0xff]
    %v171 = vld [vmem:[#allocation5 + $0x1a0] sm:$0xff]
    %v172 = vld [vmem:[#allocation5 + $0x1a8] sm:$0xff]
    %v173 = vld [vmem:[#allocation5 + $0x1b0] sm:$0xff]
    %v174 = vld [vmem:[#allocation5 + $0x1b8] sm:$0xff]
    %v175 = vld [vmem:[#allocation5 + $0x1c0] sm:$0xff]
    %v176 = vld [vmem:[#allocation5 + $0x1c8] sm:$0xff]
    %v177 = vld [vmem:[#allocation5 + $0x1d0] sm:$0xff]
    %v178 = vld [vmem:[#allocation5 + $0x1d8] sm:$0xff]
    %v179 = vld [vmem:[#allocation5 + $0x1e0] sm:$0xff]
    %v180 = vld [vmem:[#allocation5 + $0x1e8] sm:$0xff]
    %v181 = vld [vmem:[#allocation5 + $0x1f0] sm:$0xff]
    %v182 = vld [vmem:[#allocation5 + $0x1f8] sm:$0xff]
    %v183 = vld [vmem:[#allocation7] sm:$0xff]
    %v184 = vld [vmem:[#allocation7 + $0x8] sm:$0xff]
    %v185 = vld [vmem:[#allocation7 + $0x10] sm:$0xff]
    %v186 = vld [vmem:[#allocation7 + $0x18] sm:$0xff]
    %v187 = vld [vmem:[#allocation7 + $0x20] sm:$0xff]
    %v188 = vld [vmem:[#allocation7 + $0x28] sm:$0xff]
    %v189 = vld [vmem:[#allocation7 + $0x30] sm:$0xff]
    %v190 = vld [vmem:[#allocation7 + $0x38] sm:$0xff]
    %v191 = vld [vmem:[#allocation7 + $0x40] sm:$0xff]
    %v192 = vld [vmem:[#allocation7 + $0x48] sm:$0xff]
    %v193 = vld [vmem:[#allocation7 + $0x50] sm:$0xff]
    %v194 = vld [vmem:[#allocation7 + $0x58] sm:$0xff]
    %v195 = vld [vmem:[#allocation7 + $0x60] sm:$0xff]
    %v196 = vld [vmem:[#allocation7 + $0x68] sm:$0xff]
    %v197 = vld [vmem:[#allocation7 + $0x70] sm:$0xff]
    %v198 = vld [vmem:[#allocation7 + $0x78] sm:$0xff]
    %v199 = vld [vmem:[#allocation7 + $0x80] sm:$0xff]
    %v200 = vld [vmem:[#allocation7 + $0x88] sm:$0xff]
    %v201 = vld [vmem:[#allocation7 + $0x90] sm:$0xff]
    %v202 = vld [vmem:[#allocation7 + $0x98] sm:$0xff]
    %v203 = vld [vmem:[#allocation7 + $0xa0] sm:$0xff]
    %v204 = vld [vmem:[#allocation7 + $0xa8] sm:$0xff]
    %v205 = vld [vmem:[#allocation7 + $0xb0] sm:$0xff]
    %v206 = vld [vmem:[#allocation7 + $0xb8] sm:$0xff]
    %v207 = vld [vmem:[#allocation7 + $0xc0] sm:$0xff]
    %v208 = vld [vmem:[#allocation7 + $0xc8] sm:$0xff]
    %v209 = vld [vmem:[#allocation7 + $0xd0] sm:$0xff]
    %v210 = vld [vmem:[#allocation7 + $0xd8] sm:$0xff]
    %v211 = vld [vmem:[#allocation7 + $0xe0] sm:$0xff]
    %v212 = vld [vmem:[#allocation7 + $0xe8] sm:$0xff]
    %v213 = vld [vmem:[#allocation7 + $0xf0] sm:$0xff]
    %v214 = vld [vmem:[#allocation7 + $0xf8] sm:$0xff]
    %v215 = vld [vmem:[#allocation7 + $0x100] sm:$0xff]
    %v216 = vld [vmem:[#allocation7 + $0x108] sm:$0xff]
    %v217 = vld [vmem:[#allocation7 + $0x110] sm:$0xff]
    %v218 = vld [vmem:[#allocation7 + $0x118] sm:$0xff]
    %v219 = vld [vmem:[#allocation7 + $0x120] sm:$0xff]
    %v220 = vld [vmem:[#allocation7 + $0x128] sm:$0xff]
    %v221 = vld [vmem:[#allocation7 + $0x130] sm:$0xff]
    %v222 = vld [vmem:[#allocation7 + $0x138] sm:$0xff]
    %v223 = vld [vmem:[#allocation7 + $0x140] sm:$0xff]
    %v224 = vld [vmem:[#allocation7 + $0x148] sm:$0xff]
    %v225 = vld [vmem:[#allocation7 + $0x150] sm:$0xff]
    %v226 = vld [vmem:[#allocation7 + $0x158] sm:$0xff]
    %v227 = vld [vmem:[#allocation7 + $0x160] sm:$0xff]
    %v228 = vld [vmem:[#allocation7 + $0x168] sm:$0xff]
    %v229 = vld [vmem:[#allocation7 + $0x170] sm:$0xff]
    %v230 = vld [vmem:[#allocation7 + $0x178] sm:$0xff]
    %v231 = vld [vmem:[#allocation7 + $0x180] sm:$0xff]
    %v232 = vld [vmem:[#allocation7 + $0x188] sm:$0xff]
    %v233 = vld [vmem:[#allocation7 + $0x190] sm:$0xff]
    %v234 = vld [vmem:[#allocation7 + $0x198] sm:$0xff]
    %v235 = vld [vmem:[#allocation7 + $0x1a0] sm:$0xff]
    %v236 = vld [vmem:[#allocation7 + $0x1a8] sm:$0xff]
    %v237 = vld [vmem:[#allocation7 + $0x1b0] sm:$0xff]
    %v238 = vld [vmem:[#allocation7 + $0x1b8] sm:$0xff]
    %v239 = vld [vmem:[#allocation7 + $0x1c0] sm:$0xff]
    %v240 = vld [vmem:[#allocation7 + $0x1c8] sm:$0xff]
    %v241 = vld [vmem:[#allocation7 + $0x1d0] sm:$0xff]
    %v242 = vld [vmem:[#allocation7 + $0x1d8] sm:$0xff]
    %v243 = vld [vmem:[#allocation7 + $0x1e0] sm:$0xff]
    %v244 = vld [vmem:[#allocation7 + $0x1e8] sm:$0xff]
    %v245 = vld [vmem:[#allocation7 + $0x1f0] sm:$0xff]
    %v246 = vld [vmem:[#allocation7 + $0x1f8] sm:$0xff]
    %v247 = vld [vmem:[#allocation8] sm:$0xff]
    %v248 = vld [vmem:[#allocation8 + $0x8] sm:$0xff]
    %v249 = vld [vmem:[#allocation8 + $0x10] sm:$0xff]
    %v250 = vld [vmem:[#allocation8 + $0x18] sm:$0xff]
    %v251 = vld [vmem:[#allocation8 + $0x20] sm:$0xff]
    %v252 = vld [vmem:[#allocation8 + $0x28] sm:$0xff]
    %v253 = vld [vmem:[#allocation8 + $0x30] sm:$0xff]
    %v254 = vld [vmem:[#allocation8 + $0x38] sm:$0xff]
    %v255 = vld [vmem:[#allocation8 + $0x40] sm:$0xff]
    %v256 = vld [vmem:[#allocation8 + $0x48] sm:$0xff]
    %v257 = vld [vmem:[#allocation8 + $0x50] sm:$0xff]
    %v258 = vld [vmem:[#allocation8 + $0x58] sm:$0xff]
    %v259 = vld [vmem:[#allocation8 + $0x60] sm:$0xff]
    %v260 = vld [vmem:[#allocation8 + $0x68] sm:$0xff]
    %v261 = vld [vmem:[#allocation8 + $0x70] sm:$0xff]
    %v262 = vld [vmem:[#allocation8 + $0x78] sm:$0xff]
    %v263 = vld [vmem:[#allocation8 + $0x80] sm:$0xff]
    %v264 = vld [vmem:[#allocation8 + $0x88] sm:$0xff]
    %v265 = vld [vmem:[#allocation8 + $0x90] sm:$0xff]
    %v266 = vld [vmem:[#allocation8 + $0x98] sm:$0xff]
    %v267 = vld [vmem:[#allocation8 + $0xa0] sm:$0xff]
    %v268 = vld [vmem:[#allocation8 + $0xa8] sm:$0xff]
    %v269 = vld [vmem:[#allocation8 + $0xb0] sm:$0xff]
    %v270 = vld [vmem:[#allocation8 + $0xb8] sm:$0xff]
    %v271 = vld [vmem:[#allocation8 + $0xc0] sm:$0xff]
    %v272 = vld [vmem:[#allocation8 + $0xc8] sm:$0xff]
    %v273 = vld [vmem:[#allocation8 + $0xd0] sm:$0xff]
    %v274 = vld [vmem:[#allocation8 + $0xd8] sm:$0xff]
    %v275 = vld [vmem:[#allocation8 + $0xe0] sm:$0xff]
    %v276 = vld [vmem:[#allocation8 + $0xe8] sm:$0xff]
    %v277 = vld [vmem:[#allocation8 + $0xf0] sm:$0xff]
    %v278 = vld [vmem:[#allocation8 + $0xf8] sm:$0xff]
    %v279 = vld [vmem:[#allocation8 + $0x100] sm:$0xff]
    %v280 = vld [vmem:[#allocation8 + $0x108] sm:$0xff]
    %v281 = vld [vmem:[#allocation8 + $0x110] sm:$0xff]
    %v282 = vld [vmem:[#allocation8 + $0x118] sm:$0xff]
    %v283 = vld [vmem:[#allocation8 + $0x120] sm:$0xff]
    %v284 = vld [vmem:[#allocation8 + $0x128] sm:$0xff]
    %v285 = vld [vmem:[#allocation8 + $0x130] sm:$0xff]
    %v286 = vld [vmem:[#allocation8 + $0x138] sm:$0xff]
    %v287 = vld [vmem:[#allocation8 + $0x140] sm:$0xff]
    %v288 = vld [vmem:[#allocation8 + $0x148] sm:$0xff]
    %v289 = vld [vmem:[#allocation8 + $0x150] sm:$0xff]
    %v290 = vld [vmem:[#allocation8 + $0x158] sm:$0xff]
    %v291 = vld [vmem:[#allocation8 + $0x160] sm:$0xff]
    %v292 = vld [vmem:[#allocation8 + $0x168] sm:$0xff]
    %v293 = vld [vmem:[#allocation8 + $0x170] sm:$0xff]
    %v294 = vld [vmem:[#allocation8 + $0x178] sm:$0xff]
    %v295 = vld [vmem:[#allocation8 + $0x180] sm:$0xff]
    %v296 = vld [vmem:[#allocation8 + $0x188] sm:$0xff]
    %v297 = vld [vmem:[#allocation8 + $0x190] sm:$0xff]
    %v298 = vld [vmem:[#allocation8 + $0x198] sm:$0xff]
    %v299 = vld [vmem:[#allocation8 + $0x1a0] sm:$0xff]
    %v300 = vld [vmem:[#allocation8 + $0x1a8] sm:$0xff]
    %v301 = vld [vmem:[#allocation8 + $0x1b0] sm:$0xff]
    %v302 = vld [vmem:[#allocation8 + $0x1b8] sm:$0xff]
    %v303 = vld [vmem:[#allocation8 + $0x1c0] sm:$0xff]
    %v304 = vld [vmem:[#allocation8 + $0x1c8] sm:$0xff]
    %v305 = vld [vmem:[#allocation8 + $0x1d0] sm:$0xff]
    %v306 = vld [vmem:[#allocation8 + $0x1d8] sm:$0xff]
    %v307 = vld [vmem:[#allocation8 + $0x1e0] sm:$0xff]
    %v308 = vld [vmem:[#allocation8 + $0x1e8] sm:$0xff]
    %v309 = vld [vmem:[#allocation8 + $0x1f0] sm:$0xff]
    %v310 = vld [vmem:[#allocation8 + $0x1f8] sm:$0xff]
    %v311 = vld [vmem:[#allocation10] sm:$0xf]
    %v313 = vperm.slane %v311, 0
    %v314 = vperm.slane %v311, 1
    %v315 = vperm.slane %v311, 2
    %v316 = vperm.slane %v311, 3
    %321 = vmatpush.msra.mxu0 %v307
    %322 = vmatpush.msra.mxu0 %v303
    %323 = vmatpush.msra.mxu0 %v299
    %324 = vmatpush.msra.mxu0 %v295
    %325 = vmatpush.msra.mxu0 %v291
    %326 = vmatpush.msra.mxu0 %v287
    %327 = vmatpush.msra.mxu0 %v283
    %328 = vmatpush.msra.mxu0 %v279
    %329 = vmatpush.msra.mxu0 %v275
    %330 = vmatpush.msra.mxu0 %v271
    %331 = vmatpush.msra.mxu0 %v267
    %332 = vmatpush.msra.mxu0 %v263
    %333 = vmatpush.msra.mxu0 %v259
    %334 = vmatpush.msra.mxu0 %v255
    %335 = vmatpush.msra.mxu0 %v251
    %336 = vmatpush.msra.mxu0 %v247
    %337 = vmatmul.f32.gmra.mxu0 0.0
    %v338 = vpop.f32.mrf.mxu0
    %v339 = vadd.f32 0.0, %v338
    %340 = vdwg.mxu0
    %341 = vmatpush.msra.mxu0 %v308
    %342 = vmatpush.msra.mxu0 %v304
    %343 = vmatpush.msra.mxu0 %v300
    %344 = vmatpush.msra.mxu0 %v296
    %345 = vmatpush.msra.mxu0 %v292
    %346 = vmatpush.msra.mxu0 %v288
    %347 = vmatpush.msra.mxu0 %v284
    %348 = vmatpush.msra.mxu0 %v280
    %349 = vmatpush.msra.mxu0 %v276
    %350 = vmatpush.msra.mxu0 %v272
    %351 = vmatpush.msra.mxu0 %v268
    %352 = vmatpush.msra.mxu0 %v264
    %353 = vmatpush.msra.mxu0 %v260
    %354 = vmatpush.msra.mxu0 %v256
    %355 = vmatpush.msra.mxu0 %v252
    %356 = vmatpush.msra.mxu0 %v248
    %357 = vmatmul.f32.gmra.mxu0 0.0
    %v358 = vpop.f32.mrf.mxu0
    %v359 = vadd.f32 0.0, %v358
    %360 = vdwg.mxu0
    %361 = vmatpush.msra.mxu0 %v309
    %362 = vmatpush.msra.mxu0 %v305
    %363 = vmatpush.msra.mxu0 %v301
    %364 = vmatpush.msra.mxu0 %v297
    %365 = vmatpush.msra.mxu0 %v293
    %366 = vmatpush.msra.mxu0 %v289
    %367 = vmatpush.msra.mxu0 %v285
    %368 = vmatpush.msra.mxu0 %v281
    %369 = vmatpush.msra.mxu0 %v277
    %370 = vmatpush.msra.mxu0 %v273
    %371 = vmatpush.msra.mxu0 %v269
    %372 = vmatpush.msra.mxu0 %v265
    %373 = vmatpush.msra.mxu0 %v261
    %374 = vmatpush.msra.mxu0 %v257
    %375 = vmatpush.msra.mxu0 %v253
    %376 = vmatpush.msra.mxu0 %v249
    %377 = vmatmul.f32.gmra.mxu0 0.0
    %v378 = vpop.f32.mrf.mxu0
    %v379 = vadd.f32 0.0, %v378
    %380 = vdwg.mxu0
    %381 = vmatpush.msra.mxu0 %v310
    %382 = vmatpush.msra.mxu0 %v306
    %383 = vmatpush.msra.mxu0 %v302
    %384 = vmatpush.msra.mxu0 %v298
    %385 = vmatpush.msra.mxu0 %v294
    %386 = vmatpush.msra.mxu0 %v290
    %387 = vmatpush.msra.mxu0 %v286
    %388 = vmatpush.msra.mxu0 %v282
    %389 = vmatpush.msra.mxu0 %v278
    %390 = vmatpush.msra.mxu0 %v274
    %391 = vmatpush.msra.mxu0 %v270
    %392 = vmatpush.msra.mxu0 %v266
    %393 = vmatpush.msra.mxu0 %v262
    %394 = vmatpush.msra.mxu0 %v258
    %395 = vmatpush.msra.mxu0 %v254
    %396 = vmatpush.msra.mxu0 %v250
    %397 = vmatmul.f32.gmra.mxu0 0.0
    %v398 = vpop.f32.mrf.mxu0
    %v399 = vadd.f32 0.0, %v398
    %400 = vdwg.mxu0
    %v401 = vadd.f32 %v313, %v339
    %v402 = vadd.f32 %v314, %v359
    %v403 = vadd.f32 %v315, %v379
    %v404 = vadd.f32 %v316, %v399
    %v405 = vld [vmem:[#allocation2] sm:$0xff]
    %v406 = vld [vmem:[#allocation2 + $0x8] sm:$0xff]
    %v407 = vld [vmem:[#allocation2 + $0x10] sm:$0xff]
    %v408 = vld [vmem:[#allocation2 + $0x18] sm:$0xff]
    %409 = vmatpush.msra.mxu0 %v179
    %410 = vmatpush.msra.mxu0 %v175
    %411 = vmatpush.msra.mxu0 %v171
    %412 = vmatpush.msra.mxu0 %v167
    %413 = vmatpush.msra.mxu0 %v163
    %414 = vmatpush.msra.mxu0 %v159
    %415 = vmatpush.msra.mxu0 %v155
    %416 = vmatpush.msra.mxu0 %v151
    %417 = vmatpush.msra.mxu0 %v147
    %418 = vmatpush.msra.mxu0 %v143
    %419 = vmatpush.msra.mxu0 %v139
    %420 = vmatpush.msra.mxu0 %v135
    %421 = vmatpush.msra.mxu0 %v131
    %422 = vmatpush.msra.mxu0 %v127
    %423 = vmatpush.msra.mxu0 %v123
    %424 = vmatpush.msra.mxu0 %v119
    %425 = vmatmul.f32.gmra.mxu0 0.0
    %v426 = vpop.f32.mrf.mxu0
    %v427 = vadd.f32 0.0, %v426
    %428 = vdwg.mxu0
    %429 = vmatpush.msra.mxu0 %v180
    %430 = vmatpush.msra.mxu0 %v176
    %431 = vmatpush.msra.mxu0 %v172
    %432 = vmatpush.msra.mxu0 %v168
    %433 = vmatpush.msra.mxu0 %v164
    %434 = vmatpush.msra.mxu0 %v160
    %435 = vmatpush.msra.mxu0 %v156
    %436 = vmatpush.msra.mxu0 %v152
    %437 = vmatpush.msra.mxu0 %v148
    %438 = vmatpush.msra.mxu0 %v144
    %439 = vmatpush.msra.mxu0 %v140
    %440 = vmatpush.msra.mxu0 %v136
    %441 = vmatpush.msra.mxu0 %v132
    %442 = vmatpush.msra.mxu0 %v128
    %443 = vmatpush.msra.mxu0 %v124
    %444 = vmatpush.msra.mxu0 %v120
    %445 = vmatmul.f32.gmra.mxu0 0.0
    %v446 = vpop.f32.mrf.mxu0
    %v447 = vadd.f32 0.0, %v446
    %448 = vdwg.mxu0
    %449 = vmatpush.msra.mxu0 %v181
    %450 = vmatpush.msra.mxu0 %v177
    %451 = vmatpush.msra.mxu0 %v173
    %452 = vmatpush.msra.mxu0 %v169
    %453 = vmatpush.msra.mxu0 %v165
    %454 = vmatpush.msra.mxu0 %v161
    %455 = vmatpush.msra.mxu0 %v157
    %456 = vmatpush.msra.mxu0 %v153
    %457 = vmatpush.msra.mxu0 %v149
    %458 = vmatpush.msra.mxu0 %v145
    %459 = vmatpush.msra.mxu0 %v141
    %460 = vmatpush.msra.mxu0 %v137
    %461 = vmatpush.msra.mxu0 %v133
    %462 = vmatpush.msra.mxu0 %v129
    %463 = vmatpush.msra.mxu0 %v125
    %464 = vmatpush.msra.mxu0 %v121
    %465 = vmatmul.f32.gmra.mxu0 0.0
    %v466 = vpop.f32.mrf.mxu0
    %v467 = vadd.f32 0.0, %v466
    %468 = vdwg.mxu0
    %469 = vmatpush.msra.mxu0 %v182
    %470 = vmatpush.msra.mxu0 %v178
    %471 = vmatpush.msra.mxu0 %v174
    %472 = vmatpush.msra.mxu0 %v170
    %473 = vmatpush.msra.mxu0 %v166
    %474 = vmatpush.msra.mxu0 %v162
    %475 = vmatpush.msra.mxu0 %v158
    %476 = vmatpush.msra.mxu0 %v154
    %477 = vmatpush.msra.mxu0 %v150
    %478 = vmatpush.msra.mxu0 %v146
    %479 = vmatpush.msra.mxu0 %v142
    %480 = vmatpush.msra.mxu0 %v138
    %481 = vmatpush.msra.mxu0 %v134
    %482 = vmatpush.msra.mxu0 %v130
    %483 = vmatpush.msra.mxu0 %v126
    %484 = vmatpush.msra.mxu0 %v122
    %485 = vmatmul.f32.gmra.mxu0 0.0
    %v486 = vpop.f32.mrf.mxu0
    %v487 = vadd.f32 0.0, %v486
    %488 = vdwg.mxu0
    %v489 = vadd.f32 %v405, %v427
    %v490 = vadd.f32 %v406, %v447
    %v491 = vadd.f32 %v407, %v467
    %v492 = vadd.f32 %v408, %v487
    %v493 = vxor.u32 %v489, 2147483648
    %v494 = vxor.u32 %v490, 2147483648
    %v495 = vxor.u32 %v491, 2147483648
    %v496 = vmul.f32 %v493, 1.442695
    %v497 = vpow.pop %v496
    %v498 = vmul.f32 %v494, 1.442695
    %v499 = vpow.pop %v498
    %v500 = vmul.f32 %v495, 1.442695
    %v501 = vpow.pop %v500
    %v502 = vadd.f32 %v497, 1.0
    %v503 = vadd.f32 %v499, 1.0
    %v504 = vadd.f32 %v501, 1.0
    %v505 = vrcp.pop %v502
    %v506 = vmul.f32 %v502, %v505
    %v507 = vsub.f32 1.0, %v506
    %v508 = vmul.f32 %v505, %v507
    %v509 = vadd.f32 %v505, %v508
    %vm510 = vweird.f32 %v502
    %vm511 = vweird.f32 %v505
    %vm512 = vmor %vm510, %vm511
    %v513 = vsel %vm512, %v505, %v509
    %v514 = vand.u32 2147483647, %v502
    %vm515 = vcmp.eq.f32.partialorder %v514, 8.507059e+37
    %v516 = vand.u32 %v502, 2147483648
    %v517 = vor.u32 1.1754944e-38, %v516
    %v518 = vsel %vm515, %v517, %v513
    %v519 = vmul.f32 1.0, %v518
    %v520 = vrcp.pop %v503
    %v521 = vmul.f32 %v503, %v520
    %v522 = vsub.f32 1.0, %v521
    %v523 = vmul.f32 %v520, %v522
    %v524 = vadd.f32 %v520, %v523
    %vm525 = vweird.f32 %v503
    %vm526 = vweird.f32 %v520
    %vm527 = vmor %vm525, %vm526
    %v528 = vsel %vm527, %v520, %v524
    %v529 = vand.u32 2147483647, %v503
    %vm530 = vcmp.eq.f32.partialorder %v529, 8.507059e+37
    %v531 = vand.u32 %v503, 2147483648
    %v532 = vor.u32 1.1754944e-38, %v531
    %v533 = vsel %vm530, %v532, %v528
    %v534 = vmul.f32 1.0, %v533
    %v535 = vrcp.pop %v504
    %v536 = vmul.f32 %v504, %v535
    %v537 = vsub.f32 1.0, %v536
    %v538 = vmul.f32 %v535, %v537
    %v539 = vadd.f32 %v535, %v538
    %vm540 = vweird.f32 %v504
    %vm541 = vweird.f32 %v535
    %vm542 = vmor %vm540, %vm541
    %v543 = vsel %vm542, %v535, %v539
    %v544 = vand.u32 2147483647, %v504
    %vm545 = vcmp.eq.f32.partialorder %v544, 8.507059e+37
    %v546 = vand.u32 %v504, 2147483648
    %v547 = vor.u32 1.1754944e-38, %v546
    %v548 = vsel %vm545, %v547, %v543
    %v549 = vmul.f32 1.0, %v548
    %v550 = vtanh.pop %v492
    %v551 = vmul.f32 %v534, 0.0
    %v552 = vmul.f32 %v519, %v550
    %v553 = vadd.f32 %v551, %v552
    %v554 = vtanh.pop %v553
    %v555 = vmul.f32 %v549, %v554
    %556 = vmatpush.msra.mxu0 %v243
    %557 = vmatpush.msra.mxu0 %v239
    %558 = vmatpush.msra.mxu0 %v235
    %559 = vmatpush.msra.mxu0 %v231
    %560 = vmatpush.msra.mxu0 %v227
    %561 = vmatpush.msra.mxu0 %v223
    %562 = vmatpush.msra.mxu0 %v219
    %563 = vmatpush.msra.mxu0 %v215
    %564 = vmatpush.msra.mxu0 %v211
    %565 = vmatpush.msra.mxu0 %v207
    %566 = vmatpush.msra.mxu0 %v203
    %567 = vmatpush.msra.mxu0 %v199
    %568 = vmatpush.msra.mxu0 %v195
    %569 = vmatpush.msra.mxu0 %v191
    %570 = vmatpush.msra.mxu0 %v187
    %571 = vmatpush.msra.mxu0 %v183
    %572 = vmatmul.f32.gmra.mxu0 %v555
    %v573 = vpop.f32.mrf.mxu0
    %v574 = vadd.f32 0.0, %v573
    %575 = vdwg.mxu0
    %576 = vmatpush.msra.mxu0 %v244
    %577 = vmatpush.msra.mxu0 %v240
    %578 = vmatpush.msra.mxu0 %v236
    %579 = vmatpush.msra.mxu0 %v232
    %580 = vmatpush.msra.mxu0 %v228
    %581 = vmatpush.msra.mxu0 %v224
    %582 = vmatpush.msra.mxu0 %v220
    %583 = vmatpush.msra.mxu0 %v216
    %584 = vmatpush.msra.mxu0 %v212
    %585 = vmatpush.msra.mxu0 %v208
    %586 = vmatpush.msra.mxu0 %v204
    %587 = vmatpush.msra.mxu0 %v200
    %588 = vmatpush.msra.mxu0 %v196
    %589 = vmatpush.msra.mxu0 %v192
    %590 = vmatpush.msra.mxu0 %v188
    %591 = vmatpush.msra.mxu0 %v184
    %592 = vmatmul.f32.gmra.mxu0 %v555
    %v593 = vpop.f32.mrf.mxu0
    %v594 = vadd.f32 0.0, %v593
    %595 = vdwg.mxu0
    %596 = vmatpush.msra.mxu0 %v245
    %597 = vmatpush.msra.mxu0 %v241
    %598 = vmatpush.msra.mxu0 %v237
    %599 = vmatpush.msra.mxu0 %v233
    %600 = vmatpush.msra.mxu0 %v229
    %601 = vmatpush.msra.mxu0 %v225
    %602 = vmatpush.msra.mxu0 %v221
    %603 = vmatpush.msra.mxu0 %v217
    %604 = vmatpush.msra.mxu0 %v213
    %605 = vmatpush.msra.mxu0 %v209
    %606 = vmatpush.msra.mxu0 %v205
    %607 = vmatpush.msra.mxu0 %v201
    %608 = vmatpush.msra.mxu0 %v197
    %609 = vmatpush.msra.mxu0 %v193
    %610 = vmatpush.msra.mxu0 %v189
    %611 = vmatpush.msra.mxu0 %v185
    %612 = vmatmul.f32.gmra.mxu0 %v555
    %v613 = vpop.f32.mrf.mxu0
    %v614 = vadd.f32 0.0, %v613
    %615 = vdwg.mxu0
    %616 = vmatpush.msra.mxu0 %v246
    %617 = vmatpush.msra.mxu0 %v242
    %618 = vmatpush.msra.mxu0 %v238
    %619 = vmatpush.msra.mxu0 %v234
    %620 = vmatpush.msra.mxu0 %v230
    %621 = vmatpush.msra.mxu0 %v226
    %622 = vmatpush.msra.mxu0 %v222
    %623 = vmatpush.msra.mxu0 %v218
    %624 = vmatpush.msra.mxu0 %v214
    %625 = vmatpush.msra.mxu0 %v210
    %626 = vmatpush.msra.mxu0 %v206
    %627 = vmatpush.msra.mxu0 %v202
    %628 = vmatpush.msra.mxu0 %v198
    %629 = vmatpush.msra.mxu0 %v194
    %630 = vmatpush.msra.mxu0 %v190
    %631 = vmatpush.msra.mxu0 %v186
    %632 = vmatmul.f32.gmra.mxu0 %v555
    %v633 = vpop.f32.mrf.mxu0
    %v634 = vadd.f32 0.0, %v633
    %635 = vdwg.mxu0
    %v636 = vadd.f32 %v401, %v574
    %v637 = vadd.f32 %v402, %v594
    %v638 = vadd.f32 %v403, %v614
    %v639 = vadd.f32 %v404, %v634
    %v640 = vxor.u32 %v636, 2147483648
    %v641 = vxor.u32 %v637, 2147483648
    %v642 = vxor.u32 %v638, 2147483648
    %v643 = vmul.f32 %v640, 1.442695
    %v644 = vpow.pop %v643
    %v645 = vmul.f32 %v641, 1.442695
    %v646 = vpow.pop %v645
    %v647 = vmul.f32 %v642, 1.442695
    %v648 = vpow.pop %v647
    %v649 = vadd.f32 %v644, 1.0
    %v650 = vadd.f32 %v646, 1.0
    %v651 = vadd.f32 %v648, 1.0
    %v652 = vrcp.pop %v649
    %v653 = vmul.f32 %v649, %v652
    %v654 = vsub.f32 1.0, %v653
    %v655 = vmul.f32 %v652, %v654
    %v656 = vadd.f32 %v652, %v655
    %vm657 = vweird.f32 %v649
    %vm658 = vweird.f32 %v652
    %vm659 = vmor %vm657, %vm658
    %v660 = vsel %vm659, %v652, %v656
    %v661 = vand.u32 2147483647, %v649
    %vm662 = vcmp.eq.f32.partialorder %v661, 8.507059e+37
    %v663 = vand.u32 %v649, 2147483648
    %v664 = vor.u32 1.1754944e-38, %v663
    %v665 = vsel %vm662, %v664, %v660
    %v666 = vmul.f32 1.0, %v665
    %v667 = vrcp.pop %v650
    %v668 = vmul.f32 %v650, %v667
    %v669 = vsub.f32 1.0, %v668
    %v670 = vmul.f32 %v667, %v669
    %v671 = vadd.f32 %v667, %v670
    %vm672 = vweird.f32 %v650
    %vm673 = vweird.f32 %v667
    %vm674 = vmor %vm672, %vm673
    %v675 = vsel %vm674, %v667, %v671
    %v676 = vand.u32 2147483647, %v650
    %vm677 = vcmp.eq.f32.partialorder %v676, 8.507059e+37
    %v678 = vand.u32 %v650, 2147483648
    %v679 = vor.u32 1.1754944e-38, %v678
    %v680 = vsel %vm677, %v679, %v675
    %v681 = vmul.f32 1.0, %v680
    %v682 = vrcp.pop %v651
    %v683 = vmul.f32 %v651, %v682
    %v684 = vsub.f32 1.0, %v683
    %v685 = vmul.f32 %v682, %v684
    %v686 = vadd.f32 %v682, %v685
    %vm687 = vweird.f32 %v651
    %vm688 = vweird.f32 %v682
    %vm689 = vmor %vm687, %vm688
    %v690 = vsel %vm689, %v682, %v686
    %v691 = vand.u32 2147483647, %v651
    %vm692 = vcmp.eq.f32.partialorder %v691, 8.507059e+37
    %v693 = vand.u32 %v651, 2147483648
    %v694 = vor.u32 1.1754944e-38, %v693
    %v695 = vsel %vm692, %v694, %v690
    %v696 = vmul.f32 1.0, %v695
    %v697 = vtanh.pop %v639
    %v698 = vmul.f32 %v681, 0.0
    %v699 = vmul.f32 %v666, %v697
    %v700 = vadd.f32 %v698, %v699
    %v701 = vtanh.pop %v700
    %v702 = vmul.f32 %v696, %v701
    %703 = vmatpush.msra.mxu0 %v307
    %704 = vmatpush.msra.mxu0 %v303
    %705 = vmatpush.msra.mxu0 %v299
    %706 = vmatpush.msra.mxu0 %v295
    %707 = vmatpush.msra.mxu0 %v291
    %708 = vmatpush.msra.mxu0 %v287
    %709 = vmatpush.msra.mxu0 %v283
    %710 = vmatpush.msra.mxu0 %v279
    %711 = vmatpush.msra.mxu0 %v275
    %712 = vmatpush.msra.mxu0 %v271
    %713 = vmatpush.msra.mxu0 %v267
    %714 = vmatpush.msra.mxu0 %v263
    %715 = vmatpush.msra.mxu0 %v259
    %716 = vmatpush.msra.mxu0 %v255
    %717 = vmatpush.msra.mxu0 %v251
    %718 = vmatpush.msra.mxu0 %v247
    %719 = vmatmul.f32.gmra.mxu0 %v702
    %v720 = vpop.f32.mrf.mxu0
    %v721 = vadd.f32 0.0, %v720
    %722 = vdwg.mxu0
    %723 = vmatpush.msra.mxu0 %v308
    %724 = vmatpush.msra.mxu0 %v304
    %725 = vmatpush.msra.mxu0 %v300
    %726 = vmatpush.msra.mxu0 %v296
    %727 = vmatpush.msra.mxu0 %v292
    %728 = vmatpush.msra.mxu0 %v288
    %729 = vmatpush.msra.mxu0 %v284
    %730 = vmatpush.msra.mxu0 %v280
    %731 = vmatpush.msra.mxu0 %v276
    %732 = vmatpush.msra.mxu0 %v272
    %733 = vmatpush.msra.mxu0 %v268
    %734 = vmatpush.msra.mxu0 %v264
    %735 = vmatpush.msra.mxu0 %v260
    %736 = vmatpush.msra.mxu0 %v256
    %737 = vmatpush.msra.mxu0 %v252
    %738 = vmatpush.msra.mxu0 %v248
    %739 = vmatmul.f32.gmra.mxu0 %v702
    %v740 = vpop.f32.mrf.mxu0
    %v741 = vadd.f32 0.0, %v740
    %742 = vdwg.mxu0
    %743 = vmatpush.msra.mxu0 %v309
    %744 = vmatpush.msra.mxu0 %v305
    %745 = vmatpush.msra.mxu0 %v301
    %746 = vmatpush.msra.mxu0 %v297
    %747 = vmatpush.msra.mxu0 %v293
    %748 = vmatpush.msra.mxu0 %v289
    %749 = vmatpush.msra.mxu0 %v285
    %750 = vmatpush.msra.mxu0 %v281
    %751 = vmatpush.msra.mxu0 %v277
    %752 = vmatpush.msra.mxu0 %v273
    %753 = vmatpush.msra.mxu0 %v269
    %754 = vmatpush.msra.mxu0 %v265
    %755 = vmatpush.msra.mxu0 %v261
    %756 = vmatpush.msra.mxu0 %v257
    %757 = vmatpush.msra.mxu0 %v253
    %758 = vmatpush.msra.mxu0 %v249
    %759 = vmatmul.f32.gmra.mxu0 %v702
    %v760 = vpop.f32.mrf.mxu0
    %v761 = vadd.f32 0.0, %v760
    %762 = vdwg.mxu0
    %763 = vmatpush.msra.mxu0 %v310
    %764 = vmatpush.msra.mxu0 %v306
    %765 = vmatpush.msra.mxu0 %v302
    %766 = vmatpush.msra.mxu0 %v298
    %767 = vmatpush.msra.mxu0 %v294
    %768 = vmatpush.msra.mxu0 %v290
    %769 = vmatpush.msra.mxu0 %v286
    %770 = vmatpush.msra.mxu0 %v282
    %771 = vmatpush.msra.mxu0 %v278
    %772 = vmatpush.msra.mxu0 %v274
    %773 = vmatpush.msra.mxu0 %v270
    %774 = vmatpush.msra.mxu0 %v266
    %775 = vmatpush.msra.mxu0 %v262
    %776 = vmatpush.msra.mxu0 %v258
    %777 = vmatpush.msra.mxu0 %v254
    %778 = vmatpush.msra.mxu0 %v250
    %779 = vmatmul.f32.gmra.mxu0 %v702
    %v780 = vpop.f32.mrf.mxu0
    %v781 = vadd.f32 0.0, %v780
    %782 = vdwg.mxu0
    %v783 = vadd.f32 %v313, %v721
    %v784 = vadd.f32 %v314, %v741
    %v785 = vadd.f32 %v315, %v761
    %v786 = vadd.f32 %v316, %v781
    %s787 = scalar_lea.vmem [#allocation2], 32
    %v788 = vld [vmem:[%s787] sm:$0xff]
    %v789 = vld [vmem:[%s787 + $0x8] sm:$0xff]
    %v790 = vld [vmem:[%s787 + $0x10] sm:$0xff]
    %v791 = vld [vmem:[%s787 + $0x18] sm:$0xff]
    %792 = vmatpush.msra.mxu0 %v179
    %793 = vmatpush.msra.mxu0 %v175
    %794 = vmatpush.msra.mxu0 %v171
    %795 = vmatpush.msra.mxu0 %v167
    %796 = vmatpush.msra.mxu0 %v163
    %797 = vmatpush.msra.mxu0 %v159
    %798 = vmatpush.msra.mxu0 %v155
    %799 = vmatpush.msra.mxu0 %v151
    %800 = vmatpush.msra.mxu0 %v147
    %801 = vmatpush.msra.mxu0 %v143
    %802 = vmatpush.msra.mxu0 %v139
    %803 = vmatpush.msra.mxu0 %v135
    %804 = vmatpush.msra.mxu0 %v131
    %805 = vmatpush.msra.mxu0 %v127
    %806 = vmatpush.msra.mxu0 %v123
    %807 = vmatpush.msra.mxu0 %v119
    %808 = vmatmul.f32.gmra.mxu0 %v555
    %v809 = vpop.f32.mrf.mxu0
    %v810 = vadd.f32 0.0, %v809
    %811 = vdwg.mxu0
    %812 = vmatpush.msra.mxu0 %v180
    %813 = vmatpush.msra.mxu0 %v176
    %814 = vmatpush.msra.mxu0 %v172
    %815 = vmatpush.msra.mxu0 %v168
    %816 = vmatpush.msra.mxu0 %v164
    %817 = vmatpush.msra.mxu0 %v160
    %818 = vmatpush.msra.mxu0 %v156
    %819 = vmatpush.msra.mxu0 %v152
    %820 = vmatpush.msra.mxu0 %v148
    %821 = vmatpush.msra.mxu0 %v144
    %822 = vmatpush.msra.mxu0 %v140
    %823 = vmatpush.msra.mxu0 %v136
    %824 = vmatpush.msra.mxu0 %v132
    %825 = vmatpush.msra.mxu0 %v128
    %826 = vmatpush.msra.mxu0 %v124
    %827 = vmatpush.msra.mxu0 %v120
    %828 = vmatmul.f32.gmra.mxu0 %v555
    %v829 = vpop.f32.mrf.mxu0
    %v830 = vadd.f32 0.0, %v829
    %831 = vdwg.mxu0
    %832 = vmatpush.msra.mxu0 %v181
    %833 = vmatpush.msra.mxu0 %v177
    %834 = vmatpush.msra.mxu0 %v173
    %835 = vmatpush.msra.mxu0 %v169
    %836 = vmatpush.msra.mxu0 %v165
    %837 = vmatpush.msra.mxu0 %v161
    %838 = vmatpush.msra.mxu0 %v157
    %839 = vmatpush.msra.mxu0 %v153
    %840 = vmatpush.msra.mxu0 %v149
    %841 = vmatpush.msra.mxu0 %v145
    %842 = vmatpush.msra.mxu0 %v141
    %843 = vmatpush.msra.mxu0 %v137
    %844 = vmatpush.msra.mxu0 %v133
    %845 = vmatpush.msra.mxu0 %v129
    %846 = vmatpush.msra.mxu0 %v125
    %847 = vmatpush.msra.mxu0 %v121
    %848 = vmatmul.f32.gmra.mxu0 %v555
    %v849 = vpop.f32.mrf.mxu0
    %v850 = vadd.f32 0.0, %v849
    %851 = vdwg.mxu0
    %852 = vmatpush.msra.mxu0 %v182
    %853 = vmatpush.msra.mxu0 %v178
    %854 = vmatpush.msra.mxu0 %v174
    %855 = vmatpush.msra.mxu0 %v170
    %856 = vmatpush.msra.mxu0 %v166
    %857 = vmatpush.msra.mxu0 %v162
    %858 = vmatpush.msra.mxu0 %v158
    %859 = vmatpush.msra.mxu0 %v154
    %860 = vmatpush.msra.mxu0 %v150
    %861 = vmatpush.msra.mxu0 %v146
    %862 = vmatpush.msra.mxu0 %v142
    %863 = vmatpush.msra.mxu0 %v138
    %864 = vmatpush.msra.mxu0 %v134
    %865 = vmatpush.msra.mxu0 %v130
    %866 = vmatpush.msra.mxu0 %v126
    %867 = vmatpush.msra.mxu0 %v122
    %868 = vmatmul.f32.gmra.mxu0 %v555
    %v869 = vpop.f32.mrf.mxu0
    %v870 = vadd.f32 0.0, %v869
    %871 = vdwg.mxu0
    %v872 = vadd.f32 %v788, %v810
    %v873 = vadd.f32 %v789, %v830
    %v874 = vadd.f32 %v790, %v850
    %v875 = vadd.f32 %v791, %v870
    %v876 = vxor.u32 %v872, 2147483648
    %v877 = vxor.u32 %v873, 2147483648
    %v878 = vxor.u32 %v874, 2147483648
    %v879 = vmul.f32 %v876, 1.442695
    %v880 = vpow.pop %v879
    %v881 = vmul.f32 %v877, 1.442695
    %v882 = vpow.pop %v881
    %v883 = vmul.f32 %v878, 1.442695
    %v884 = vpow.pop %v883
    %v885 = vadd.f32 %v880, 1.0
    %v886 = vadd.f32 %v882, 1.0
    %v887 = vadd.f32 %v884, 1.0
    %v888 = vrcp.pop %v885
    %v889 = vmul.f32 %v885, %v888
    %v890 = vsub.f32 1.0, %v889
    %v891 = vmul.f32 %v888, %v890
    %v892 = vadd.f32 %v888, %v891
    %vm893 = vweird.f32 %v885
    %vm894 = vweird.f32 %v888
    %vm895 = vmor %vm893, %vm894
    %v896 = vsel %vm895, %v888, %v892
    %v897 = vand.u32 2147483647, %v885
    %vm898 = vcmp.eq.f32.partialorder %v897, 8.507059e+37
    %v899 = vand.u32 %v885, 2147483648
    %v900 = vor.u32 1.1754944e-38, %v899
    %v901 = vsel %vm898, %v900, %v896
    %v902 = vmul.f32 1.0, %v901
    %v903 = vrcp.pop %v886
    %v904 = vmul.f32 %v886, %v903
    %v905 = vsub.f32 1.0, %v904
    %v906 = vmul.f32 %v903, %v905
    %v907 = vadd.f32 %v903, %v906
    %vm908 = vweird.f32 %v886
    %vm909 = vweird.f32 %v903
    %vm910 = vmor %vm908, %vm909
    %v911 = vsel %vm910, %v903, %v907
    %v912 = vand.u32 2147483647, %v886
    %vm913 = vcmp.eq.f32.partialorder %v912, 8.507059e+37
    %v914 = vand.u32 %v886, 2147483648
    %v915 = vor.u32 1.1754944e-38, %v914
    %v916 = vsel %vm913, %v915, %v911
    %v917 = vmul.f32 1.0, %v916
    %v918 = vrcp.pop %v887
    %v919 = vmul.f32 %v887, %v918
    %v920 = vsub.f32 1.0, %v919
    %v921 = vmul.f32 %v918, %v920
    %v922 = vadd.f32 %v918, %v921
    %vm923 = vweird.f32 %v887
    %vm924 = vweird.f32 %v918
    %vm925 = vmor %vm923, %vm924
    %v926 = vsel %vm925, %v918, %v922
    %v927 = vand.u32 2147483647, %v887
    %vm928 = vcmp.eq.f32.partialorder %v927, 8.507059e+37
    %v929 = vand.u32 %v887, 2147483648
    %v930 = vor.u32 1.1754944e-38, %v929
    %v931 = vsel %vm928, %v930, %v926
    %v932 = vmul.f32 1.0, %v931
    %v933 = vtanh.pop %v875
    %v934 = vmul.f32 %v917, %v553
    %v935 = vmul.f32 %v902, %v933
    %v936 = vadd.f32 %v934, %v935
    %v937 = vtanh.pop %v936
    %v938 = vmul.f32 %v932, %v937
    %939 = vmatpush.msra.mxu0 %v243
    %940 = vmatpush.msra.mxu0 %v239
    %941 = vmatpush.msra.mxu0 %v235
    %942 = vmatpush.msra.mxu0 %v231
    %943 = vmatpush.msra.mxu0 %v227
    %944 = vmatpush.msra.mxu0 %v223
    %945 = vmatpush.msra.mxu0 %v219
    %946 = vmatpush.msra.mxu0 %v215
    %947 = vmatpush.msra.mxu0 %v211
    %948 = vmatpush.msra.mxu0 %v207
    %949 = vmatpush.msra.mxu0 %v203
    %950 = vmatpush.msra.mxu0 %v199
    %951 = vmatpush.msra.mxu0 %v195
    %952 = vmatpush.msra.mxu0 %v191
    %953 = vmatpush.msra.mxu0 %v187
    %954 = vmatpush.msra.mxu0 %v183
    %955 = vmatmul.f32.gmra.mxu0 %v938
    %v956 = vpop.f32.mrf.mxu0
    %v957 = vadd.f32 0.0, %v956
    %958 = vdwg.mxu0
    %959 = vmatpush.msra.mxu0 %v244
    %960 = vmatpush.msra.mxu0 %v240
    %961 = vmatpush.msra.mxu0 %v236
    %962 = vmatpush.msra.mxu0 %v232
    %963 = vmatpush.msra.mxu0 %v228
    %964 = vmatpush.msra.mxu0 %v224
    %965 = vmatpush.msra.mxu0 %v220
    %966 = vmatpush.msra.mxu0 %v216
    %967 = vmatpush.msra.mxu0 %v212
    %968 = vmatpush.msra.mxu0 %v208
    %969 = vmatpush.msra.mxu0 %v204
    %970 = vmatpush.msra.mxu0 %v200
    %971 = vmatpush.msra.mxu0 %v196
    %972 = vmatpush.msra.mxu0 %v192
    %973 = vmatpush.msra.mxu0 %v188
    %974 = vmatpush.msra.mxu0 %v184
    %975 = vmatmul.f32.gmra.mxu0 %v938
    %v976 = vpop.f32.mrf.mxu0
    %v977 = vadd.f32 0.0, %v976
    %978 = vdwg.mxu0
    %979 = vmatpush.msra.mxu0 %v245
    %980 = vmatpush.msra.mxu0 %v241
    %981 = vmatpush.msra.mxu0 %v237
    %982 = vmatpush.msra.mxu0 %v233
    %983 = vmatpush.msra.mxu0 %v229
    %984 = vmatpush.msra.mxu0 %v225
    %985 = vmatpush.msra.mxu0 %v221
    %986 = vmatpush.msra.mxu0 %v217
    %987 = vmatpush.msra.mxu0 %v213
    %988 = vmatpush.msra.mxu0 %v209
    %989 = vmatpush.msra.mxu0 %v205
    %990 = vmatpush.msra.mxu0 %v201
    %991 = vmatpush.msra.mxu0 %v197
    %992 = vmatpush.msra.mxu0 %v193
    %993 = vmatpush.msra.mxu0 %v189
    %994 = vmatpush.msra.mxu0 %v185
    %995 = vmatmul.f32.gmra.mxu0 %v938
    %v996 = vpop.f32.mrf.mxu0
    %v997 = vadd.f32 0.0, %v996
    %998 = vdwg.mxu0
    %999 = vmatpush.msra.mxu0 %v246
    %1000 = vmatpush.msra.mxu0 %v242
    %1001 = vmatpush.msra.mxu0 %v238
    %1002 = vmatpush.msra.mxu0 %v234
    %1003 = vmatpush.msra.mxu0 %v230
    %1004 = vmatpush.msra.mxu0 %v226
    %1005 = vmatpush.msra.mxu0 %v222
    %1006 = vmatpush.msra.mxu0 %v218
    %1007 = vmatpush.msra.mxu0 %v214
    %1008 = vmatpush.msra.mxu0 %v210
    %1009 = vmatpush.msra.mxu0 %v206
    %1010 = vmatpush.msra.mxu0 %v202
    %1011 = vmatpush.msra.mxu0 %v198
    %1012 = vmatpush.msra.mxu0 %v194
    %1013 = vmatpush.msra.mxu0 %v190
    %1014 = vmatpush.msra.mxu0 %v186
    %1015 = vmatmul.f32.gmra.mxu0 %v938
    %v1016 = vpop.f32.mrf.mxu0
    %v1017 = vadd.f32 0.0, %v1016
    %1018 = vdwg.mxu0
    %v1019 = vadd.f32 %v783, %v957
    %v1020 = vadd.f32 %v784, %v977
    %v1021 = vadd.f32 %v785, %v997
    %v1022 = vadd.f32 %v786, %v1017
    %v1023 = vxor.u32 %v1019, 2147483648
    %v1024 = vxor.u32 %v1020, 2147483648
    %v1025 = vxor.u32 %v1021, 2147483648
    %v1026 = vmul.f32 %v1023, 1.442695
    %v1027 = vpow.pop %v1026
    %v1028 = vmul.f32 %v1024, 1.442695
    %v1029 = vpow.pop %v1028
    %v1030 = vmul.f32 %v1025, 1.442695
    %v1031 = vpow.pop %v1030
    %v1032 = vadd.f32 %v1027, 1.0
    %v1033 = vadd.f32 %v1029, 1.0
    %v1034 = vadd.f32 %v1031, 1.0
    %v1035 = vrcp.pop %v1032
    %v1036 = vmul.f32 %v1032, %v1035
    %v1037 = vsub.f32 1.0, %v1036
    %v1038 = vmul.f32 %v1035, %v1037
    %v1039 = vadd.f32 %v1035, %v1038
    %vm1040 = vweird.f32 %v1032
    %vm1041 = vweird.f32 %v1035
    %vm1042 = vmor %vm1040, %vm1041
    %v1043 = vsel %vm1042, %v1035, %v1039
    %v1044 = vand.u32 2147483647, %v1032
    %vm1045 = vcmp.eq.f32.partialorder %v1044, 8.507059e+37
    %v1046 = vand.u32 %v1032, 2147483648
    %v1047 = vor.u32 1.1754944e-38, %v1046
    %v1048 = vsel %vm1045, %v1047, %v1043
    %v1049 = vmul.f32 1.0, %v1048
    %v1050 = vrcp.pop %v1033
    %v1051 = vmul.f32 %v1033, %v1050
    %v1052 = vsub.f32 1.0, %v1051
    %v1053 = vmul.f32 %v1050, %v1052
    %v1054 = vadd.f32 %v1050, %v1053
    %vm1055 = vweird.f32 %v1033
    %vm1056 = vweird.f32 %v1050
    %vm1057 = vmor %vm1055, %vm1056
    %v1058 = vsel %vm1057, %v1050, %v1054
    %v1059 = vand.u32 2147483647, %v1033
    %vm1060 = vcmp.eq.f32.partialorder %v1059, 8.507059e+37
    %v1061 = vand.u32 %v1033, 2147483648
    %v1062 = vor.u32 1.1754944e-38, %v1061
    %v1063 = vsel %vm1060, %v1062, %v1058
    %v1064 = vmul.f32 1.0, %v1063
    %v1065 = vrcp.pop %v1034
    %v1066 = vmul.f32 %v1034, %v1065
    %v1067 = vsub.f32 1.0, %v1066
    %v1068 = vmul.f32 %v1065, %v1067
    %v1069 = vadd.f32 %v1065, %v1068
    %vm1070 = vweird.f32 %v1034
    %vm1071 = vweird.f32 %v1065
    %vm1072 = vmor %vm1070, %vm1071
    %v1073 = vsel %vm1072, %v1065, %v1069
    %v1074 = vand.u32 2147483647, %v1034
    %vm1075 = vcmp.eq.f32.partialorder %v1074, 8.507059e+37
    %v1076 = vand.u32 %v1034, 2147483648
    %v1077 = vor.u32 1.1754944e-38, %v1076
    %v1078 = vsel %vm1075, %v1077, %v1073
    %v1079 = vmul.f32 1.0, %v1078
    %v1080 = vtanh.pop %v1022
    %v1081 = vmul.f32 %v1064, %v700
    %v1082 = vmul.f32 %v1049, %v1080
    %v1083 = vadd.f32 %v1081, %v1082
    %v1084 = vtanh.pop %v1083
    %v1085 = vmul.f32 %v1079, %v1084
    %1086 = vmatpush.msra.mxu0 %v307
    %1087 = vmatpush.msra.mxu0 %v303
    %1088 = vmatpush.msra.mxu0 %v299
    %1089 = vmatpush.msra.mxu0 %v295
    %1090 = vmatpush.msra.mxu0 %v291
    %1091 = vmatpush.msra.mxu0 %v287
    %1092 = vmatpush.msra.mxu0 %v283
    %1093 = vmatpush.msra.mxu0 %v279
    %1094 = vmatpush.msra.mxu0 %v275
    %1095 = vmatpush.msra.mxu0 %v271
    %1096 = vmatpush.msra.mxu0 %v267
    %1097 = vmatpush.msra.mxu0 %v263
    %1098 = vmatpush.msra.mxu0 %v259
    %1099 = vmatpush.msra.mxu0 %v255
    %1100 = vmatpush.msra.mxu0 %v251
    %1101 = vmatpush.msra.mxu0 %v247
    %1102 = vmatmul.f32.gmra.mxu0 %v1085
    %v1103 = vpop.f32.mrf.mxu0
    %v1104 = vadd.f32 0.0, %v1103
    %1105 = vdwg.mxu0
    %1106 = vmatpush.msra.mxu0 %v308
    %1107 = vmatpush.msra.mxu0 %v304
    %1108 = vmatpush.msra.mxu0 %v300
    %1109 = vmatpush.msra.mxu0 %v296
    %1110 = vmatpush.msra.mxu0 %v292
    %1111 = vmatpush.msra.mxu0 %v288
    %1112 = vmatpush.msra.mxu0 %v284
    %1113 = vmatpush.msra.mxu0 %v280
    %1114 = vmatpush.msra.mxu0 %v276
    %1115 = vmatpush.msra.mxu0 %v272
    %1116 = vmatpush.msra.mxu0 %v268
    %1117 = vmatpush.msra.mxu0 %v264
    %1118 = vmatpush.msra.mxu0 %v260
    %1119 = vmatpush.msra.mxu0 %v256
    %1120 = vmatpush.msra.mxu0 %v252
    %1121 = vmatpush.msra.mxu0 %v248
    %1122 = vmatmul.f32.gmra.mxu0 %v1085
    %v1123 = vpop.f32.mrf.mxu0
    %v1124 = vadd.f32 0.0, %v1123
    %1125 = vdwg.mxu0
    %1126 = vmatpush.msra.mxu0 %v309
    %1127 = vmatpush.msra.mxu0 %v305
    %1128 = vmatpush.msra.mxu0 %v301
    %1129 = vmatpush.msra.mxu0 %v297
    %1130 = vmatpush.msra.mxu0 %v293
    %1131 = vmatpush.msra.mxu0 %v289
    %1132 = vmatpush.msra.mxu0 %v285
    %1133 = vmatpush.msra.mxu0 %v281
    %1134 = vmatpush.msra.mxu0 %v277
    %1135 = vmatpush.msra.mxu0 %v273
    %1136 = vmatpush.msra.mxu0 %v269
    %1137 = vmatpush.msra.mxu0 %v265
    %1138 = vmatpush.msra.mxu0 %v261
    %1139 = vmatpush.msra.mxu0 %v257
    %1140 = vmatpush.msra.mxu0 %v253
    %1141 = vmatpush.msra.mxu0 %v249
    %1142 = vmatmul.f32.gmra.mxu0 %v1085
    %v1143 = vpop.f32.mrf.mxu0
    %v1144 = vadd.f32 0.0, %v1143
    %1145 = vdwg.mxu0
    %1146 = vmatpush.msra.mxu0 %v310
    %1147 = vmatpush.msra.mxu0 %v306
    %1148 = vmatpush.msra.mxu0 %v302
    %1149 = vmatpush.msra.mxu0 %v298
    %1150 = vmatpush.msra.mxu0 %v294
    %1151 = vmatpush.msra.mxu0 %v290
    %1152 = vmatpush.msra.mxu0 %v286
    %1153 = vmatpush.msra.mxu0 %v282
    %1154 = vmatpush.msra.mxu0 %v278
    %1155 = vmatpush.msra.mxu0 %v274
    %1156 = vmatpush.msra.mxu0 %v270
    %1157 = vmatpush.msra.mxu0 %v266
    %1158 = vmatpush.msra.mxu0 %v262
    %1159 = vmatpush.msra.mxu0 %v258
    %1160 = vmatpush.msra.mxu0 %v254
    %1161 = vmatpush.msra.mxu0 %v250
    %1162 = vmatmul.f32.gmra.mxu0 %v1085
    %v1163 = vpop.f32.mrf.mxu0
    %v1164 = vadd.f32 0.0, %v1163
    %1165 = vdwg.mxu0
    %v1166 = vadd.f32 %v313, %v1104
    %v1167 = vadd.f32 %v314, %v1124
    %v1168 = vadd.f32 %v315, %v1144
    %v1169 = vadd.f32 %v316, %v1164
    %s1170 = scalar_lea.vmem [#allocation2], 64
    %v1171 = vld [vmem:[%s1170] sm:$0xff]
    %v1172 = vld [vmem:[%s1170 + $0x8] sm:$0xff]
    %v1173 = vld [vmem:[%s1170 + $0x10] sm:$0xff]
    %v1174 = vld [vmem:[%s1170 + $0x18] sm:$0xff]
    %1175 = vmatpush.msra.mxu0 %v179
    %1176 = vmatpush.msra.mxu0 %v175
    %1177 = vmatpush.msra.mxu0 %v171
    %1178 = vmatpush.msra.mxu0 %v167
    %1179 = vmatpush.msra.mxu0 %v163
    %1180 = vmatpush.msra.mxu0 %v159
    %1181 = vmatpush.msra.mxu0 %v155
    %1182 = vmatpush.msra.mxu0 %v151
    %1183 = vmatpush.msra.mxu0 %v147
    %1184 = vmatpush.msra.mxu0 %v143
    %1185 = vmatpush.msra.mxu0 %v139
    %1186 = vmatpush.msra.mxu0 %v135
    %1187 = vmatpush.msra.mxu0 %v131
    %1188 = vmatpush.msra.mxu0 %v127
    %1189 = vmatpush.msra.mxu0 %v123
    %1190 = vmatpush.msra.mxu0 %v119
    %1191 = vmatmul.f32.gmra.mxu0 %v938
    %v1192 = vpop.f32.mrf.mxu0
    %v1193 = vadd.f32 0.0, %v1192
    %1194 = vdwg.mxu0
    %1195 = vmatpush.msra.mxu0 %v180
    %1196 = vmatpush.msra.mxu0 %v176
    %1197 = vmatpush.msra.mxu0 %v172
    %1198 = vmatpush.msra.mxu0 %v168
    %1199 = vmatpush.msra.mxu0 %v164
    %1200 = vmatpush.msra.mxu0 %v160
    %1201 = vmatpush.msra.mxu0 %v156
    %1202 = vmatpush.msra.mxu0 %v152
    %1203 = vmatpush.msra.mxu0 %v148
    %1204 = vmatpush.msra.mxu0 %v144
    %1205 = vmatpush.msra.mxu0 %v140
    %1206 = vmatpush.msra.mxu0 %v136
    %1207 = vmatpush.msra.mxu0 %v132
    %1208 = vmatpush.msra.mxu0 %v128
    %1209 = vmatpush.msra.mxu0 %v124
    %1210 = vmatpush.msra.mxu0 %v120
    %1211 = vmatmul.f32.gmra.mxu0 %v938
    %v1212 = vpop.f32.mrf.mxu0
    %v1213 = vadd.f32 0.0, %v1212
    %1214 = vdwg.mxu0
    %1215 = vmatpush.msra.mxu0 %v181
    %1216 = vmatpush.msra.mxu0 %v177
    %1217 = vmatpush.msra.mxu0 %v173
    %1218 = vmatpush.msra.mxu0 %v169
    %1219 = vmatpush.msra.mxu0 %v165
    %1220 = vmatpush.msra.mxu0 %v161
    %1221 = vmatpush.msra.mxu0 %v157
    %1222 = vmatpush.msra.mxu0 %v153
    %1223 = vmatpush.msra.mxu0 %v149
    %1224 = vmatpush.msra.mxu0 %v145
    %1225 = vmatpush.msra.mxu0 %v141
    %1226 = vmatpush.msra.mxu0 %v137
    %1227 = vmatpush.msra.mxu0 %v133
    %1228 = vmatpush.msra.mxu0 %v129
    %1229 = vmatpush.msra.mxu0 %v125
    %1230 = vmatpush.msra.mxu0 %v121
    %1231 = vmatmul.f32.gmra.mxu0 %v938
    %v1232 = vpop.f32.mrf.mxu0
    %v1233 = vadd.f32 0.0, %v1232
    %1234 = vdwg.mxu0
    %1235 = vmatpush.msra.mxu0 %v182
    %1236 = vmatpush.msra.mxu0 %v178
    %1237 = vmatpush.msra.mxu0 %v174
    %1238 = vmatpush.msra.mxu0 %v170
    %1239 = vmatpush.msra.mxu0 %v166
    %1240 = vmatpush.msra.mxu0 %v162
    %1241 = vmatpush.msra.mxu0 %v158
    %1242 = vmatpush.msra.mxu0 %v154
    %1243 = vmatpush.msra.mxu0 %v150
    %1244 = vmatpush.msra.mxu0 %v146
    %1245 = vmatpush.msra.mxu0 %v142
    %1246 = vmatpush.msra.mxu0 %v138
    %1247 = vmatpush.msra.mxu0 %v134
    %1248 = vmatpush.msra.mxu0 %v130
    %1249 = vmatpush.msra.mxu0 %v126
    %1250 = vmatpush.msra.mxu0 %v122
    %1251 = vmatmul.f32.gmra.mxu0 %v938
    %v1252 = vpop.f32.mrf.mxu0
    %v1253 = vadd.f32 0.0, %v1252
    %1254 = vdwg.mxu0
    %v1255 = vadd.f32 %v1171, %v1193
    %v1256 = vadd.f32 %v1172, %v1213
    %v1257 = vadd.f32 %v1173, %v1233
    %v1258 = vadd.f32 %v1174, %v1253
    %v1259 = vxor.u32 %v1255, 2147483648
    %v1260 = vxor.u32 %v1256, 2147483648
    %v1261 = vxor.u32 %v1257, 2147483648
    %v1262 = vmul.f32 %v1259, 1.442695
    %v1263 = vpow.pop %v1262
    %v1264 = vmul.f32 %v1260, 1.442695
    %v1265 = vpow.pop %v1264
    %v1266 = vmul.f32 %v1261, 1.442695
    %v1267 = vpow.pop %v1266
    %v1268 = vadd.f32 %v1263, 1.0
    %v1269 = vadd.f32 %v1265, 1.0
    %v1270 = vadd.f32 %v1267, 1.0
    %v1271 = vrcp.pop %v1268
    %v1272 = vmul.f32 %v1268, %v1271
    %v1273 = vsub.f32 1.0, %v1272
    %v1274 = vmul.f32 %v1271, %v1273
    %v1275 = vadd.f32 %v1271, %v1274
    %vm1276 = vweird.f32 %v1268
    %vm1277 = vweird.f32 %v1271
    %vm1278 = vmor %vm1276, %vm1277
    %v1279 = vsel %vm1278, %v1271, %v1275
    %v1280 = vand.u32 2147483647, %v1268
    %vm1281 = vcmp.eq.f32.partialorder %v1280, 8.507059e+37
    %v1282 = vand.u32 %v1268, 2147483648
    %v1283 = vor.u32 1.1754944e-38, %v1282
    %v1284 = vsel %vm1281, %v1283, %v1279
    %v1285 = vmul.f32 1.0, %v1284
    %v1286 = vrcp.pop %v1269
    %v1287 = vmul.f32 %v1269, %v1286
    %v1288 = vsub.f32 1.0, %v1287
    %v1289 = vmul.f32 %v1286, %v1288
    %v1290 = vadd.f32 %v1286, %v1289
    %vm1291 = vweird.f32 %v1269
    %vm1292 = vweird.f32 %v1286
    %vm1293 = vmor %vm1291, %vm1292
    %v1294 = vsel %vm1293, %v1286, %v1290
    %v1295 = vand.u32 2147483647, %v1269
    %vm1296 = vcmp.eq.f32.partialorder %v1295, 8.507059e+37
    %v1297 = vand.u32 %v1269, 2147483648
    %v1298 = vor.u32 1.1754944e-38, %v1297
    %v1299 = vsel %vm1296, %v1298, %v1294
    %v1300 = vmul.f32 1.0, %v1299
    %v1301 = vrcp.pop %v1270
    %v1302 = vmul.f32 %v1270, %v1301
    %v1303 = vsub.f32 1.0, %v1302
    %v1304 = vmul.f32 %v1301, %v1303
    %v1305 = vadd.f32 %v1301, %v1304
    %vm1306 = vweird.f32 %v1270
    %vm1307 = vweird.f32 %v1301
    %vm1308 = vmor %vm1306, %vm1307
    %v1309 = vsel %vm1308, %v1301, %v1305
    %v1310 = vand.u32 2147483647, %v1270
    %vm1311 = vcmp.eq.f32.partialorder %v1310, 8.507059e+37
    %v1312 = vand.u32 %v1270, 2147483648
    %v1313 = vor.u32 1.1754944e-38, %v1312
    %v1314 = vsel %vm1311, %v1313, %v1309
    %v1315 = vmul.f32 1.0, %v1314
    %v1316 = vtanh.pop %v1258
    %v1317 = vmul.f32 %v1300, %v936
    %v1318 = vmul.f32 %v1285, %v1316
    %v1319 = vadd.f32 %v1317, %v1318
    %v1320 = vtanh.pop %v1319
    %v1321 = vmul.f32 %v1315, %v1320
    %1322 = vmatpush.msra.mxu0 %v243
    %1323 = vmatpush.msra.mxu0 %v239
    %1324 = vmatpush.msra.mxu0 %v235
    %1325 = vmatpush.msra.mxu0 %v231
    %1326 = vmatpush.msra.mxu0 %v227
    %1327 = vmatpush.msra.mxu0 %v223
    %1328 = vmatpush.msra.mxu0 %v219
    %1329 = vmatpush.msra.mxu0 %v215
    %1330 = vmatpush.msra.mxu0 %v211
    %1331 = vmatpush.msra.mxu0 %v207
    %1332 = vmatpush.msra.mxu0 %v203
    %1333 = vmatpush.msra.mxu0 %v199
    %1334 = vmatpush.msra.mxu0 %v195
    %1335 = vmatpush.msra.mxu0 %v191
    %1336 = vmatpush.msra.mxu0 %v187
    %1337 = vmatpush.msra.mxu0 %v183
    %1338 = vmatmul.f32.gmra.mxu0 %v1321
    %v1339 = vpop.f32.mrf.mxu0
    %v1340 = vadd.f32 0.0, %v1339
    %1341 = vdwg.mxu0
    %1342 = vmatpush.msra.mxu0 %v244
    %1343 = vmatpush.msra.mxu0 %v240
    %1344 = vmatpush.msra.mxu0 %v236
    %1345 = vmatpush.msra.mxu0 %v232
    %1346 = vmatpush.msra.mxu0 %v228
    %1347 = vmatpush.msra.mxu0 %v224
    %1348 = vmatpush.msra.mxu0 %v220
    %1349 = vmatpush.msra.mxu0 %v216
    %1350 = vmatpush.msra.mxu0 %v212
    %1351 = vmatpush.msra.mxu0 %v208
    %1352 = vmatpush.msra.mxu0 %v204
    %1353 = vmatpush.msra.mxu0 %v200
    %1354 = vmatpush.msra.mxu0 %v196
    %1355 = vmatpush.msra.mxu0 %v192
    %1356 = vmatpush.msra.mxu0 %v188
    %1357 = vmatpush.msra.mxu0 %v184
    %1358 = vmatmul.f32.gmra.mxu0 %v1321
    %v1359 = vpop.f32.mrf.mxu0
    %v1360 = vadd.f32 0.0, %v1359
    %1361 = vdwg.mxu0
    %1362 = vmatpush.msra.mxu0 %v245
    %1363 = vmatpush.msra.mxu0 %v241
    %1364 = vmatpush.msra.mxu0 %v237
    %1365 = vmatpush.msra.mxu0 %v233
    %1366 = vmatpush.msra.mxu0 %v229
    %1367 = vmatpush.msra.mxu0 %v225
    %1368 = vmatpush.msra.mxu0 %v221
    %1369 = vmatpush.msra.mxu0 %v217
    %1370 = vmatpush.msra.mxu0 %v213
    %1371 = vmatpush.msra.mxu0 %v209
    %1372 = vmatpush.msra.mxu0 %v205
    %1373 = vmatpush.msra.mxu0 %v201
    %1374 = vmatpush.msra.mxu0 %v197
    %1375 = vmatpush.msra.mxu0 %v193
    %1376 = vmatpush.msra.mxu0 %v189
    %1377 = vmatpush.msra.mxu0 %v185
    %1378 = vmatmul.f32.gmra.mxu0 %v1321
    %v1379 = vpop.f32.mrf.mxu0
    %v1380 = vadd.f32 0.0, %v1379
    %1381 = vdwg.mxu0
    %1382 = vmatpush.msra.mxu0 %v246
    %1383 = vmatpush.msra.mxu0 %v242
    %1384 = vmatpush.msra.mxu0 %v238
    %1385 = vmatpush.msra.mxu0 %v234
    %1386 = vmatpush.msra.mxu0 %v230
    %1387 = vmatpush.msra.mxu0 %v226
    %1388 = vmatpush.msra.mxu0 %v222
    %1389 = vmatpush.msra.mxu0 %v218
    %1390 = vmatpush.msra.mxu0 %v214
    %1391 = vmatpush.msra.mxu0 %v210
    %1392 = vmatpush.msra.mxu0 %v206
    %1393 = vmatpush.msra.mxu0 %v202
    %1394 = vmatpush.msra.mxu0 %v198
    %1395 = vmatpush.msra.mxu0 %v194
    %1396 = vmatpush.msra.mxu0 %v190
    %1397 = vmatpush.msra.mxu0 %v186
    %1398 = vmatmul.f32.gmra.mxu0 %v1321
    %v1399 = vpop.f32.mrf.mxu0
    %v1400 = vadd.f32 0.0, %v1399
    %1401 = vdwg.mxu0
    %v1402 = vadd.f32 %v1166, %v1340
    %v1403 = vadd.f32 %v1167, %v1360
    %v1404 = vadd.f32 %v1168, %v1380
    %v1405 = vadd.f32 %v1169, %v1400
    %v1406 = vxor.u32 %v1402, 2147483648
    %v1407 = vxor.u32 %v1403, 2147483648
    %v1408 = vxor.u32 %v1404, 2147483648
    %v1409 = vmul.f32 %v1406, 1.442695
    %v1410 = vpow.pop %v1409
    %v1411 = vmul.f32 %v1407, 1.442695
    %v1412 = vpow.pop %v1411
    %v1413 = vmul.f32 %v1408, 1.442695
    %v1414 = vpow.pop %v1413
    %v1415 = vadd.f32 %v1410, 1.0
    %v1416 = vadd.f32 %v1412, 1.0
    %v1417 = vadd.f32 %v1414, 1.0
    %v1418 = vrcp.pop %v1415
    %v1419 = vmul.f32 %v1415, %v1418
    %v1420 = vsub.f32 1.0, %v1419
    %v1421 = vmul.f32 %v1418, %v1420
    %v1422 = vadd.f32 %v1418, %v1421
    %vm1423 = vweird.f32 %v1415
    %vm1424 = vweird.f32 %v1418
    %vm1425 = vmor %vm1423, %vm1424
    %v1426 = vsel %vm1425, %v1418, %v1422
    %v1427 = vand.u32 2147483647, %v1415
    %vm1428 = vcmp.eq.f32.partialorder %v1427, 8.507059e+37
    %v1429 = vand.u32 %v1415, 2147483648
    %v1430 = vor.u32 1.1754944e-38, %v1429
    %v1431 = vsel %vm1428, %v1430, %v1426
    %v1432 = vmul.f32 1.0, %v1431
    %v1433 = vrcp.pop %v1416
    %v1434 = vmul.f32 %v1416, %v1433
    %v1435 = vsub.f32 1.0, %v1434
    %v1436 = vmul.f32 %v1433, %v1435
    %v1437 = vadd.f32 %v1433, %v1436
    %vm1438 = vweird.f32 %v1416
    %vm1439 = vweird.f32 %v1433
    %vm1440 = vmor %vm1438, %vm1439
    %v1441 = vsel %vm1440, %v1433, %v1437
    %v1442 = vand.u32 2147483647, %v1416
    %vm1443 = vcmp.eq.f32.partialorder %v1442, 8.507059e+37
    %v1444 = vand.u32 %v1416, 2147483648
    %v1445 = vor.u32 1.1754944e-38, %v1444
    %v1446 = vsel %vm1443, %v1445, %v1441
    %v1447 = vmul.f32 1.0, %v1446
    %v1448 = vrcp.pop %v1417
    %v1449 = vmul.f32 %v1417, %v1448
    %v1450 = vsub.f32 1.0, %v1449
    %v1451 = vmul.f32 %v1448, %v1450
    %v1452 = vadd.f32 %v1448, %v1451
    %vm1453 = vweird.f32 %v1417
    %vm1454 = vweird.f32 %v1448
    %vm1455 = vmor %vm1453, %vm1454
    %v1456 = vsel %vm1455, %v1448, %v1452
    %v1457 = vand.u32 2147483647, %v1417
    %vm1458 = vcmp.eq.f32.partialorder %v1457, 8.507059e+37
    %v1459 = vand.u32 %v1417, 2147483648
    %v1460 = vor.u32 1.1754944e-38, %v1459
    %v1461 = vsel %vm1458, %v1460, %v1456
    %v1462 = vmul.f32 1.0, %v1461
    %v1463 = vtanh.pop %v1405
    %v1464 = vmul.f32 %v1447, %v1083
    %v1465 = vmul.f32 %v1432, %v1463
    %v1466 = vadd.f32 %v1464, %v1465
    %v1467 = vtanh.pop %v1466
    %v1468 = vmul.f32 %v1462, %v1467
    %1469 = vmatpush.msra.mxu0 %v307
    %1470 = vmatpush.msra.mxu0 %v303
    %1471 = vmatpush.msra.mxu0 %v299
    %1472 = vmatpush.msra.mxu0 %v295
    %1473 = vmatpush.msra.mxu0 %v291
    %1474 = vmatpush.msra.mxu0 %v287
    %1475 = vmatpush.msra.mxu0 %v283
    %1476 = vmatpush.msra.mxu0 %v279
    %1477 = vmatpush.msra.mxu0 %v275
    %1478 = vmatpush.msra.mxu0 %v271
    %1479 = vmatpush.msra.mxu0 %v267
    %1480 = vmatpush.msra.mxu0 %v263
    %1481 = vmatpush.msra.mxu0 %v259
    %1482 = vmatpush.msra.mxu0 %v255
    %1483 = vmatpush.msra.mxu0 %v251
    %1484 = vmatpush.msra.mxu0 %v247
    %1485 = vmatmul.f32.gmra.mxu0 %v1468
    %v1486 = vpop.f32.mrf.mxu0
    %v1487 = vadd.f32 0.0, %v1486
    %1488 = vdwg.mxu0
    %1489 = vmatpush.msra.mxu0 %v308
    %1490 = vmatpush.msra.mxu0 %v304
    %1491 = vmatpush.msra.mxu0 %v300
    %1492 = vmatpush.msra.mxu0 %v296
    %1493 = vmatpush.msra.mxu0 %v292
    %1494 = vmatpush.msra.mxu0 %v288
    %1495 = vmatpush.msra.mxu0 %v284
    %1496 = vmatpush.msra.mxu0 %v280
    %1497 = vmatpush.msra.mxu0 %v276
    %1498 = vmatpush.msra.mxu0 %v272
    %1499 = vmatpush.msra.mxu0 %v268
    %1500 = vmatpush.msra.mxu0 %v264
    %1501 = vmatpush.msra.mxu0 %v260
    %1502 = vmatpush.msra.mxu0 %v256
    %1503 = vmatpush.msra.mxu0 %v252
    %1504 = vmatpush.msra.mxu0 %v248
    %1505 = vmatmul.f32.gmra.mxu0 %v1468
    %v1506 = vpop.f32.mrf.mxu0
    %v1507 = vadd.f32 0.0, %v1506
    %1508 = vdwg.mxu0
    %1509 = vmatpush.msra.mxu0 %v309
    %1510 = vmatpush.msra.mxu0 %v305
    %1511 = vmatpush.msra.mxu0 %v301
    %1512 = vmatpush.msra.mxu0 %v297
    %1513 = vmatpush.msra.mxu0 %v293
    %1514 = vmatpush.msra.mxu0 %v289
    %1515 = vmatpush.msra.mxu0 %v285
    %1516 = vmatpush.msra.mxu0 %v281
    %1517 = vmatpush.msra.mxu0 %v277
    %1518 = vmatpush.msra.mxu0 %v273
    %1519 = vmatpush.msra.mxu0 %v269
    %1520 = vmatpush.msra.mxu0 %v265
    %1521 = vmatpush.msra.mxu0 %v261
    %1522 = vmatpush.msra.mxu0 %v257
    %1523 = vmatpush.msra.mxu0 %v253
    %1524 = vmatpush.msra.mxu0 %v249
    %1525 = vmatmul.f32.gmra.mxu0 %v1468
    %v1526 = vpop.f32.mrf.mxu0
    %v1527 = vadd.f32 0.0, %v1526
    %1528 = vdwg.mxu0
    %1529 = vmatpush.msra.mxu0 %v310
    %1530 = vmatpush.msra.mxu0 %v306
    %1531 = vmatpush.msra.mxu0 %v302
    %1532 = vmatpush.msra.mxu0 %v298
    %1533 = vmatpush.msra.mxu0 %v294
    %1534 = vmatpush.msra.mxu0 %v290
    %1535 = vmatpush.msra.mxu0 %v286
    %1536 = vmatpush.msra.mxu0 %v282
    %1537 = vmatpush.msra.mxu0 %v278
    %1538 = vmatpush.msra.mxu0 %v274
    %1539 = vmatpush.msra.mxu0 %v270
    %1540 = vmatpush.msra.mxu0 %v266
    %1541 = vmatpush.msra.mxu0 %v262
    %1542 = vmatpush.msra.mxu0 %v258
    %1543 = vmatpush.msra.mxu0 %v254
    %1544 = vmatpush.msra.mxu0 %v250
    %1545 = vmatmul.f32.gmra.mxu0 %v1468
    %v1546 = vpop.f32.mrf.mxu0
    %v1547 = vadd.f32 0.0, %v1546
    %1548 = vdwg.mxu0
    %v1549 = vadd.f32 %v313, %v1487
    %v1550 = vadd.f32 %v314, %v1507
    %v1551 = vadd.f32 %v315, %v1527
    %v1552 = vadd.f32 %v316, %v1547
    %s1553 = scalar_lea.vmem [#allocation2], 96
    %v1554 = vld [vmem:[%s1553] sm:$0xff]
    %v1555 = vld [vmem:[%s1553 + $0x8] sm:$0xff]
    %v1556 = vld [vmem:[%s1553 + $0x10] sm:$0xff]
    %v1557 = vld [vmem:[%s1553 + $0x18] sm:$0xff]
    %1558 = vmatpush.msra.mxu0 %v179
    %1559 = vmatpush.msra.mxu0 %v175
    %1560 = vmatpush.msra.mxu0 %v171
    %1561 = vmatpush.msra.mxu0 %v167
    %1562 = vmatpush.msra.mxu0 %v163
    %1563 = vmatpush.msra.mxu0 %v159
    %1564 = vmatpush.msra.mxu0 %v155
    %1565 = vmatpush.msra.mxu0 %v151
    %1566 = vmatpush.msra.mxu0 %v147
    %1567 = vmatpush.msra.mxu0 %v143
    %1568 = vmatpush.msra.mxu0 %v139
    %1569 = vmatpush.msra.mxu0 %v135
    %1570 = vmatpush.msra.mxu0 %v131
    %1571 = vmatpush.msra.mxu0 %v127
    %1572 = vmatpush.msra.mxu0 %v123
    %1573 = vmatpush.msra.mxu0 %v119
    %1574 = vmatmul.f32.gmra.mxu0 %v1321
    %v1575 = vpop.f32.mrf.mxu0
    %v1576 = vadd.f32 0.0, %v1575
    %1577 = vdwg.mxu0
    %1578 = vmatpush.msra.mxu0 %v180
    %1579 = vmatpush.msra.mxu0 %v176
    %1580 = vmatpush.msra.mxu0 %v172
    %1581 = vmatpush.msra.mxu0 %v168
    %1582 = vmatpush.msra.mxu0 %v164
    %1583 = vmatpush.msra.mxu0 %v160
    %1584 = vmatpush.msra.mxu0 %v156
    %1585 = vmatpush.msra.mxu0 %v152
    %1586 = vmatpush.msra.mxu0 %v148
    %1587 = vmatpush.msra.mxu0 %v144
    %1588 = vmatpush.msra.mxu0 %v140
    %1589 = vmatpush.msra.mxu0 %v136
    %1590 = vmatpush.msra.mxu0 %v132
    %1591 = vmatpush.msra.mxu0 %v128
    %1592 = vmatpush.msra.mxu0 %v124
    %1593 = vmatpush.msra.mxu0 %v120
    %1594 = vmatmul.f32.gmra.mxu0 %v1321
    %v1595 = vpop.f32.mrf.mxu0
    %v1596 = vadd.f32 0.0, %v1595
    %1597 = vdwg.mxu0
    %1598 = vmatpush.msra.mxu0 %v181
    %1599 = vmatpush.msra.mxu0 %v177
    %1600 = vmatpush.msra.mxu0 %v173
    %1601 = vmatpush.msra.mxu0 %v169
    %1602 = vmatpush.msra.mxu0 %v165
    %1603 = vmatpush.msra.mxu0 %v161
    %1604 = vmatpush.msra.mxu0 %v157
    %1605 = vmatpush.msra.mxu0 %v153
    %1606 = vmatpush.msra.mxu0 %v149
    %1607 = vmatpush.msra.mxu0 %v145
    %1608 = vmatpush.msra.mxu0 %v141
    %1609 = vmatpush.msra.mxu0 %v137
    %1610 = vmatpush.msra.mxu0 %v133
    %1611 = vmatpush.msra.mxu0 %v129
    %1612 = vmatpush.msra.mxu0 %v125
    %1613 = vmatpush.msra.mxu0 %v121
    %1614 = vmatmul.f32.gmra.mxu0 %v1321
    %v1615 = vpop.f32.mrf.mxu0
    %v1616 = vadd.f32 0.0, %v1615
    %1617 = vdwg.mxu0
    %1618 = vmatpush.msra.mxu0 %v182
    %1619 = vmatpush.msra.mxu0 %v178
    %1620 = vmatpush.msra.mxu0 %v174
    %1621 = vmatpush.msra.mxu0 %v170
    %1622 = vmatpush.msra.mxu0 %v166
    %1623 = vmatpush.msra.mxu0 %v162
    %1624 = vmatpush.msra.mxu0 %v158
    %1625 = vmatpush.msra.mxu0 %v154
    %1626 = vmatpush.msra.mxu0 %v150
    %1627 = vmatpush.msra.mxu0 %v146
    %1628 = vmatpush.msra.mxu0 %v142
    %1629 = vmatpush.msra.mxu0 %v138
    %1630 = vmatpush.msra.mxu0 %v134
    %1631 = vmatpush.msra.mxu0 %v130
    %1632 = vmatpush.msra.mxu0 %v126
    %1633 = vmatpush.msra.mxu0 %v122
    %1634 = vmatmul.f32.gmra.mxu0 %v1321
    %v1635 = vpop.f32.mrf.mxu0
    %v1636 = vadd.f32 0.0, %v1635
    %1637 = vdwg.mxu0
    %v1638 = vadd.f32 %v1554, %v1576
    %v1639 = vadd.f32 %v1555, %v1596
    %v1640 = vadd.f32 %v1556, %v1616
    %v1641 = vadd.f32 %v1557, %v1636
    %v1642 = vxor.u32 %v1638, 2147483648
    %v1643 = vxor.u32 %v1639, 2147483648
    %v1644 = vxor.u32 %v1640, 2147483648
    %v1645 = vmul.f32 %v1642, 1.442695
    %v1646 = vpow.pop %v1645
    %v1647 = vmul.f32 %v1643, 1.442695
    %v1648 = vpow.pop %v1647
    %v1649 = vmul.f32 %v1644, 1.442695
    %v1650 = vpow.pop %v1649
    %v1651 = vadd.f32 %v1646, 1.0
    %v1652 = vadd.f32 %v1648, 1.0
    %v1653 = vadd.f32 %v1650, 1.0
    %v1654 = vrcp.pop %v1651
    %v1655 = vmul.f32 %v1651, %v1654
    %v1656 = vsub.f32 1.0, %v1655
    %v1657 = vmul.f32 %v1654, %v1656
    %v1658 = vadd.f32 %v1654, %v1657
    %vm1659 = vweird.f32 %v1651
    %vm1660 = vweird.f32 %v1654
    %vm1661 = vmor %vm1659, %vm1660
    %v1662 = vsel %vm1661, %v1654, %v1658
    %v1663 = vand.u32 2147483647, %v1651
    %vm1664 = vcmp.eq.f32.partialorder %v1663, 8.507059e+37
    %v1665 = vand.u32 %v1651, 2147483648
    %v1666 = vor.u32 1.1754944e-38, %v1665
    %v1667 = vsel %vm1664, %v1666, %v1662
    %v1668 = vmul.f32 1.0, %v1667
    %v1669 = vrcp.pop %v1652
    %v1670 = vmul.f32 %v1652, %v1669
    %v1671 = vsub.f32 1.0, %v1670
    %v1672 = vmul.f32 %v1669, %v1671
    %v1673 = vadd.f32 %v1669, %v1672
    %vm1674 = vweird.f32 %v1652
    %vm1675 = vweird.f32 %v1669
    %vm1676 = vmor %vm1674, %vm1675
    %v1677 = vsel %vm1676, %v1669, %v1673
    %v1678 = vand.u32 2147483647, %v1652
    %vm1679 = vcmp.eq.f32.partialorder %v1678, 8.507059e+37
    %v1680 = vand.u32 %v1652, 2147483648
    %v1681 = vor.u32 1.1754944e-38, %v1680
    %v1682 = vsel %vm1679, %v1681, %v1677
    %v1683 = vmul.f32 1.0, %v1682
    %v1684 = vrcp.pop %v1653
    %v1685 = vmul.f32 %v1653, %v1684
    %v1686 = vsub.f32 1.0, %v1685
    %v1687 = vmul.f32 %v1684, %v1686
    %v1688 = vadd.f32 %v1684, %v1687
    %vm1689 = vweird.f32 %v1653
    %vm1690 = vweird.f32 %v1684
    %vm1691 = vmor %vm1689, %vm1690
    %v1692 = vsel %vm1691, %v1684, %v1688
    %v1693 = vand.u32 2147483647, %v1653
    %vm1694 = vcmp.eq.f32.partialorder %v1693, 8.507059e+37
    %v1695 = vand.u32 %v1653, 2147483648
    %v1696 = vor.u32 1.1754944e-38, %v1695
    %v1697 = vsel %vm1694, %v1696, %v1692
    %v1698 = vmul.f32 1.0, %v1697
    %v1699 = vtanh.pop %v1641
    %v1700 = vmul.f32 %v1683, %v1319
    %v1701 = vmul.f32 %v1668, %v1699
    %v1702 = vadd.f32 %v1700, %v1701
    %v1703 = vtanh.pop %v1702
    %v1704 = vmul.f32 %v1698, %v1703
    %1705 = vmatpush.msra.mxu0 %v243
    %1706 = vmatpush.msra.mxu0 %v239
    %1707 = vmatpush.msra.mxu0 %v235
    %1708 = vmatpush.msra.mxu0 %v231
    %1709 = vmatpush.msra.mxu0 %v227
    %1710 = vmatpush.msra.mxu0 %v223
    %1711 = vmatpush.msra.mxu0 %v219
    %1712 = vmatpush.msra.mxu0 %v215
    %1713 = vmatpush.msra.mxu0 %v211
    %1714 = vmatpush.msra.mxu0 %v207
    %1715 = vmatpush.msra.mxu0 %v203
    %1716 = vmatpush.msra.mxu0 %v199
    %1717 = vmatpush.msra.mxu0 %v195
    %1718 = vmatpush.msra.mxu0 %v191
    %1719 = vmatpush.msra.mxu0 %v187
    %1720 = vmatpush.msra.mxu0 %v183
    %1721 = vmatmul.f32.gmra.mxu0 %v1704
    %v1722 = vpop.f32.mrf.mxu0
    %v1723 = vadd.f32 0.0, %v1722
    %1724 = vdwg.mxu0
    %1725 = vmatpush.msra.mxu0 %v244
    %1726 = vmatpush.msra.mxu0 %v240
    %1727 = vmatpush.msra.mxu0 %v236
    %1728 = vmatpush.msra.mxu0 %v232
    %1729 = vmatpush.msra.mxu0 %v228
    %1730 = vmatpush.msra.mxu0 %v224
    %1731 = vmatpush.msra.mxu0 %v220
    %1732 = vmatpush.msra.mxu0 %v216
    %1733 = vmatpush.msra.mxu0 %v212
    %1734 = vmatpush.msra.mxu0 %v208
    %1735 = vmatpush.msra.mxu0 %v204
    %1736 = vmatpush.msra.mxu0 %v200
    %1737 = vmatpush.msra.mxu0 %v196
    %1738 = vmatpush.msra.mxu0 %v192
    %1739 = vmatpush.msra.mxu0 %v188
    %1740 = vmatpush.msra.mxu0 %v184
    %1741 = vmatmul.f32.gmra.mxu0 %v1704
    %v1742 = vpop.f32.mrf.mxu0
    %v1743 = vadd.f32 0.0, %v1742
    %1744 = vdwg.mxu0
    %1745 = vmatpush.msra.mxu0 %v245
    %1746 = vmatpush.msra.mxu0 %v241
    %1747 = vmatpush.msra.mxu0 %v237
    %1748 = vmatpush.msra.mxu0 %v233
    %1749 = vmatpush.msra.mxu0 %v229
    %1750 = vmatpush.msra.mxu0 %v225
    %1751 = vmatpush.msra.mxu0 %v221
    %1752 = vmatpush.msra.mxu0 %v217
    %1753 = vmatpush.msra.mxu0 %v213
    %1754 = vmatpush.msra.mxu0 %v209
    %1755 = vmatpush.msra.mxu0 %v205
    %1756 = vmatpush.msra.mxu0 %v201
    %1757 = vmatpush.msra.mxu0 %v197
    %1758 = vmatpush.msra.mxu0 %v193
    %1759 = vmatpush.msra.mxu0 %v189
    %1760 = vmatpush.msra.mxu0 %v185
    %1761 = vmatmul.f32.gmra.mxu0 %v1704
    %v1762 = vpop.f32.mrf.mxu0
    %v1763 = vadd.f32 0.0, %v1762
    %1764 = vdwg.mxu0
    %1765 = vmatpush.msra.mxu0 %v246
    %1766 = vmatpush.msra.mxu0 %v242
    %1767 = vmatpush.msra.mxu0 %v238
    %1768 = vmatpush.msra.mxu0 %v234
    %1769 = vmatpush.msra.mxu0 %v230
    %1770 = vmatpush.msra.mxu0 %v226
    %1771 = vmatpush.msra.mxu0 %v222
    %1772 = vmatpush.msra.mxu0 %v218
    %1773 = vmatpush.msra.mxu0 %v214
    %1774 = vmatpush.msra.mxu0 %v210
    %1775 = vmatpush.msra.mxu0 %v206
    %1776 = vmatpush.msra.mxu0 %v202
    %1777 = vmatpush.msra.mxu0 %v198
    %1778 = vmatpush.msra.mxu0 %v194
    %1779 = vmatpush.msra.mxu0 %v190
    %1780 = vmatpush.msra.mxu0 %v186
    %1781 = vmatmul.f32.gmra.mxu0 %v1704
    %v1782 = vpop.f32.mrf.mxu0
    %v1783 = vadd.f32 0.0, %v1782
    %1784 = vdwg.mxu0
    %v1785 = vadd.f32 %v1549, %v1723
    %v1786 = vadd.f32 %v1550, %v1743
    %v1787 = vadd.f32 %v1551, %v1763
    %v1788 = vadd.f32 %v1552, %v1783
    %v1789 = vxor.u32 %v1785, 2147483648
    %v1790 = vxor.u32 %v1786, 2147483648
    %v1791 = vxor.u32 %v1787, 2147483648
    %v1792 = vmul.f32 %v1789, 1.442695
    %v1793 = vpow.pop %v1792
    %v1794 = vmul.f32 %v1790, 1.442695
    %v1795 = vpow.pop %v1794
    %v1796 = vmul.f32 %v1791, 1.442695
    %v1797 = vpow.pop %v1796
    %v1798 = vadd.f32 %v1793, 1.0
    %v1799 = vadd.f32 %v1795, 1.0
    %v1800 = vadd.f32 %v1797, 1.0
    %v1801 = vrcp.pop %v1798
    %v1802 = vmul.f32 %v1798, %v1801
    %v1803 = vsub.f32 1.0, %v1802
    %v1804 = vmul.f32 %v1801, %v1803
    %v1805 = vadd.f32 %v1801, %v1804
    %vm1806 = vweird.f32 %v1798
    %vm1807 = vweird.f32 %v1801
    %vm1808 = vmor %vm1806, %vm1807
    %v1809 = vsel %vm1808, %v1801, %v1805
    %v1810 = vand.u32 2147483647, %v1798
    %vm1811 = vcmp.eq.f32.partialorder %v1810, 8.507059e+37
    %v1812 = vand.u32 %v1798, 2147483648
    %v1813 = vor.u32 1.1754944e-38, %v1812
    %v1814 = vsel %vm1811, %v1813, %v1809
    %v1815 = vmul.f32 1.0, %v1814
    %v1816 = vrcp.pop %v1799
    %v1817 = vmul.f32 %v1799, %v1816
    %v1818 = vsub.f32 1.0, %v1817
    %v1819 = vmul.f32 %v1816, %v1818
    %v1820 = vadd.f32 %v1816, %v1819
    %vm1821 = vweird.f32 %v1799
    %vm1822 = vweird.f32 %v1816
    %vm1823 = vmor %vm1821, %vm1822
    %v1824 = vsel %vm1823, %v1816, %v1820
    %v1825 = vand.u32 2147483647, %v1799
    %vm1826 = vcmp.eq.f32.partialorder %v1825, 8.507059e+37
    %v1827 = vand.u32 %v1799, 2147483648
    %v1828 = vor.u32 1.1754944e-38, %v1827
    %v1829 = vsel %vm1826, %v1828, %v1824
    %v1830 = vmul.f32 1.0, %v1829
    %v1831 = vrcp.pop %v1800
    %v1832 = vmul.f32 %v1800, %v1831
    %v1833 = vsub.f32 1.0, %v1832
    %v1834 = vmul.f32 %v1831, %v1833
    %v1835 = vadd.f32 %v1831, %v1834
    %vm1836 = vweird.f32 %v1800
    %vm1837 = vweird.f32 %v1831
    %vm1838 = vmor %vm1836, %vm1837
    %v1839 = vsel %vm1838, %v1831, %v1835
    %v1840 = vand.u32 2147483647, %v1800
    %vm1841 = vcmp.eq.f32.partialorder %v1840, 8.507059e+37
    %v1842 = vand.u32 %v1800, 2147483648
    %v1843 = vor.u32 1.1754944e-38, %v1842
    %v1844 = vsel %vm1841, %v1843, %v1839
    %v1845 = vmul.f32 1.0, %v1844
    %v1846 = vtanh.pop %v1788
    %v1847 = vmul.f32 %v1830, %v1466
    %v1848 = vmul.f32 %v1815, %v1846
    %v1849 = vadd.f32 %v1847, %v1848
    %v1850 = vtanh.pop %v1849
    %v1851 = vmul.f32 %v1845, %v1850
    %1852 = vmatpush.msra.mxu0 %v307
    %1853 = vmatpush.msra.mxu0 %v303
    %1854 = vmatpush.msra.mxu0 %v299
    %1855 = vmatpush.msra.mxu0 %v295
    %1856 = vmatpush.msra.mxu0 %v291
    %1857 = vmatpush.msra.mxu0 %v287
    %1858 = vmatpush.msra.mxu0 %v283
    %1859 = vmatpush.msra.mxu0 %v279
    %1860 = vmatpush.msra.mxu0 %v275
    %1861 = vmatpush.msra.mxu0 %v271
    %1862 = vmatpush.msra.mxu0 %v267
    %1863 = vmatpush.msra.mxu0 %v263
    %1864 = vmatpush.msra.mxu0 %v259
    %1865 = vmatpush.msra.mxu0 %v255
    %1866 = vmatpush.msra.mxu0 %v251
    %1867 = vmatpush.msra.mxu0 %v247
    %1868 = vmatmul.f32.gmra.mxu0 %v1851
    %v1869 = vpop.f32.mrf.mxu0
    %v1870 = vadd.f32 0.0, %v1869
    %1871 = vdwg.mxu0
    %1872 = vmatpush.msra.mxu0 %v308
    %1873 = vmatpush.msra.mxu0 %v304
    %1874 = vmatpush.msra.mxu0 %v300
    %1875 = vmatpush.msra.mxu0 %v296
    %1876 = vmatpush.msra.mxu0 %v292
    %1877 = vmatpush.msra.mxu0 %v288
    %1878 = vmatpush.msra.mxu0 %v284
    %1879 = vmatpush.msra.mxu0 %v280
    %1880 = vmatpush.msra.mxu0 %v276
    %1881 = vmatpush.msra.mxu0 %v272
    %1882 = vmatpush.msra.mxu0 %v268
    %1883 = vmatpush.msra.mxu0 %v264
    %1884 = vmatpush.msra.mxu0 %v260
    %1885 = vmatpush.msra.mxu0 %v256
    %1886 = vmatpush.msra.mxu0 %v252
    %1887 = vmatpush.msra.mxu0 %v248
    %1888 = vmatmul.f32.gmra.mxu0 %v1851
    %v1889 = vpop.f32.mrf.mxu0
    %v1890 = vadd.f32 0.0, %v1889
    %1891 = vdwg.mxu0
    %1892 = vmatpush.msra.mxu0 %v309
    %1893 = vmatpush.msra.mxu0 %v305
    %1894 = vmatpush.msra.mxu0 %v301
    %1895 = vmatpush.msra.mxu0 %v297
    %1896 = vmatpush.msra.mxu0 %v293
    %1897 = vmatpush.msra.mxu0 %v289
    %1898 = vmatpush.msra.mxu0 %v285
    %1899 = vmatpush.msra.mxu0 %v281
    %1900 = vmatpush.msra.mxu0 %v277
    %1901 = vmatpush.msra.mxu0 %v273
    %1902 = vmatpush.msra.mxu0 %v269
    %1903 = vmatpush.msra.mxu0 %v265
    %1904 = vmatpush.msra.mxu0 %v261
    %1905 = vmatpush.msra.mxu0 %v257
    %1906 = vmatpush.msra.mxu0 %v253
    %1907 = vmatpush.msra.mxu0 %v249
    %1908 = vmatmul.f32.gmra.mxu0 %v1851
    %v1909 = vpop.f32.mrf.mxu0
    %v1910 = vadd.f32 0.0, %v1909
    %1911 = vdwg.mxu0
    %1912 = vmatpush.msra.mxu0 %v310
    %1913 = vmatpush.msra.mxu0 %v306
    %1914 = vmatpush.msra.mxu0 %v302
    %1915 = vmatpush.msra.mxu0 %v298
    %1916 = vmatpush.msra.mxu0 %v294
    %1917 = vmatpush.msra.mxu0 %v290
    %1918 = vmatpush.msra.mxu0 %v286
    %1919 = vmatpush.msra.mxu0 %v282
    %1920 = vmatpush.msra.mxu0 %v278
    %1921 = vmatpush.msra.mxu0 %v274
    %1922 = vmatpush.msra.mxu0 %v270
    %1923 = vmatpush.msra.mxu0 %v266
    %1924 = vmatpush.msra.mxu0 %v262
    %1925 = vmatpush.msra.mxu0 %v258
    %1926 = vmatpush.msra.mxu0 %v254
    %1927 = vmatpush.msra.mxu0 %v250
    %1928 = vmatmul.f32.gmra.mxu0 %v1851
    %v1929 = vpop.f32.mrf.mxu0
    %v1930 = vadd.f32 0.0, %v1929
    %1931 = vdwg.mxu0
    %v1932 = vadd.f32 %v313, %v1870
    %v1933 = vadd.f32 %v314, %v1890
    %v1934 = vadd.f32 %v315, %v1910
    %v1935 = vadd.f32 %v316, %v1930
    %s1936 = scalar_lea.vmem [#allocation2], 128
    %v1937 = vld [vmem:[%s1936] sm:$0xff]
    %v1938 = vld [vmem:[%s1936 + $0x8] sm:$0xff]
    %v1939 = vld [vmem:[%s1936 + $0x10] sm:$0xff]
    %v1940 = vld [vmem:[%s1936 + $0x18] sm:$0xff]
    %1941 = vmatpush.msra.mxu0 %v179
    %1942 = vmatpush.msra.mxu0 %v175
    %1943 = vmatpush.msra.mxu0 %v171
    %1944 = vmatpush.msra.mxu0 %v167
    %1945 = vmatpush.msra.mxu0 %v163
    %1946 = vmatpush.msra.mxu0 %v159
    %1947 = vmatpush.msra.mxu0 %v155
    %1948 = vmatpush.msra.mxu0 %v151
    %1949 = vmatpush.msra.mxu0 %v147
    %1950 = vmatpush.msra.mxu0 %v143
    %1951 = vmatpush.msra.mxu0 %v139
    %1952 = vmatpush.msra.mxu0 %v135
    %1953 = vmatpush.msra.mxu0 %v131
    %1954 = vmatpush.msra.mxu0 %v127
    %1955 = vmatpush.msra.mxu0 %v123
    %1956 = vmatpush.msra.mxu0 %v119
    %1957 = vmatmul.f32.gmra.mxu0 %v1704
    %v1958 = vpop.f32.mrf.mxu0
    %v1959 = vadd.f32 0.0, %v1958
    %1960 = vdwg.mxu0
    %1961 = vmatpush.msra.mxu0 %v180
    %1962 = vmatpush.msra.mxu0 %v176
    %1963 = vmatpush.msra.mxu0 %v172
    %1964 = vmatpush.msra.mxu0 %v168
    %1965 = vmatpush.msra.mxu0 %v164
    %1966 = vmatpush.msra.mxu0 %v160
    %1967 = vmatpush.msra.mxu0 %v156
    %1968 = vmatpush.msra.mxu0 %v152
    %1969 = vmatpush.msra.mxu0 %v148
    %1970 = vmatpush.msra.mxu0 %v144
    %1971 = vmatpush.msra.mxu0 %v140
    %1972 = vmatpush.msra.mxu0 %v136
    %1973 = vmatpush.msra.mxu0 %v132
    %1974 = vmatpush.msra.mxu0 %v128
    %1975 = vmatpush.msra.mxu0 %v124
    %1976 = vmatpush.msra.mxu0 %v120
    %1977 = vmatmul.f32.gmra.mxu0 %v1704
    %v1978 = vpop.f32.mrf.mxu0
    %v1979 = vadd.f32 0.0, %v1978
    %1980 = vdwg.mxu0
    %1981 = vmatpush.msra.mxu0 %v181
    %1982 = vmatpush.msra.mxu0 %v177
    %1983 = vmatpush.msra.mxu0 %v173
    %1984 = vmatpush.msra.mxu0 %v169
    %1985 = vmatpush.msra.mxu0 %v165
    %1986 = vmatpush.msra.mxu0 %v161
    %1987 = vmatpush.msra.mxu0 %v157
    %1988 = vmatpush.msra.mxu0 %v153
    %1989 = vmatpush.msra.mxu0 %v149
    %1990 = vmatpush.msra.mxu0 %v145
    %1991 = vmatpush.msra.mxu0 %v141
    %1992 = vmatpush.msra.mxu0 %v137
    %1993 = vmatpush.msra.mxu0 %v133
    %1994 = vmatpush.msra.mxu0 %v129
    %1995 = vmatpush.msra.mxu0 %v125
    %1996 = vmatpush.msra.mxu0 %v121
    %1997 = vmatmul.f32.gmra.mxu0 %v1704
    %v1998 = vpop.f32.mrf.mxu0
    %v1999 = vadd.f32 0.0, %v1998
    %2000 = vdwg.mxu0
    %2001 = vmatpush.msra.mxu0 %v182
    %2002 = vmatpush.msra.mxu0 %v178
    %2003 = vmatpush.msra.mxu0 %v174
    %2004 = vmatpush.msra.mxu0 %v170
    %2005 = vmatpush.msra.mxu0 %v166
    %2006 = vmatpush.msra.mxu0 %v162
    %2007 = vmatpush.msra.mxu0 %v158
    %2008 = vmatpush.msra.mxu0 %v154
    %2009 = vmatpush.msra.mxu0 %v150
    %2010 = vmatpush.msra.mxu0 %v146
    %2011 = vmatpush.msra.mxu0 %v142
    %2012 = vmatpush.msra.mxu0 %v138
    %2013 = vmatpush.msra.mxu0 %v134
    %2014 = vmatpush.msra.mxu0 %v130
    %2015 = vmatpush.msra.mxu0 %v126
    %2016 = vmatpush.msra.mxu0 %v122
    %2017 = vmatmul.f32.gmra.mxu0 %v1704
    %v2018 = vpop.f32.mrf.mxu0
    %v2019 = vadd.f32 0.0, %v2018
    %2020 = vdwg.mxu0
    %v2021 = vadd.f32 %v1937, %v1959
    %v2022 = vadd.f32 %v1938, %v1979
    %v2023 = vadd.f32 %v1939, %v1999
    %v2024 = vadd.f32 %v1940, %v2019
    %v2025 = vxor.u32 %v2021, 2147483648
    %v2026 = vxor.u32 %v2022, 2147483648
    %v2027 = vxor.u32 %v2023, 2147483648
    %v2028 = vmul.f32 %v2025, 1.442695
    %v2029 = vpow.pop %v2028
    %v2030 = vmul.f32 %v2026, 1.442695
    %v2031 = vpow.pop %v2030
    %v2032 = vmul.f32 %v2027, 1.442695
    %v2033 = vpow.pop %v2032
    %v2034 = vadd.f32 %v2029, 1.0
    %v2035 = vadd.f32 %v2031, 1.0
    %v2036 = vadd.f32 %v2033, 1.0
    %v2037 = vrcp.pop %v2034
    %v2038 = vmul.f32 %v2034, %v2037
    %v2039 = vsub.f32 1.0, %v2038
    %v2040 = vmul.f32 %v2037, %v2039
    %v2041 = vadd.f32 %v2037, %v2040
    %vm2042 = vweird.f32 %v2034
    %vm2043 = vweird.f32 %v2037
    %vm2044 = vmor %vm2042, %vm2043
    %v2045 = vsel %vm2044, %v2037, %v2041
    %v2046 = vand.u32 2147483647, %v2034
    %vm2047 = vcmp.eq.f32.partialorder %v2046, 8.507059e+37
    %v2048 = vand.u32 %v2034, 2147483648
    %v2049 = vor.u32 1.1754944e-38, %v2048
    %v2050 = vsel %vm2047, %v2049, %v2045
    %v2051 = vmul.f32 1.0, %v2050
    %v2052 = vrcp.pop %v2035
    %v2053 = vmul.f32 %v2035, %v2052
    %v2054 = vsub.f32 1.0, %v2053
    %v2055 = vmul.f32 %v2052, %v2054
    %v2056 = vadd.f32 %v2052, %v2055
    %vm2057 = vweird.f32 %v2035
    %vm2058 = vweird.f32 %v2052
    %vm2059 = vmor %vm2057, %vm2058
    %v2060 = vsel %vm2059, %v2052, %v2056
    %v2061 = vand.u32 2147483647, %v2035
    %vm2062 = vcmp.eq.f32.partialorder %v2061, 8.507059e+37
    %v2063 = vand.u32 %v2035, 2147483648
    %v2064 = vor.u32 1.1754944e-38, %v2063
    %v2065 = vsel %vm2062, %v2064, %v2060
    %v2066 = vmul.f32 1.0, %v2065
    %v2067 = vrcp.pop %v2036
    %v2068 = vmul.f32 %v2036, %v2067
    %v2069 = vsub.f32 1.0, %v2068
    %v2070 = vmul.f32 %v2067, %v2069
    %v2071 = vadd.f32 %v2067, %v2070
    %vm2072 = vweird.f32 %v2036
    %vm2073 = vweird.f32 %v2067
    %vm2074 = vmor %vm2072, %vm2073
    %v2075 = vsel %vm2074, %v2067, %v2071
    %v2076 = vand.u32 2147483647, %v2036
    %vm2077 = vcmp.eq.f32.partialorder %v2076, 8.507059e+37
    %v2078 = vand.u32 %v2036, 2147483648
    %v2079 = vor.u32 1.1754944e-38, %v2078
    %v2080 = vsel %vm2077, %v2079, %v2075
    %v2081 = vmul.f32 1.0, %v2080
    %v2082 = vtanh.pop %v2024
    %v2083 = vmul.f32 %v2066, %v1702
    %v2084 = vmul.f32 %v2051, %v2082
    %v2085 = vadd.f32 %v2083, %v2084
    %v2086 = vtanh.pop %v2085
    %v2087 = vmul.f32 %v2081, %v2086
    %2088 = vmatpush.msra.mxu0 %v243
    %2089 = vmatpush.msra.mxu0 %v239
    %2090 = vmatpush.msra.mxu0 %v235
    %2091 = vmatpush.msra.mxu0 %v231
    %2092 = vmatpush.msra.mxu0 %v227
    %2093 = vmatpush.msra.mxu0 %v223
    %2094 = vmatpush.msra.mxu0 %v219
    %2095 = vmatpush.msra.mxu0 %v215
    %2096 = vmatpush.msra.mxu0 %v211
    %2097 = vmatpush.msra.mxu0 %v207
    %2098 = vmatpush.msra.mxu0 %v203
    %2099 = vmatpush.msra.mxu0 %v199
    %2100 = vmatpush.msra.mxu0 %v195
    %2101 = vmatpush.msra.mxu0 %v191
    %2102 = vmatpush.msra.mxu0 %v187
    %2103 = vmatpush.msra.mxu0 %v183
    %2104 = vmatmul.f32.gmra.mxu0 %v2087
    %v2105 = vpop.f32.mrf.mxu0
    %v2106 = vadd.f32 0.0, %v2105
    %2107 = vdwg.mxu0
    %2108 = vmatpush.msra.mxu0 %v244
    %2109 = vmatpush.msra.mxu0 %v240
    %2110 = vmatpush.msra.mxu0 %v236
    %2111 = vmatpush.msra.mxu0 %v232
    %2112 = vmatpush.msra.mxu0 %v228
    %2113 = vmatpush.msra.mxu0 %v224
    %2114 = vmatpush.msra.mxu0 %v220
    %2115 = vmatpush.msra.mxu0 %v216
    %2116 = vmatpush.msra.mxu0 %v212
    %2117 = vmatpush.msra.mxu0 %v208
    %2118 = vmatpush.msra.mxu0 %v204
    %2119 = vmatpush.msra.mxu0 %v200
    %2120 = vmatpush.msra.mxu0 %v196
    %2121 = vmatpush.msra.mxu0 %v192
    %2122 = vmatpush.msra.mxu0 %v188
    %2123 = vmatpush.msra.mxu0 %v184
    %2124 = vmatmul.f32.gmra.mxu0 %v2087
    %v2125 = vpop.f32.mrf.mxu0
    %v2126 = vadd.f32 0.0, %v2125
    %2127 = vdwg.mxu0
    %2128 = vmatpush.msra.mxu0 %v245
    %2129 = vmatpush.msra.mxu0 %v241
    %2130 = vmatpush.msra.mxu0 %v237
    %2131 = vmatpush.msra.mxu0 %v233
    %2132 = vmatpush.msra.mxu0 %v229
    %2133 = vmatpush.msra.mxu0 %v225
    %2134 = vmatpush.msra.mxu0 %v221
    %2135 = vmatpush.msra.mxu0 %v217
    %2136 = vmatpush.msra.mxu0 %v213
    %2137 = vmatpush.msra.mxu0 %v209
    %2138 = vmatpush.msra.mxu0 %v205
    %2139 = vmatpush.msra.mxu0 %v201
    %2140 = vmatpush.msra.mxu0 %v197
    %2141 = vmatpush.msra.mxu0 %v193
    %2142 = vmatpush.msra.mxu0 %v189
    %2143 = vmatpush.msra.mxu0 %v185
    %2144 = vmatmul.f32.gmra.mxu0 %v2087
    %v2145 = vpop.f32.mrf.mxu0
    %v2146 = vadd.f32 0.0, %v2145
    %2147 = vdwg.mxu0
    %2148 = vmatpush.msra.mxu0 %v246
    %2149 = vmatpush.msra.mxu0 %v242
    %2150 = vmatpush.msra.mxu0 %v238
    %2151 = vmatpush.msra.mxu0 %v234
    %2152 = vmatpush.msra.mxu0 %v230
    %2153 = vmatpush.msra.mxu0 %v226
    %2154 = vmatpush.msra.mxu0 %v222
    %2155 = vmatpush.msra.mxu0 %v218
    %2156 = vmatpush.msra.mxu0 %v214
    %2157 = vmatpush.msra.mxu0 %v210
    %2158 = vmatpush.msra.mxu0 %v206
    %2159 = vmatpush.msra.mxu0 %v202
    %2160 = vmatpush.msra.mxu0 %v198
    %2161 = vmatpush.msra.mxu0 %v194
    %2162 = vmatpush.msra.mxu0 %v190
    %2163 = vmatpush.msra.mxu0 %v186
    %2164 = vmatmul.f32.gmra.mxu0 %v2087
    %v2165 = vpop.f32.mrf.mxu0
    %v2166 = vadd.f32 0.0, %v2165
    %2167 = vdwg.mxu0
    %v2168 = vadd.f32 %v1932, %v2106
    %v2169 = vadd.f32 %v1933, %v2126
    %v2170 = vadd.f32 %v1934, %v2146
    %v2171 = vadd.f32 %v1935, %v2166
    %v2172 = vxor.u32 %v2168, 2147483648
    %v2173 = vxor.u32 %v2169, 2147483648
    %v2174 = vxor.u32 %v2170, 2147483648
    %v2175 = vmul.f32 %v2172, 1.442695
    %v2176 = vpow.pop %v2175
    %v2177 = vmul.f32 %v2173, 1.442695
    %v2178 = vpow.pop %v2177
    %v2179 = vmul.f32 %v2174, 1.442695
    %v2180 = vpow.pop %v2179
    %v2181 = vadd.f32 %v2176, 1.0
    %v2182 = vadd.f32 %v2178, 1.0
    %v2183 = vadd.f32 %v2180, 1.0
    %v2184 = vrcp.pop %v2181
    %v2185 = vmul.f32 %v2181, %v2184
    %v2186 = vsub.f32 1.0, %v2185
    %v2187 = vmul.f32 %v2184, %v2186
    %v2188 = vadd.f32 %v2184, %v2187
    %vm2189 = vweird.f32 %v2181
    %vm2190 = vweird.f32 %v2184
    %vm2191 = vmor %vm2189, %vm2190
    %v2192 = vsel %vm2191, %v2184, %v2188
    %v2193 = vand.u32 2147483647, %v2181
    %vm2194 = vcmp.eq.f32.partialorder %v2193, 8.507059e+37
    %v2195 = vand.u32 %v2181, 2147483648
    %v2196 = vor.u32 1.1754944e-38, %v2195
    %v2197 = vsel %vm2194, %v2196, %v2192
    %v2198 = vmul.f32 1.0, %v2197
    %v2199 = vrcp.pop %v2182
    %v2200 = vmul.f32 %v2182, %v2199
    %v2201 = vsub.f32 1.0, %v2200
    %v2202 = vmul.f32 %v2199, %v2201
    %v2203 = vadd.f32 %v2199, %v2202
    %vm2204 = vweird.f32 %v2182
    %vm2205 = vweird.f32 %v2199
    %vm2206 = vmor %vm2204, %vm2205
    %v2207 = vsel %vm2206, %v2199, %v2203
    %v2208 = vand.u32 2147483647, %v2182
    %vm2209 = vcmp.eq.f32.partialorder %v2208, 8.507059e+37
    %v2210 = vand.u32 %v2182, 2147483648
    %v2211 = vor.u32 1.1754944e-38, %v2210
    %v2212 = vsel %vm2209, %v2211, %v2207
    %v2213 = vmul.f32 1.0, %v2212
    %v2214 = vrcp.pop %v2183
    %v2215 = vmul.f32 %v2183, %v2214
    %v2216 = vsub.f32 1.0, %v2215
    %v2217 = vmul.f32 %v2214, %v2216
    %v2218 = vadd.f32 %v2214, %v2217
    %vm2219 = vweird.f32 %v2183
    %vm2220 = vweird.f32 %v2214
    %vm2221 = vmor %vm2219, %vm2220
    %v2222 = vsel %vm2221, %v2214, %v2218
    %v2223 = vand.u32 2147483647, %v2183
    %vm2224 = vcmp.eq.f32.partialorder %v2223, 8.507059e+37
    %v2225 = vand.u32 %v2183, 2147483648
    %v2226 = vor.u32 1.1754944e-38, %v2225
    %v2227 = vsel %vm2224, %v2226, %v2222
    %v2228 = vmul.f32 1.0, %v2227
    %v2229 = vtanh.pop %v2171
    %v2230 = vmul.f32 %v2213, %v1849
    %v2231 = vmul.f32 %v2198, %v2229
    %v2232 = vadd.f32 %v2230, %v2231
    %v2233 = vtanh.pop %v2232
    %v2234 = vmul.f32 %v2228, %v2233
    %2235 = vmatpush.msra.mxu0 %v307
    %2236 = vmatpush.msra.mxu0 %v303
    %2237 = vmatpush.msra.mxu0 %v299
    %2238 = vmatpush.msra.mxu0 %v295
    %2239 = vmatpush.msra.mxu0 %v291
    %2240 = vmatpush.msra.mxu0 %v287
    %2241 = vmatpush.msra.mxu0 %v283
    %2242 = vmatpush.msra.mxu0 %v279
    %2243 = vmatpush.msra.mxu0 %v275
    %2244 = vmatpush.msra.mxu0 %v271
    %2245 = vmatpush.msra.mxu0 %v267
    %2246 = vmatpush.msra.mxu0 %v263
    %2247 = vmatpush.msra.mxu0 %v259
    %2248 = vmatpush.msra.mxu0 %v255
    %2249 = vmatpush.msra.mxu0 %v251
    %2250 = vmatpush.msra.mxu0 %v247
    %2251 = vmatmul.f32.gmra.mxu0 %v2234
    %v2252 = vpop.f32.mrf.mxu0
    %v2253 = vadd.f32 0.0, %v2252
    %2254 = vdwg.mxu0
    %2255 = vmatpush.msra.mxu0 %v308
    %2256 = vmatpush.msra.mxu0 %v304
    %2257 = vmatpush.msra.mxu0 %v300
    %2258 = vmatpush.msra.mxu0 %v296
    %2259 = vmatpush.msra.mxu0 %v292
    %2260 = vmatpush.msra.mxu0 %v288
    %2261 = vmatpush.msra.mxu0 %v284
    %2262 = vmatpush.msra.mxu0 %v280
    %2263 = vmatpush.msra.mxu0 %v276
    %2264 = vmatpush.msra.mxu0 %v272
    %2265 = vmatpush.msra.mxu0 %v268
    %2266 = vmatpush.msra.mxu0 %v264
    %2267 = vmatpush.msra.mxu0 %v260
    %2268 = vmatpush.msra.mxu0 %v256
    %2269 = vmatpush.msra.mxu0 %v252
    %2270 = vmatpush.msra.mxu0 %v248
    %2271 = vmatmul.f32.gmra.mxu0 %v2234
    %v2272 = vpop.f32.mrf.mxu0
    %v2273 = vadd.f32 0.0, %v2272
    %2274 = vdwg.mxu0
    %2275 = vmatpush.msra.mxu0 %v309
    %2276 = vmatpush.msra.mxu0 %v305
    %2277 = vmatpush.msra.mxu0 %v301
    %2278 = vmatpush.msra.mxu0 %v297
    %2279 = vmatpush.msra.mxu0 %v293
    %2280 = vmatpush.msra.mxu0 %v289
    %2281 = vmatpush.msra.mxu0 %v285
    %2282 = vmatpush.msra.mxu0 %v281
    %2283 = vmatpush.msra.mxu0 %v277
    %2284 = vmatpush.msra.mxu0 %v273
    %2285 = vmatpush.msra.mxu0 %v269
    %2286 = vmatpush.msra.mxu0 %v265
    %2287 = vmatpush.msra.mxu0 %v261
    %2288 = vmatpush.msra.mxu0 %v257
    %2289 = vmatpush.msra.mxu0 %v253
    %2290 = vmatpush.msra.mxu0 %v249
    %2291 = vmatmul.f32.gmra.mxu0 %v2234
    %v2292 = vpop.f32.mrf.mxu0
    %v2293 = vadd.f32 0.0, %v2292
    %2294 = vdwg.mxu0
    %2295 = vmatpush.msra.mxu0 %v310
    %2296 = vmatpush.msra.mxu0 %v306
    %2297 = vmatpush.msra.mxu0 %v302
    %2298 = vmatpush.msra.mxu0 %v298
    %2299 = vmatpush.msra.mxu0 %v294
    %2300 = vmatpush.msra.mxu0 %v290
    %2301 = vmatpush.msra.mxu0 %v286
    %2302 = vmatpush.msra.mxu0 %v282
    %2303 = vmatpush.msra.mxu0 %v278
    %2304 = vmatpush.msra.mxu0 %v274
    %2305 = vmatpush.msra.mxu0 %v270
    %2306 = vmatpush.msra.mxu0 %v266
    %2307 = vmatpush.msra.mxu0 %v262
    %2308 = vmatpush.msra.mxu0 %v258
    %2309 = vmatpush.msra.mxu0 %v254
    %2310 = vmatpush.msra.mxu0 %v250
    %2311 = vmatmul.f32.gmra.mxu0 %v2234
    %v2312 = vpop.f32.mrf.mxu0
    %v2313 = vadd.f32 0.0, %v2312
    %2314 = vdwg.mxu0
    %v2315 = vadd.f32 %v313, %v2253
    %v2316 = vadd.f32 %v314, %v2273
    %v2317 = vadd.f32 %v315, %v2293
    %v2318 = vadd.f32 %v316, %v2313
    %s2319 = scalar_lea.vmem [#allocation2], 160
    %v2320 = vld [vmem:[%s2319] sm:$0xff]
    %v2321 = vld [vmem:[%s2319 + $0x8] sm:$0xff]
    %v2322 = vld [vmem:[%s2319 + $0x10] sm:$0xff]
    %v2323 = vld [vmem:[%s2319 + $0x18] sm:$0xff]
    %2324 = vmatpush.msra.mxu0 %v179
    %2325 = vmatpush.msra.mxu0 %v175
    %2326 = vmatpush.msra.mxu0 %v171
    %2327 = vmatpush.msra.mxu0 %v167
    %2328 = vmatpush.msra.mxu0 %v163
    %2329 = vmatpush.msra.mxu0 %v159
    %2330 = vmatpush.msra.mxu0 %v155
    %2331 = vmatpush.msra.mxu0 %v151
    %2332 = vmatpush.msra.mxu0 %v147
    %2333 = vmatpush.msra.mxu0 %v143
    %2334 = vmatpush.msra.mxu0 %v139
    %2335 = vmatpush.msra.mxu0 %v135
    %2336 = vmatpush.msra.mxu0 %v131
    %2337 = vmatpush.msra.mxu0 %v127
    %2338 = vmatpush.msra.mxu0 %v123
    %2339 = vmatpush.msra.mxu0 %v119
    %2340 = vmatmul.f32.gmra.mxu0 %v2087
    %v2341 = vpop.f32.mrf.mxu0
    %v2342 = vadd.f32 0.0, %v2341
    %2343 = vdwg.mxu0
    %2344 = vmatpush.msra.mxu0 %v180
    %2345 = vmatpush.msra.mxu0 %v176
    %2346 = vmatpush.msra.mxu0 %v172
    %2347 = vmatpush.msra.mxu0 %v168
    %2348 = vmatpush.msra.mxu0 %v164
    %2349 = vmatpush.msra.mxu0 %v160
    %2350 = vmatpush.msra.mxu0 %v156
    %2351 = vmatpush.msra.mxu0 %v152
    %2352 = vmatpush.msra.mxu0 %v148
    %2353 = vmatpush.msra.mxu0 %v144
    %2354 = vmatpush.msra.mxu0 %v140
    %2355 = vmatpush.msra.mxu0 %v136
    %2356 = vmatpush.msra.mxu0 %v132
    %2357 = vmatpush.msra.mxu0 %v128
    %2358 = vmatpush.msra.mxu0 %v124
    %2359 = vmatpush.msra.mxu0 %v120
    %2360 = vmatmul.f32.gmra.mxu0 %v2087
    %v2361 = vpop.f32.mrf.mxu0
    %v2362 = vadd.f32 0.0, %v2361
    %2363 = vdwg.mxu0
    %2364 = vmatpush.msra.mxu0 %v181
    %2365 = vmatpush.msra.mxu0 %v177
    %2366 = vmatpush.msra.mxu0 %v173
    %2367 = vmatpush.msra.mxu0 %v169
    %2368 = vmatpush.msra.mxu0 %v165
    %2369 = vmatpush.msra.mxu0 %v161
    %2370 = vmatpush.msra.mxu0 %v157
    %2371 = vmatpush.msra.mxu0 %v153
    %2372 = vmatpush.msra.mxu0 %v149
    %2373 = vmatpush.msra.mxu0 %v145
    %2374 = vmatpush.msra.mxu0 %v141
    %2375 = vmatpush.msra.mxu0 %v137
    %2376 = vmatpush.msra.mxu0 %v133
    %2377 = vmatpush.msra.mxu0 %v129
    %2378 = vmatpush.msra.mxu0 %v125
    %2379 = vmatpush.msra.mxu0 %v121
    %2380 = vmatmul.f32.gmra.mxu0 %v2087
    %v2381 = vpop.f32.mrf.mxu0
    %v2382 = vadd.f32 0.0, %v2381
    %2383 = vdwg.mxu0
    %2384 = vmatpush.msra.mxu0 %v182
    %2385 = vmatpush.msra.mxu0 %v178
    %2386 = vmatpush.msra.mxu0 %v174
    %2387 = vmatpush.msra.mxu0 %v170
    %2388 = vmatpush.msra.mxu0 %v166
    %2389 = vmatpush.msra.mxu0 %v162
    %2390 = vmatpush.msra.mxu0 %v158
    %2391 = vmatpush.msra.mxu0 %v154
    %2392 = vmatpush.msra.mxu0 %v150
    %2393 = vmatpush.msra.mxu0 %v146
    %2394 = vmatpush.msra.mxu0 %v142
    %2395 = vmatpush.msra.mxu0 %v138
    %2396 = vmatpush.msra.mxu0 %v134
    %2397 = vmatpush.msra.mxu0 %v130
    %2398 = vmatpush.msra.mxu0 %v126
    %2399 = vmatpush.msra.mxu0 %v122
    %2400 = vmatmul.f32.gmra.mxu0 %v2087
    %v2401 = vpop.f32.mrf.mxu0
    %v2402 = vadd.f32 0.0, %v2401
    %2403 = vdwg.mxu0
    %v2404 = vadd.f32 %v2320, %v2342
    %v2405 = vadd.f32 %v2321, %v2362
    %v2406 = vadd.f32 %v2322, %v2382
    %v2407 = vadd.f32 %v2323, %v2402
    %v2408 = vxor.u32 %v2404, 2147483648
    %v2409 = vxor.u32 %v2405, 2147483648
    %v2410 = vxor.u32 %v2406, 2147483648
    %v2411 = vmul.f32 %v2408, 1.442695
    %v2412 = vpow.pop %v2411
    %v2413 = vmul.f32 %v2409, 1.442695
    %v2414 = vpow.pop %v2413
    %v2415 = vmul.f32 %v2410, 1.442695
    %v2416 = vpow.pop %v2415
    %v2417 = vadd.f32 %v2412, 1.0
    %v2418 = vadd.f32 %v2414, 1.0
    %v2419 = vadd.f32 %v2416, 1.0
    %v2420 = vrcp.pop %v2417
    %v2421 = vmul.f32 %v2417, %v2420
    %v2422 = vsub.f32 1.0, %v2421
    %v2423 = vmul.f32 %v2420, %v2422
    %v2424 = vadd.f32 %v2420, %v2423
    %vm2425 = vweird.f32 %v2417
    %vm2426 = vweird.f32 %v2420
    %vm2427 = vmor %vm2425, %vm2426
    %v2428 = vsel %vm2427, %v2420, %v2424
    %v2429 = vand.u32 2147483647, %v2417
    %vm2430 = vcmp.eq.f32.partialorder %v2429, 8.507059e+37
    %v2431 = vand.u32 %v2417, 2147483648
    %v2432 = vor.u32 1.1754944e-38, %v2431
    %v2433 = vsel %vm2430, %v2432, %v2428
    %v2434 = vmul.f32 1.0, %v2433
    %v2435 = vrcp.pop %v2418
    %v2436 = vmul.f32 %v2418, %v2435
    %v2437 = vsub.f32 1.0, %v2436
    %v2438 = vmul.f32 %v2435, %v2437
    %v2439 = vadd.f32 %v2435, %v2438
    %vm2440 = vweird.f32 %v2418
    %vm2441 = vweird.f32 %v2435
    %vm2442 = vmor %vm2440, %vm2441
    %v2443 = vsel %vm2442, %v2435, %v2439
    %v2444 = vand.u32 2147483647, %v2418
    %vm2445 = vcmp.eq.f32.partialorder %v2444, 8.507059e+37
    %v2446 = vand.u32 %v2418, 2147483648
    %v2447 = vor.u32 1.1754944e-38, %v2446
    %v2448 = vsel %vm2445, %v2447, %v2443
    %v2449 = vmul.f32 1.0, %v2448
    %v2450 = vrcp.pop %v2419
    %v2451 = vmul.f32 %v2419, %v2450
    %v2452 = vsub.f32 1.0, %v2451
    %v2453 = vmul.f32 %v2450, %v2452
    %v2454 = vadd.f32 %v2450, %v2453
    %vm2455 = vweird.f32 %v2419
    %vm2456 = vweird.f32 %v2450
    %vm2457 = vmor %vm2455, %vm2456
    %v2458 = vsel %vm2457, %v2450, %v2454
    %v2459 = vand.u32 2147483647, %v2419
    %vm2460 = vcmp.eq.f32.partialorder %v2459, 8.507059e+37
    %v2461 = vand.u32 %v2419, 2147483648
    %v2462 = vor.u32 1.1754944e-38, %v2461
    %v2463 = vsel %vm2460, %v2462, %v2458
    %v2464 = vmul.f32 1.0, %v2463
    %v2465 = vtanh.pop %v2407
    %v2466 = vmul.f32 %v2449, %v2085
    %v2467 = vmul.f32 %v2434, %v2465
    %v2468 = vadd.f32 %v2466, %v2467
    %v2469 = vtanh.pop %v2468
    %v2470 = vmul.f32 %v2464, %v2469
    %2471 = vmatpush.msra.mxu0 %v243
    %2472 = vmatpush.msra.mxu0 %v239
    %2473 = vmatpush.msra.mxu0 %v235
    %2474 = vmatpush.msra.mxu0 %v231
    %2475 = vmatpush.msra.mxu0 %v227
    %2476 = vmatpush.msra.mxu0 %v223
    %2477 = vmatpush.msra.mxu0 %v219
    %2478 = vmatpush.msra.mxu0 %v215
    %2479 = vmatpush.msra.mxu0 %v211
    %2480 = vmatpush.msra.mxu0 %v207
    %2481 = vmatpush.msra.mxu0 %v203
    %2482 = vmatpush.msra.mxu0 %v199
    %2483 = vmatpush.msra.mxu0 %v195
    %2484 = vmatpush.msra.mxu0 %v191
    %2485 = vmatpush.msra.mxu0 %v187
    %2486 = vmatpush.msra.mxu0 %v183
    %2487 = vmatmul.f32.gmra.mxu0 %v2470
    %v2488 = vpop.f32.mrf.mxu0
    %v2489 = vadd.f32 0.0, %v2488
    %2490 = vdwg.mxu0
    %2491 = vmatpush.msra.mxu0 %v244
    %2492 = vmatpush.msra.mxu0 %v240
    %2493 = vmatpush.msra.mxu0 %v236
    %2494 = vmatpush.msra.mxu0 %v232
    %2495 = vmatpush.msra.mxu0 %v228
    %2496 = vmatpush.msra.mxu0 %v224
    %2497 = vmatpush.msra.mxu0 %v220
    %2498 = vmatpush.msra.mxu0 %v216
    %2499 = vmatpush.msra.mxu0 %v212
    %2500 = vmatpush.msra.mxu0 %v208
    %2501 = vmatpush.msra.mxu0 %v204
    %2502 = vmatpush.msra.mxu0 %v200
    %2503 = vmatpush.msra.mxu0 %v196
    %2504 = vmatpush.msra.mxu0 %v192
    %2505 = vmatpush.msra.mxu0 %v188
    %2506 = vmatpush.msra.mxu0 %v184
    %2507 = vmatmul.f32.gmra.mxu0 %v2470
    %v2508 = vpop.f32.mrf.mxu0
    %v2509 = vadd.f32 0.0, %v2508
    %2510 = vdwg.mxu0
    %2511 = vmatpush.msra.mxu0 %v245
    %2512 = vmatpush.msra.mxu0 %v241
    %2513 = vmatpush.msra.mxu0 %v237
    %2514 = vmatpush.msra.mxu0 %v233
    %2515 = vmatpush.msra.mxu0 %v229
    %2516 = vmatpush.msra.mxu0 %v225
    %2517 = vmatpush.msra.mxu0 %v221
    %2518 = vmatpush.msra.mxu0 %v217
    %2519 = vmatpush.msra.mxu0 %v213
    %2520 = vmatpush.msra.mxu0 %v209
    %2521 = vmatpush.msra.mxu0 %v205
    %2522 = vmatpush.msra.mxu0 %v201
    %2523 = vmatpush.msra.mxu0 %v197
    %2524 = vmatpush.msra.mxu0 %v193
    %2525 = vmatpush.msra.mxu0 %v189
    %2526 = vmatpush.msra.mxu0 %v185
    %2527 = vmatmul.f32.gmra.mxu0 %v2470
    %v2528 = vpop.f32.mrf.mxu0
    %v2529 = vadd.f32 0.0, %v2528
    %2530 = vdwg.mxu0
    %2531 = vmatpush.msra.mxu0 %v246
    %2532 = vmatpush.msra.mxu0 %v242
    %2533 = vmatpush.msra.mxu0 %v238
    %2534 = vmatpush.msra.mxu0 %v234
    %2535 = vmatpush.msra.mxu0 %v230
    %2536 = vmatpush.msra.mxu0 %v226
    %2537 = vmatpush.msra.mxu0 %v222
    %2538 = vmatpush.msra.mxu0 %v218
    %2539 = vmatpush.msra.mxu0 %v214
    %2540 = vmatpush.msra.mxu0 %v210
    %2541 = vmatpush.msra.mxu0 %v206
    %2542 = vmatpush.msra.mxu0 %v202
    %2543 = vmatpush.msra.mxu0 %v198
    %2544 = vmatpush.msra.mxu0 %v194
    %2545 = vmatpush.msra.mxu0 %v190
    %2546 = vmatpush.msra.mxu0 %v186
    %2547 = vmatmul.f32.gmra.mxu0 %v2470
    %v2548 = vpop.f32.mrf.mxu0
    %v2549 = vadd.f32 0.0, %v2548
    %2550 = vdwg.mxu0
    %v2551 = vadd.f32 %v2315, %v2489
    %v2552 = vadd.f32 %v2316, %v2509
    %v2553 = vadd.f32 %v2317, %v2529
    %v2554 = vadd.f32 %v2318, %v2549
    %v2555 = vxor.u32 %v2551, 2147483648
    %v2556 = vxor.u32 %v2552, 2147483648
    %v2557 = vxor.u32 %v2553, 2147483648
    %v2558 = vmul.f32 %v2555, 1.442695
    %v2559 = vpow.pop %v2558
    %v2560 = vmul.f32 %v2556, 1.442695
    %v2561 = vpow.pop %v2560
    %v2562 = vmul.f32 %v2557, 1.442695
    %v2563 = vpow.pop %v2562
    %v2564 = vadd.f32 %v2559, 1.0
    %v2565 = vadd.f32 %v2561, 1.0
    %v2566 = vadd.f32 %v2563, 1.0
    %v2567 = vrcp.pop %v2564
    %v2568 = vmul.f32 %v2564, %v2567
    %v2569 = vsub.f32 1.0, %v2568
    %v2570 = vmul.f32 %v2567, %v2569
    %v2571 = vadd.f32 %v2567, %v2570
    %vm2572 = vweird.f32 %v2564
    %vm2573 = vweird.f32 %v2567
    %vm2574 = vmor %vm2572, %vm2573
    %v2575 = vsel %vm2574, %v2567, %v2571
    %v2576 = vand.u32 2147483647, %v2564
    %vm2577 = vcmp.eq.f32.partialorder %v2576, 8.507059e+37
    %v2578 = vand.u32 %v2564, 2147483648
    %v2579 = vor.u32 1.1754944e-38, %v2578
    %v2580 = vsel %vm2577, %v2579, %v2575
    %v2581 = vmul.f32 1.0, %v2580
    %v2582 = vrcp.pop %v2565
    %v2583 = vmul.f32 %v2565, %v2582
    %v2584 = vsub.f32 1.0, %v2583
    %v2585 = vmul.f32 %v2582, %v2584
    %v2586 = vadd.f32 %v2582, %v2585
    %vm2587 = vweird.f32 %v2565
    %vm2588 = vweird.f32 %v2582
    %vm2589 = vmor %vm2587, %vm2588
    %v2590 = vsel %vm2589, %v2582, %v2586
    %v2591 = vand.u32 2147483647, %v2565
    %vm2592 = vcmp.eq.f32.partialorder %v2591, 8.507059e+37
    %v2593 = vand.u32 %v2565, 2147483648
    %v2594 = vor.u32 1.1754944e-38, %v2593
    %v2595 = vsel %vm2592, %v2594, %v2590
    %v2596 = vmul.f32 1.0, %v2595
    %v2597 = vrcp.pop %v2566
    %v2598 = vmul.f32 %v2566, %v2597
    %v2599 = vsub.f32 1.0, %v2598
    %v2600 = vmul.f32 %v2597, %v2599
    %v2601 = vadd.f32 %v2597, %v2600
    %vm2602 = vweird.f32 %v2566
    %vm2603 = vweird.f32 %v2597
    %vm2604 = vmor %vm2602, %vm2603
    %v2605 = vsel %vm2604, %v2597, %v2601
    %v2606 = vand.u32 2147483647, %v2566
    %vm2607 = vcmp.eq.f32.partialorder %v2606, 8.507059e+37
    %v2608 = vand.u32 %v2566, 2147483648
    %v2609 = vor.u32 1.1754944e-38, %v2608
    %v2610 = vsel %vm2607, %v2609, %v2605
    %v2611 = vmul.f32 1.0, %v2610
    %v2612 = vtanh.pop %v2554
    %v2613 = vmul.f32 %v2596, %v2232
    %v2614 = vmul.f32 %v2581, %v2612
    %v2615 = vadd.f32 %v2613, %v2614
    %v2616 = vtanh.pop %v2615
    %v2617 = vmul.f32 %v2611, %v2616
    %2618 = vmatpush.msra.mxu0 %v307
    %2619 = vmatpush.msra.mxu0 %v303
    %2620 = vmatpush.msra.mxu0 %v299
    %2621 = vmatpush.msra.mxu0 %v295
    %2622 = vmatpush.msra.mxu0 %v291
    %2623 = vmatpush.msra.mxu0 %v287
    %2624 = vmatpush.msra.mxu0 %v283
    %2625 = vmatpush.msra.mxu0 %v279
    %2626 = vmatpush.msra.mxu0 %v275
    %2627 = vmatpush.msra.mxu0 %v271
    %2628 = vmatpush.msra.mxu0 %v267
    %2629 = vmatpush.msra.mxu0 %v263
    %2630 = vmatpush.msra.mxu0 %v259
    %2631 = vmatpush.msra.mxu0 %v255
    %2632 = vmatpush.msra.mxu0 %v251
    %2633 = vmatpush.msra.mxu0 %v247
    %2634 = vmatmul.f32.gmra.mxu0 %v2617
    %v2635 = vpop.f32.mrf.mxu0
    %v2636 = vadd.f32 0.0, %v2635
    %2637 = vdwg.mxu0
    %2638 = vmatpush.msra.mxu0 %v308
    %2639 = vmatpush.msra.mxu0 %v304
    %2640 = vmatpush.msra.mxu0 %v300
    %2641 = vmatpush.msra.mxu0 %v296
    %2642 = vmatpush.msra.mxu0 %v292
    %2643 = vmatpush.msra.mxu0 %v288
    %2644 = vmatpush.msra.mxu0 %v284
    %2645 = vmatpush.msra.mxu0 %v280
    %2646 = vmatpush.msra.mxu0 %v276
    %2647 = vmatpush.msra.mxu0 %v272
    %2648 = vmatpush.msra.mxu0 %v268
    %2649 = vmatpush.msra.mxu0 %v264
    %2650 = vmatpush.msra.mxu0 %v260
    %2651 = vmatpush.msra.mxu0 %v256
    %2652 = vmatpush.msra.mxu0 %v252
    %2653 = vmatpush.msra.mxu0 %v248
    %2654 = vmatmul.f32.gmra.mxu0 %v2617
    %v2655 = vpop.f32.mrf.mxu0
    %v2656 = vadd.f32 0.0, %v2655
    %2657 = vdwg.mxu0
    %2658 = vmatpush.msra.mxu0 %v309
    %2659 = vmatpush.msra.mxu0 %v305
    %2660 = vmatpush.msra.mxu0 %v301
    %2661 = vmatpush.msra.mxu0 %v297
    %2662 = vmatpush.msra.mxu0 %v293
    %2663 = vmatpush.msra.mxu0 %v289
    %2664 = vmatpush.msra.mxu0 %v285
    %2665 = vmatpush.msra.mxu0 %v281
    %2666 = vmatpush.msra.mxu0 %v277
    %2667 = vmatpush.msra.mxu0 %v273
    %2668 = vmatpush.msra.mxu0 %v269
    %2669 = vmatpush.msra.mxu0 %v265
    %2670 = vmatpush.msra.mxu0 %v261
    %2671 = vmatpush.msra.mxu0 %v257
    %2672 = vmatpush.msra.mxu0 %v253
    %2673 = vmatpush.msra.mxu0 %v249
    %2674 = vmatmul.f32.gmra.mxu0 %v2617
    %v2675 = vpop.f32.mrf.mxu0
    %v2676 = vadd.f32 0.0, %v2675
    %2677 = vdwg.mxu0
    %2678 = vmatpush.msra.mxu0 %v310
    %2679 = vmatpush.msra.mxu0 %v306
    %2680 = vmatpush.msra.mxu0 %v302
    %2681 = vmatpush.msra.mxu0 %v298
    %2682 = vmatpush.msra.mxu0 %v294
    %2683 = vmatpush.msra.mxu0 %v290
    %2684 = vmatpush.msra.mxu0 %v286
    %2685 = vmatpush.msra.mxu0 %v282
    %2686 = vmatpush.msra.mxu0 %v278
    %2687 = vmatpush.msra.mxu0 %v274
    %2688 = vmatpush.msra.mxu0 %v270
    %2689 = vmatpush.msra.mxu0 %v266
    %2690 = vmatpush.msra.mxu0 %v262
    %2691 = vmatpush.msra.mxu0 %v258
    %2692 = vmatpush.msra.mxu0 %v254
    %2693 = vmatpush.msra.mxu0 %v250
    %2694 = vmatmul.f32.gmra.mxu0 %v2617
    %v2695 = vpop.f32.mrf.mxu0
    %v2696 = vadd.f32 0.0, %v2695
    %2697 = vdwg.mxu0
    %v2698 = vadd.f32 %v313, %v2636
    %v2699 = vadd.f32 %v314, %v2656
    %v2700 = vadd.f32 %v315, %v2676
    %v2701 = vadd.f32 %v316, %v2696
    %s2702 = scalar_lea.vmem [#allocation2], 192
    %v2703 = vld [vmem:[%s2702] sm:$0xff]
    %v2704 = vld [vmem:[%s2702 + $0x8] sm:$0xff]
    %v2705 = vld [vmem:[%s2702 + $0x10] sm:$0xff]
    %v2706 = vld [vmem:[%s2702 + $0x18] sm:$0xff]
    %2707 = vmatpush.msra.mxu0 %v179
    %2708 = vmatpush.msra.mxu0 %v175
    %2709 = vmatpush.msra.mxu0 %v171
    %2710 = vmatpush.msra.mxu0 %v167
    %2711 = vmatpush.msra.mxu0 %v163
    %2712 = vmatpush.msra.mxu0 %v159
    %2713 = vmatpush.msra.mxu0 %v155
    %2714 = vmatpush.msra.mxu0 %v151
    %2715 = vmatpush.msra.mxu0 %v147
    %2716 = vmatpush.msra.mxu0 %v143
    %2717 = vmatpush.msra.mxu0 %v139
    %2718 = vmatpush.msra.mxu0 %v135
    %2719 = vmatpush.msra.mxu0 %v131
    %2720 = vmatpush.msra.mxu0 %v127
    %2721 = vmatpush.msra.mxu0 %v123
    %2722 = vmatpush.msra.mxu0 %v119
    %2723 = vmatmul.f32.gmra.mxu0 %v2470
    %v2724 = vpop.f32.mrf.mxu0
    %v2725 = vadd.f32 0.0, %v2724
    %2726 = vdwg.mxu0
    %2727 = vmatpush.msra.mxu0 %v180
    %2728 = vmatpush.msra.mxu0 %v176
    %2729 = vmatpush.msra.mxu0 %v172
    %2730 = vmatpush.msra.mxu0 %v168
    %2731 = vmatpush.msra.mxu0 %v164
    %2732 = vmatpush.msra.mxu0 %v160
    %2733 = vmatpush.msra.mxu0 %v156
    %2734 = vmatpush.msra.mxu0 %v152
    %2735 = vmatpush.msra.mxu0 %v148
    %2736 = vmatpush.msra.mxu0 %v144
    %2737 = vmatpush.msra.mxu0 %v140
    %2738 = vmatpush.msra.mxu0 %v136
    %2739 = vmatpush.msra.mxu0 %v132
    %2740 = vmatpush.msra.mxu0 %v128
    %2741 = vmatpush.msra.mxu0 %v124
    %2742 = vmatpush.msra.mxu0 %v120
    %2743 = vmatmul.f32.gmra.mxu0 %v2470
    %v2744 = vpop.f32.mrf.mxu0
    %v2745 = vadd.f32 0.0, %v2744
    %2746 = vdwg.mxu0
    %2747 = vmatpush.msra.mxu0 %v181
    %2748 = vmatpush.msra.mxu0 %v177
    %2749 = vmatpush.msra.mxu0 %v173
    %2750 = vmatpush.msra.mxu0 %v169
    %2751 = vmatpush.msra.mxu0 %v165
    %2752 = vmatpush.msra.mxu0 %v161
    %2753 = vmatpush.msra.mxu0 %v157
    %2754 = vmatpush.msra.mxu0 %v153
    %2755 = vmatpush.msra.mxu0 %v149
    %2756 = vmatpush.msra.mxu0 %v145
    %2757 = vmatpush.msra.mxu0 %v141
    %2758 = vmatpush.msra.mxu0 %v137
    %2759 = vmatpush.msra.mxu0 %v133
    %2760 = vmatpush.msra.mxu0 %v129
    %2761 = vmatpush.msra.mxu0 %v125
    %2762 = vmatpush.msra.mxu0 %v121
    %2763 = vmatmul.f32.gmra.mxu0 %v2470
    %v2764 = vpop.f32.mrf.mxu0
    %v2765 = vadd.f32 0.0, %v2764
    %2766 = vdwg.mxu0
    %2767 = vmatpush.msra.mxu0 %v182
    %2768 = vmatpush.msra.mxu0 %v178
    %2769 = vmatpush.msra.mxu0 %v174
    %2770 = vmatpush.msra.mxu0 %v170
    %2771 = vmatpush.msra.mxu0 %v166
    %2772 = vmatpush.msra.mxu0 %v162
    %2773 = vmatpush.msra.mxu0 %v158
    %2774 = vmatpush.msra.mxu0 %v154
    %2775 = vmatpush.msra.mxu0 %v150
    %2776 = vmatpush.msra.mxu0 %v146
    %2777 = vmatpush.msra.mxu0 %v142
    %2778 = vmatpush.msra.mxu0 %v138
    %2779 = vmatpush.msra.mxu0 %v134
    %2780 = vmatpush.msra.mxu0 %v130
    %2781 = vmatpush.msra.mxu0 %v126
    %2782 = vmatpush.msra.mxu0 %v122
    %2783 = vmatmul.f32.gmra.mxu0 %v2470
    %v2784 = vpop.f32.mrf.mxu0
    %v2785 = vadd.f32 0.0, %v2784
    %2786 = vdwg.mxu0
    %v2787 = vadd.f32 %v2703, %v2725
    %v2788 = vadd.f32 %v2704, %v2745
    %v2789 = vadd.f32 %v2705, %v2765
    %v2790 = vadd.f32 %v2706, %v2785
    %v2791 = vxor.u32 %v2787, 2147483648
    %v2792 = vxor.u32 %v2788, 2147483648
    %v2793 = vxor.u32 %v2789, 2147483648
    %v2794 = vmul.f32 %v2791, 1.442695
    %v2795 = vpow.pop %v2794
    %v2796 = vmul.f32 %v2792, 1.442695
    %v2797 = vpow.pop %v2796
    %v2798 = vmul.f32 %v2793, 1.442695
    %v2799 = vpow.pop %v2798
    %v2800 = vadd.f32 %v2795, 1.0
    %v2801 = vadd.f32 %v2797, 1.0
    %v2802 = vadd.f32 %v2799, 1.0
    %v2803 = vrcp.pop %v2800
    %v2804 = vmul.f32 %v2800, %v2803
    %v2805 = vsub.f32 1.0, %v2804
    %v2806 = vmul.f32 %v2803, %v2805
    %v2807 = vadd.f32 %v2803, %v2806
    %vm2808 = vweird.f32 %v2800
    %vm2809 = vweird.f32 %v2803
    %vm2810 = vmor %vm2808, %vm2809
    %v2811 = vsel %vm2810, %v2803, %v2807
    %v2812 = vand.u32 2147483647, %v2800
    %vm2813 = vcmp.eq.f32.partialorder %v2812, 8.507059e+37
    %v2814 = vand.u32 %v2800, 2147483648
    %v2815 = vor.u32 1.1754944e-38, %v2814
    %v2816 = vsel %vm2813, %v2815, %v2811
    %v2817 = vmul.f32 1.0, %v2816
    %v2818 = vrcp.pop %v2801
    %v2819 = vmul.f32 %v2801, %v2818
    %v2820 = vsub.f32 1.0, %v2819
    %v2821 = vmul.f32 %v2818, %v2820
    %v2822 = vadd.f32 %v2818, %v2821
    %vm2823 = vweird.f32 %v2801
    %vm2824 = vweird.f32 %v2818
    %vm2825 = vmor %vm2823, %vm2824
    %v2826 = vsel %vm2825, %v2818, %v2822
    %v2827 = vand.u32 2147483647, %v2801
    %vm2828 = vcmp.eq.f32.partialorder %v2827, 8.507059e+37
    %v2829 = vand.u32 %v2801, 2147483648
    %v2830 = vor.u32 1.1754944e-38, %v2829
    %v2831 = vsel %vm2828, %v2830, %v2826
    %v2832 = vmul.f32 1.0, %v2831
    %v2833 = vrcp.pop %v2802
    %v2834 = vmul.f32 %v2802, %v2833
    %v2835 = vsub.f32 1.0, %v2834
    %v2836 = vmul.f32 %v2833, %v2835
    %v2837 = vadd.f32 %v2833, %v2836
    %vm2838 = vweird.f32 %v2802
    %vm2839 = vweird.f32 %v2833
    %vm2840 = vmor %vm2838, %vm2839
    %v2841 = vsel %vm2840, %v2833, %v2837
    %v2842 = vand.u32 2147483647, %v2802
    %vm2843 = vcmp.eq.f32.partialorder %v2842, 8.507059e+37
    %v2844 = vand.u32 %v2802, 2147483648
    %v2845 = vor.u32 1.1754944e-38, %v2844
    %v2846 = vsel %vm2843, %v2845, %v2841
    %v2847 = vmul.f32 1.0, %v2846
    %v2848 = vtanh.pop %v2790
    %v2849 = vmul.f32 %v2832, %v2468
    %v2850 = vmul.f32 %v2817, %v2848
    %v2851 = vadd.f32 %v2849, %v2850
    %v2852 = vtanh.pop %v2851
    %v2853 = vmul.f32 %v2847, %v2852
    %2854 = vmatpush.msra.mxu0 %v243
    %2855 = vmatpush.msra.mxu0 %v239
    %2856 = vmatpush.msra.mxu0 %v235
    %2857 = vmatpush.msra.mxu0 %v231
    %2858 = vmatpush.msra.mxu0 %v227
    %2859 = vmatpush.msra.mxu0 %v223
    %2860 = vmatpush.msra.mxu0 %v219
    %2861 = vmatpush.msra.mxu0 %v215
    %2862 = vmatpush.msra.mxu0 %v211
    %2863 = vmatpush.msra.mxu0 %v207
    %2864 = vmatpush.msra.mxu0 %v203
    %2865 = vmatpush.msra.mxu0 %v199
    %2866 = vmatpush.msra.mxu0 %v195
    %2867 = vmatpush.msra.mxu0 %v191
    %2868 = vmatpush.msra.mxu0 %v187
    %2869 = vmatpush.msra.mxu0 %v183
    %2870 = vmatmul.f32.gmra.mxu0 %v2853
    %v2871 = vpop.f32.mrf.mxu0
    %v2872 = vadd.f32 0.0, %v2871
    %2873 = vdwg.mxu0
    %2874 = vmatpush.msra.mxu0 %v244
    %2875 = vmatpush.msra.mxu0 %v240
    %2876 = vmatpush.msra.mxu0 %v236
    %2877 = vmatpush.msra.mxu0 %v232
    %2878 = vmatpush.msra.mxu0 %v228
    %2879 = vmatpush.msra.mxu0 %v224
    %2880 = vmatpush.msra.mxu0 %v220
    %2881 = vmatpush.msra.mxu0 %v216
    %2882 = vmatpush.msra.mxu0 %v212
    %2883 = vmatpush.msra.mxu0 %v208
    %2884 = vmatpush.msra.mxu0 %v204
    %2885 = vmatpush.msra.mxu0 %v200
    %2886 = vmatpush.msra.mxu0 %v196
    %2887 = vmatpush.msra.mxu0 %v192
    %2888 = vmatpush.msra.mxu0 %v188
    %2889 = vmatpush.msra.mxu0 %v184
    %2890 = vmatmul.f32.gmra.mxu0 %v2853
    %v2891 = vpop.f32.mrf.mxu0
    %v2892 = vadd.f32 0.0, %v2891
    %2893 = vdwg.mxu0
    %2894 = vmatpush.msra.mxu0 %v245
    %2895 = vmatpush.msra.mxu0 %v241
    %2896 = vmatpush.msra.mxu0 %v237
    %2897 = vmatpush.msra.mxu0 %v233
    %2898 = vmatpush.msra.mxu0 %v229
    %2899 = vmatpush.msra.mxu0 %v225
    %2900 = vmatpush.msra.mxu0 %v221
    %2901 = vmatpush.msra.mxu0 %v217
    %2902 = vmatpush.msra.mxu0 %v213
    %2903 = vmatpush.msra.mxu0 %v209
    %2904 = vmatpush.msra.mxu0 %v205
    %2905 = vmatpush.msra.mxu0 %v201
    %2906 = vmatpush.msra.mxu0 %v197
    %2907 = vmatpush.msra.mxu0 %v193
    %2908 = vmatpush.msra.mxu0 %v189
    %2909 = vmatpush.msra.mxu0 %v185
    %2910 = vmatmul.f32.gmra.mxu0 %v2853
    %v2911 = vpop.f32.mrf.mxu0
    %v2912 = vadd.f32 0.0, %v2911
    %2913 = vdwg.mxu0
    %2914 = vmatpush.msra.mxu0 %v246
    %2915 = vmatpush.msra.mxu0 %v242
    %2916 = vmatpush.msra.mxu0 %v238
    %2917 = vmatpush.msra.mxu0 %v234
    %2918 = vmatpush.msra.mxu0 %v230
    %2919 = vmatpush.msra.mxu0 %v226
    %2920 = vmatpush.msra.mxu0 %v222
    %2921 = vmatpush.msra.mxu0 %v218
    %2922 = vmatpush.msra.mxu0 %v214
    %2923 = vmatpush.msra.mxu0 %v210
    %2924 = vmatpush.msra.mxu0 %v206
    %2925 = vmatpush.msra.mxu0 %v202
    %2926 = vmatpush.msra.mxu0 %v198
    %2927 = vmatpush.msra.mxu0 %v194
    %2928 = vmatpush.msra.mxu0 %v190
    %2929 = vmatpush.msra.mxu0 %v186
    %2930 = vmatmul.f32.gmra.mxu0 %v2853
    %v2931 = vpop.f32.mrf.mxu0
    %v2932 = vadd.f32 0.0, %v2931
    %2933 = vdwg.mxu0
    %v2934 = vadd.f32 %v2698, %v2872
    %v2935 = vadd.f32 %v2699, %v2892
    %v2936 = vadd.f32 %v2700, %v2912
    %v2937 = vadd.f32 %v2701, %v2932
    %v2938 = vxor.u32 %v2934, 2147483648
    %v2939 = vxor.u32 %v2935, 2147483648
    %v2940 = vxor.u32 %v2936, 2147483648
    %v2941 = vmul.f32 %v2938, 1.442695
    %v2942 = vpow.pop %v2941
    %v2943 = vmul.f32 %v2939, 1.442695
    %v2944 = vpow.pop %v2943
    %v2945 = vmul.f32 %v2940, 1.442695
    %v2946 = vpow.pop %v2945
    %v2947 = vadd.f32 %v2942, 1.0
    %v2948 = vadd.f32 %v2944, 1.0
    %v2949 = vadd.f32 %v2946, 1.0
    %v2950 = vrcp.pop %v2947
    %v2951 = vmul.f32 %v2947, %v2950
    %v2952 = vsub.f32 1.0, %v2951
    %v2953 = vmul.f32 %v2950, %v2952
    %v2954 = vadd.f32 %v2950, %v2953
    %vm2955 = vweird.f32 %v2947
    %vm2956 = vweird.f32 %v2950
    %vm2957 = vmor %vm2955, %vm2956
    %v2958 = vsel %vm2957, %v2950, %v2954
    %v2959 = vand.u32 2147483647, %v2947
    %vm2960 = vcmp.eq.f32.partialorder %v2959, 8.507059e+37
    %v2961 = vand.u32 %v2947, 2147483648
    %v2962 = vor.u32 1.1754944e-38, %v2961
    %v2963 = vsel %vm2960, %v2962, %v2958
    %v2964 = vmul.f32 1.0, %v2963
    %v2965 = vrcp.pop %v2948
    %v2966 = vmul.f32 %v2948, %v2965
    %v2967 = vsub.f32 1.0, %v2966
    %v2968 = vmul.f32 %v2965, %v2967
    %v2969 = vadd.f32 %v2965, %v2968
    %vm2970 = vweird.f32 %v2948
    %vm2971 = vweird.f32 %v2965
    %vm2972 = vmor %vm2970, %vm2971
    %v2973 = vsel %vm2972, %v2965, %v2969
    %v2974 = vand.u32 2147483647, %v2948
    %vm2975 = vcmp.eq.f32.partialorder %v2974, 8.507059e+37
    %v2976 = vand.u32 %v2948, 2147483648
    %v2977 = vor.u32 1.1754944e-38, %v2976
    %v2978 = vsel %vm2975, %v2977, %v2973
    %v2979 = vmul.f32 1.0, %v2978
    %v2980 = vrcp.pop %v2949
    %v2981 = vmul.f32 %v2949, %v2980
    %v2982 = vsub.f32 1.0, %v2981
    %v2983 = vmul.f32 %v2980, %v2982
    %v2984 = vadd.f32 %v2980, %v2983
    %vm2985 = vweird.f32 %v2949
    %vm2986 = vweird.f32 %v2980
    %vm2987 = vmor %vm2985, %vm2986
    %v2988 = vsel %vm2987, %v2980, %v2984
    %v2989 = vand.u32 2147483647, %v2949
    %vm2990 = vcmp.eq.f32.partialorder %v2989, 8.507059e+37
    %v2991 = vand.u32 %v2949, 2147483648
    %v2992 = vor.u32 1.1754944e-38, %v2991
    %v2993 = vsel %vm2990, %v2992, %v2988
    %v2994 = vmul.f32 1.0, %v2993
    %v2995 = vtanh.pop %v2937
    %v2996 = vmul.f32 %v2979, %v2615
    %v2997 = vmul.f32 %v2964, %v2995
    %v2998 = vadd.f32 %v2996, %v2997
    %v2999 = vtanh.pop %v2998
    %v3000 = vmul.f32 %v2994, %v2999
    %3001 = vmatpush.msra.mxu0 %v307
    %3002 = vmatpush.msra.mxu0 %v303
    %3003 = vmatpush.msra.mxu0 %v299
    %3004 = vmatpush.msra.mxu0 %v295
    %3005 = vmatpush.msra.mxu0 %v291
    %3006 = vmatpush.msra.mxu0 %v287
    %3007 = vmatpush.msra.mxu0 %v283
    %3008 = vmatpush.msra.mxu0 %v279
    %3009 = vmatpush.msra.mxu0 %v275
    %3010 = vmatpush.msra.mxu0 %v271
    %3011 = vmatpush.msra.mxu0 %v267
    %3012 = vmatpush.msra.mxu0 %v263
    %3013 = vmatpush.msra.mxu0 %v259
    %3014 = vmatpush.msra.mxu0 %v255
    %3015 = vmatpush.msra.mxu0 %v251
    %3016 = vmatpush.msra.mxu0 %v247
    %3017 = vmatmul.f32.gmra.mxu0 %v3000
    %v3018 = vpop.f32.mrf.mxu0
    %v3019 = vadd.f32 0.0, %v3018
    %3020 = vdwg.mxu0
    %3021 = vmatpush.msra.mxu0 %v308
    %3022 = vmatpush.msra.mxu0 %v304
    %3023 = vmatpush.msra.mxu0 %v300
    %3024 = vmatpush.msra.mxu0 %v296
    %3025 = vmatpush.msra.mxu0 %v292
    %3026 = vmatpush.msra.mxu0 %v288
    %3027 = vmatpush.msra.mxu0 %v284
    %3028 = vmatpush.msra.mxu0 %v280
    %3029 = vmatpush.msra.mxu0 %v276
    %3030 = vmatpush.msra.mxu0 %v272
    %3031 = vmatpush.msra.mxu0 %v268
    %3032 = vmatpush.msra.mxu0 %v264
    %3033 = vmatpush.msra.mxu0 %v260
    %3034 = vmatpush.msra.mxu0 %v256
    %3035 = vmatpush.msra.mxu0 %v252
    %3036 = vmatpush.msra.mxu0 %v248
    %3037 = vmatmul.f32.gmra.mxu0 %v3000
    %v3038 = vpop.f32.mrf.mxu0
    %v3039 = vadd.f32 0.0, %v3038
    %3040 = vdwg.mxu0
    %3041 = vmatpush.msra.mxu0 %v309
    %3042 = vmatpush.msra.mxu0 %v305
    %3043 = vmatpush.msra.mxu0 %v301
    %3044 = vmatpush.msra.mxu0 %v297
    %3045 = vmatpush.msra.mxu0 %v293
    %3046 = vmatpush.msra.mxu0 %v289
    %3047 = vmatpush.msra.mxu0 %v285
    %3048 = vmatpush.msra.mxu0 %v281
    %3049 = vmatpush.msra.mxu0 %v277
    %3050 = vmatpush.msra.mxu0 %v273
    %3051 = vmatpush.msra.mxu0 %v269
    %3052 = vmatpush.msra.mxu0 %v265
    %3053 = vmatpush.msra.mxu0 %v261
    %3054 = vmatpush.msra.mxu0 %v257
    %3055 = vmatpush.msra.mxu0 %v253
    %3056 = vmatpush.msra.mxu0 %v249
    %3057 = vmatmul.f32.gmra.mxu0 %v3000
    %v3058 = vpop.f32.mrf.mxu0
    %v3059 = vadd.f32 0.0, %v3058
    %3060 = vdwg.mxu0
    %3061 = vmatpush.msra.mxu0 %v310
    %3062 = vmatpush.msra.mxu0 %v306
    %3063 = vmatpush.msra.mxu0 %v302
    %3064 = vmatpush.msra.mxu0 %v298
    %3065 = vmatpush.msra.mxu0 %v294
    %3066 = vmatpush.msra.mxu0 %v290
    %3067 = vmatpush.msra.mxu0 %v286
    %3068 = vmatpush.msra.mxu0 %v282
    %3069 = vmatpush.msra.mxu0 %v278
    %3070 = vmatpush.msra.mxu0 %v274
    %3071 = vmatpush.msra.mxu0 %v270
    %3072 = vmatpush.msra.mxu0 %v266
    %3073 = vmatpush.msra.mxu0 %v262
    %3074 = vmatpush.msra.mxu0 %v258
    %3075 = vmatpush.msra.mxu0 %v254
    %3076 = vmatpush.msra.mxu0 %v250
    %3077 = vmatmul.f32.gmra.mxu0 %v3000
    %v3078 = vpop.f32.mrf.mxu0
    %v3079 = vadd.f32 0.0, %v3078
    %3080 = vdwg.mxu0
    %v3081 = vadd.f32 %v313, %v3019
    %v3082 = vadd.f32 %v314, %v3039
    %v3083 = vadd.f32 %v315, %v3059
    %v3084 = vadd.f32 %v316, %v3079
    %s3085 = scalar_lea.vmem [#allocation2], 224
    %v3086 = vld [vmem:[%s3085] sm:$0xff]
    %v3087 = vld [vmem:[%s3085 + $0x8] sm:$0xff]
    %v3088 = vld [vmem:[%s3085 + $0x10] sm:$0xff]
    %v3089 = vld [vmem:[%s3085 + $0x18] sm:$0xff]
    %3090 = vmatpush.msra.mxu0 %v179
    %3091 = vmatpush.msra.mxu0 %v175
    %3092 = vmatpush.msra.mxu0 %v171
    %3093 = vmatpush.msra.mxu0 %v167
    %3094 = vmatpush.msra.mxu0 %v163
    %3095 = vmatpush.msra.mxu0 %v159
    %3096 = vmatpush.msra.mxu0 %v155
    %3097 = vmatpush.msra.mxu0 %v151
    %3098 = vmatpush.msra.mxu0 %v147
    %3099 = vmatpush.msra.mxu0 %v143
    %3100 = vmatpush.msra.mxu0 %v139
    %3101 = vmatpush.msra.mxu0 %v135
    %3102 = vmatpush.msra.mxu0 %v131
    %3103 = vmatpush.msra.mxu0 %v127
    %3104 = vmatpush.msra.mxu0 %v123
    %3105 = vmatpush.msra.mxu0 %v119
    %3106 = vmatmul.f32.gmra.mxu0 %v2853
    %v3107 = vpop.f32.mrf.mxu0
    %v3108 = vadd.f32 0.0, %v3107
    %3109 = vdwg.mxu0
    %3110 = vmatpush.msra.mxu0 %v180
    %3111 = vmatpush.msra.mxu0 %v176
    %3112 = vmatpush.msra.mxu0 %v172
    %3113 = vmatpush.msra.mxu0 %v168
    %3114 = vmatpush.msra.mxu0 %v164
    %3115 = vmatpush.msra.mxu0 %v160
    %3116 = vmatpush.msra.mxu0 %v156
    %3117 = vmatpush.msra.mxu0 %v152
    %3118 = vmatpush.msra.mxu0 %v148
    %3119 = vmatpush.msra.mxu0 %v144
    %3120 = vmatpush.msra.mxu0 %v140
    %3121 = vmatpush.msra.mxu0 %v136
    %3122 = vmatpush.msra.mxu0 %v132
    %3123 = vmatpush.msra.mxu0 %v128
    %3124 = vmatpush.msra.mxu0 %v124
    %3125 = vmatpush.msra.mxu0 %v120
    %3126 = vmatmul.f32.gmra.mxu0 %v2853
    %v3127 = vpop.f32.mrf.mxu0
    %v3128 = vadd.f32 0.0, %v3127
    %3129 = vdwg.mxu0
    %3130 = vmatpush.msra.mxu0 %v181
    %3131 = vmatpush.msra.mxu0 %v177
    %3132 = vmatpush.msra.mxu0 %v173
    %3133 = vmatpush.msra.mxu0 %v169
    %3134 = vmatpush.msra.mxu0 %v165
    %3135 = vmatpush.msra.mxu0 %v161
    %3136 = vmatpush.msra.mxu0 %v157
    %3137 = vmatpush.msra.mxu0 %v153
    %3138 = vmatpush.msra.mxu0 %v149
    %3139 = vmatpush.msra.mxu0 %v145
    %3140 = vmatpush.msra.mxu0 %v141
    %3141 = vmatpush.msra.mxu0 %v137
    %3142 = vmatpush.msra.mxu0 %v133
    %3143 = vmatpush.msra.mxu0 %v129
    %3144 = vmatpush.msra.mxu0 %v125
    %3145 = vmatpush.msra.mxu0 %v121
    %3146 = vmatmul.f32.gmra.mxu0 %v2853
    %v3147 = vpop.f32.mrf.mxu0
    %v3148 = vadd.f32 0.0, %v3147
    %3149 = vdwg.mxu0
    %3150 = vmatpush.msra.mxu0 %v182
    %3151 = vmatpush.msra.mxu0 %v178
    %3152 = vmatpush.msra.mxu0 %v174
    %3153 = vmatpush.msra.mxu0 %v170
    %3154 = vmatpush.msra.mxu0 %v166
    %3155 = vmatpush.msra.mxu0 %v162
    %3156 = vmatpush.msra.mxu0 %v158
    %3157 = vmatpush.msra.mxu0 %v154
    %3158 = vmatpush.msra.mxu0 %v150
    %3159 = vmatpush.msra.mxu0 %v146
    %3160 = vmatpush.msra.mxu0 %v142
    %3161 = vmatpush.msra.mxu0 %v138
    %3162 = vmatpush.msra.mxu0 %v134
    %3163 = vmatpush.msra.mxu0 %v130
    %3164 = vmatpush.msra.mxu0 %v126
    %3165 = vmatpush.msra.mxu0 %v122
    %3166 = vmatmul.f32.gmra.mxu0 %v2853
    %v3167 = vpop.f32.mrf.mxu0
    %v3168 = vadd.f32 0.0, %v3167
    %3169 = vdwg.mxu0
    %v3170 = vadd.f32 %v3086, %v3108
    %v3171 = vadd.f32 %v3087, %v3128
    %v3172 = vadd.f32 %v3088, %v3148
    %v3173 = vadd.f32 %v3089, %v3168
    %v3174 = vxor.u32 %v3170, 2147483648
    %v3175 = vxor.u32 %v3171, 2147483648
    %v3176 = vxor.u32 %v3172, 2147483648
    %v3177 = vmul.f32 %v3174, 1.442695
    %v3178 = vpow.pop %v3177
    %v3179 = vmul.f32 %v3175, 1.442695
    %v3180 = vpow.pop %v3179
    %v3181 = vmul.f32 %v3176, 1.442695
    %v3182 = vpow.pop %v3181
    %v3183 = vadd.f32 %v3178, 1.0
    %v3184 = vadd.f32 %v3180, 1.0
    %v3185 = vadd.f32 %v3182, 1.0
    %v3186 = vrcp.pop %v3183
    %v3187 = vmul.f32 %v3183, %v3186
    %v3188 = vsub.f32 1.0, %v3187
    %v3189 = vmul.f32 %v3186, %v3188
    %v3190 = vadd.f32 %v3186, %v3189
    %vm3191 = vweird.f32 %v3183
    %vm3192 = vweird.f32 %v3186
    %vm3193 = vmor %vm3191, %vm3192
    %v3194 = vsel %vm3193, %v3186, %v3190
    %v3195 = vand.u32 2147483647, %v3183
    %vm3196 = vcmp.eq.f32.partialorder %v3195, 8.507059e+37
    %v3197 = vand.u32 %v3183, 2147483648
    %v3198 = vor.u32 1.1754944e-38, %v3197
    %v3199 = vsel %vm3196, %v3198, %v3194
    %v3200 = vmul.f32 1.0, %v3199
    %v3201 = vrcp.pop %v3184
    %v3202 = vmul.f32 %v3184, %v3201
    %v3203 = vsub.f32 1.0, %v3202
    %v3204 = vmul.f32 %v3201, %v3203
    %v3205 = vadd.f32 %v3201, %v3204
    %vm3206 = vweird.f32 %v3184
    %vm3207 = vweird.f32 %v3201
    %vm3208 = vmor %vm3206, %vm3207
    %v3209 = vsel %vm3208, %v3201, %v3205
    %v3210 = vand.u32 2147483647, %v3184
    %vm3211 = vcmp.eq.f32.partialorder %v3210, 8.507059e+37
    %v3212 = vand.u32 %v3184, 2147483648
    %v3213 = vor.u32 1.1754944e-38, %v3212
    %v3214 = vsel %vm3211, %v3213, %v3209
    %v3215 = vmul.f32 1.0, %v3214
    %v3216 = vrcp.pop %v3185
    %v3217 = vmul.f32 %v3185, %v3216
    %v3218 = vsub.f32 1.0, %v3217
    %v3219 = vmul.f32 %v3216, %v3218
    %v3220 = vadd.f32 %v3216, %v3219
    %vm3221 = vweird.f32 %v3185
    %vm3222 = vweird.f32 %v3216
    %vm3223 = vmor %vm3221, %vm3222
    %v3224 = vsel %vm3223, %v3216, %v3220
    %v3225 = vand.u32 2147483647, %v3185
    %vm3226 = vcmp.eq.f32.partialorder %v3225, 8.507059e+37
    %v3227 = vand.u32 %v3185, 2147483648
    %v3228 = vor.u32 1.1754944e-38, %v3227
    %v3229 = vsel %vm3226, %v3228, %v3224
    %v3230 = vmul.f32 1.0, %v3229
    %v3231 = vtanh.pop %v3173
    %v3232 = vmul.f32 %v3215, %v2851
    %v3233 = vmul.f32 %v3200, %v3231
    %v3234 = vadd.f32 %v3232, %v3233
    %v3235 = vtanh.pop %v3234
    %v3236 = vmul.f32 %v3230, %v3235
    %3237 = vmatpush.msra.mxu0 %v243
    %3238 = vmatpush.msra.mxu0 %v239
    %3239 = vmatpush.msra.mxu0 %v235
    %3240 = vmatpush.msra.mxu0 %v231
    %3241 = vmatpush.msra.mxu0 %v227
    %3242 = vmatpush.msra.mxu0 %v223
    %3243 = vmatpush.msra.mxu0 %v219
    %3244 = vmatpush.msra.mxu0 %v215
    %3245 = vmatpush.msra.mxu0 %v211
    %3246 = vmatpush.msra.mxu0 %v207
    %3247 = vmatpush.msra.mxu0 %v203
    %3248 = vmatpush.msra.mxu0 %v199
    %3249 = vmatpush.msra.mxu0 %v195
    %3250 = vmatpush.msra.mxu0 %v191
    %3251 = vmatpush.msra.mxu0 %v187
    %3252 = vmatpush.msra.mxu0 %v183
    %3253 = vmatmul.f32.gmra.mxu0 %v3236
    %v3254 = vpop.f32.mrf.mxu0
    %v3255 = vadd.f32 0.0, %v3254
    %3256 = vdwg.mxu0
    %3257 = vmatpush.msra.mxu0 %v244
    %3258 = vmatpush.msra.mxu0 %v240
    %3259 = vmatpush.msra.mxu0 %v236
    %3260 = vmatpush.msra.mxu0 %v232
    %3261 = vmatpush.msra.mxu0 %v228
    %3262 = vmatpush.msra.mxu0 %v224
    %3263 = vmatpush.msra.mxu0 %v220
    %3264 = vmatpush.msra.mxu0 %v216
    %3265 = vmatpush.msra.mxu0 %v212
    %3266 = vmatpush.msra.mxu0 %v208
    %3267 = vmatpush.msra.mxu0 %v204
    %3268 = vmatpush.msra.mxu0 %v200
    %3269 = vmatpush.msra.mxu0 %v196
    %3270 = vmatpush.msra.mxu0 %v192
    %3271 = vmatpush.msra.mxu0 %v188
    %3272 = vmatpush.msra.mxu0 %v184
    %3273 = vmatmul.f32.gmra.mxu0 %v3236
    %v3274 = vpop.f32.mrf.mxu0
    %v3275 = vadd.f32 0.0, %v3274
    %3276 = vdwg.mxu0
    %3277 = vmatpush.msra.mxu0 %v245
    %3278 = vmatpush.msra.mxu0 %v241
    %3279 = vmatpush.msra.mxu0 %v237
    %3280 = vmatpush.msra.mxu0 %v233
    %3281 = vmatpush.msra.mxu0 %v229
    %3282 = vmatpush.msra.mxu0 %v225
    %3283 = vmatpush.msra.mxu0 %v221
    %3284 = vmatpush.msra.mxu0 %v217
    %3285 = vmatpush.msra.mxu0 %v213
    %3286 = vmatpush.msra.mxu0 %v209
    %3287 = vmatpush.msra.mxu0 %v205
    %3288 = vmatpush.msra.mxu0 %v201
    %3289 = vmatpush.msra.mxu0 %v197
    %3290 = vmatpush.msra.mxu0 %v193
    %3291 = vmatpush.msra.mxu0 %v189
    %3292 = vmatpush.msra.mxu0 %v185
    %3293 = vmatmul.f32.gmra.mxu0 %v3236
    %v3294 = vpop.f32.mrf.mxu0
    %v3295 = vadd.f32 0.0, %v3294
    %3296 = vdwg.mxu0
    %3297 = vmatpush.msra.mxu0 %v246
    %3298 = vmatpush.msra.mxu0 %v242
    %3299 = vmatpush.msra.mxu0 %v238
    %3300 = vmatpush.msra.mxu0 %v234
    %3301 = vmatpush.msra.mxu0 %v230
    %3302 = vmatpush.msra.mxu0 %v226
    %3303 = vmatpush.msra.mxu0 %v222
    %3304 = vmatpush.msra.mxu0 %v218
    %3305 = vmatpush.msra.mxu0 %v214
    %3306 = vmatpush.msra.mxu0 %v210
    %3307 = vmatpush.msra.mxu0 %v206
    %3308 = vmatpush.msra.mxu0 %v202
    %3309 = vmatpush.msra.mxu0 %v198
    %3310 = vmatpush.msra.mxu0 %v194
    %3311 = vmatpush.msra.mxu0 %v190
    %3312 = vmatpush.msra.mxu0 %v186
    %3313 = vmatmul.f32.gmra.mxu0 %v3236
    %v3314 = vpop.f32.mrf.mxu0
    %v3315 = vadd.f32 0.0, %v3314
    %3316 = vdwg.mxu0
    %v3317 = vadd.f32 %v3081, %v3255
    %v3318 = vadd.f32 %v3082, %v3275
    %v3319 = vadd.f32 %v3083, %v3295
    %v3320 = vadd.f32 %v3084, %v3315
    %v3321 = vxor.u32 %v3317, 2147483648
    %v3322 = vxor.u32 %v3318, 2147483648
    %v3323 = vxor.u32 %v3319, 2147483648
    %v3324 = vmul.f32 %v3321, 1.442695
    %v3325 = vpow.pop %v3324
    %v3326 = vmul.f32 %v3322, 1.442695
    %v3327 = vpow.pop %v3326
    %v3328 = vmul.f32 %v3323, 1.442695
    %v3329 = vpow.pop %v3328
    %v3330 = vadd.f32 %v3325, 1.0
    %v3331 = vadd.f32 %v3327, 1.0
    %v3332 = vadd.f32 %v3329, 1.0
    %v3333 = vrcp.pop %v3330
    %v3334 = vmul.f32 %v3330, %v3333
    %v3335 = vsub.f32 1.0, %v3334
    %v3336 = vmul.f32 %v3333, %v3335
    %v3337 = vadd.f32 %v3333, %v3336
    %vm3338 = vweird.f32 %v3330
    %vm3339 = vweird.f32 %v3333
    %vm3340 = vmor %vm3338, %vm3339
    %v3341 = vsel %vm3340, %v3333, %v3337
    %v3342 = vand.u32 2147483647, %v3330
    %vm3343 = vcmp.eq.f32.partialorder %v3342, 8.507059e+37
    %v3344 = vand.u32 %v3330, 2147483648
    %v3345 = vor.u32 1.1754944e-38, %v3344
    %v3346 = vsel %vm3343, %v3345, %v3341
    %v3347 = vmul.f32 1.0, %v3346
    %v3348 = vrcp.pop %v3331
    %v3349 = vmul.f32 %v3331, %v3348
    %v3350 = vsub.f32 1.0, %v3349
    %v3351 = vmul.f32 %v3348, %v3350
    %v3352 = vadd.f32 %v3348, %v3351
    %vm3353 = vweird.f32 %v3331
    %vm3354 = vweird.f32 %v3348
    %vm3355 = vmor %vm3353, %vm3354
    %v3356 = vsel %vm3355, %v3348, %v3352
    %v3357 = vand.u32 2147483647, %v3331
    %vm3358 = vcmp.eq.f32.partialorder %v3357, 8.507059e+37
    %v3359 = vand.u32 %v3331, 2147483648
    %v3360 = vor.u32 1.1754944e-38, %v3359
    %v3361 = vsel %vm3358, %v3360, %v3356
    %v3362 = vmul.f32 1.0, %v3361
    %v3363 = vrcp.pop %v3332
    %v3364 = vmul.f32 %v3332, %v3363
    %v3365 = vsub.f32 1.0, %v3364
    %v3366 = vmul.f32 %v3363, %v3365
    %v3367 = vadd.f32 %v3363, %v3366
    %vm3368 = vweird.f32 %v3332
    %vm3369 = vweird.f32 %v3363
    %vm3370 = vmor %vm3368, %vm3369
    %v3371 = vsel %vm3370, %v3363, %v3367
    %v3372 = vand.u32 2147483647, %v3332
    %vm3373 = vcmp.eq.f32.partialorder %v3372, 8.507059e+37
    %v3374 = vand.u32 %v3332, 2147483648
    %v3375 = vor.u32 1.1754944e-38, %v3374
    %v3376 = vsel %vm3373, %v3375, %v3371
    %v3377 = vmul.f32 1.0, %v3376
    %v3378 = vtanh.pop %v3320
    %v3379 = vmul.f32 %v3362, %v2998
    %v3380 = vmul.f32 %v3347, %v3378
    %v3381 = vadd.f32 %v3379, %v3380
    %v3382 = vtanh.pop %v3381
    %v3383 = vmul.f32 %v3377, %v3382
    %v3384 = vld [vmem:[#allocation11] sm:$0xff]
    %v3385 = vld [vmem:[#allocation11 + $0x8] sm:$0xff]
    %v3386 = vld [vmem:[#allocation11 + $0x10] sm:$0xff]
    %v3387 = vld [vmem:[#allocation11 + $0x18] sm:$0xff]
    %v3388 = vld [vmem:[#allocation11 + $0x20] sm:$0xff]
    %v3389 = vld [vmem:[#allocation11 + $0x28] sm:$0xff]
    %v3390 = vld [vmem:[#allocation11 + $0x30] sm:$0xff]
    %v3391 = vld [vmem:[#allocation11 + $0x38] sm:$0xff]
    %v3392 = vld [vmem:[#allocation11 + $0x40] sm:$0xff]
    %v3393 = vld [vmem:[#allocation11 + $0x48] sm:$0xff]
    %v3394 = vld [vmem:[#allocation11 + $0x50] sm:$0xff]
    %v3395 = vld [vmem:[#allocation11 + $0x58] sm:$0xff]
    %v3396 = vld [vmem:[#allocation11 + $0x60] sm:$0xff]
    %v3397 = vld [vmem:[#allocation11 + $0x68] sm:$0xff]
    %v3398 = vld [vmem:[#allocation11 + $0x70] sm:$0xff]
    %v3399 = vld [vmem:[#allocation11 + $0x78] sm:$0xff]
    %v3400 = vld [vmem:[%s6] sm:$0x1]
    %v3402 = vperm.slane %v3400, 0
    %3404 = vmatpush.msra.mxu0 %v3399
    %3405 = vmatpush.msra.mxu0 %v3398
    %3406 = vmatpush.msra.mxu0 %v3397
    %3407 = vmatpush.msra.mxu0 %v3396
    %3408 = vmatpush.msra.mxu0 %v3395
    %3409 = vmatpush.msra.mxu0 %v3394
    %3410 = vmatpush.msra.mxu0 %v3393
    %3411 = vmatpush.msra.mxu0 %v3392
    %3412 = vmatpush.msra.mxu0 %v3391
    %3413 = vmatpush.msra.mxu0 %v3390
    %3414 = vmatpush.msra.mxu0 %v3389
    %3415 = vmatpush.msra.mxu0 %v3388
    %3416 = vmatpush.msra.mxu0 %v3387
    %3417 = vmatpush.msra.mxu0 %v3386
    %3418 = vmatpush.msra.mxu0 %v3385
    %3419 = vmatpush.msra.mxu0 %v3384
    %3420 = vmatmul.f32.gmra.mxu0 %v3383
    %v3421 = vpop.f32.mrf.mxu0
    %v3422 = vadd.f32 %v3402, %v3421
    %3423 = vdwg.mxu0
    %3424 = vst [vmem:[#allocation13] sm:$0xff] %v3422
    // Predicated region
    $region54: #{tpu_custom_call.1} parent=1 // pred_check
      _
    $region55: #{tpu_custom_call.1} parent=1 // pred_check_branch
      %3426 = sbr.rel (0) target = $region57
    $region56: #{tpu_custom_call.1} parent=1 // pred_region
      %3428 = vsyncadd [#allocation4], 0
      %s3430 = sshll.u32 [#allocation13], 4
      %s3431 = int_to_ptr.vmem [resolvable:$true] %s3430
      %s3432 = sshll.u32 %s7, 4
      %s3433 = int_to_ptr.hbm [resolvable:$true] %s3432
      %3435 = dma.vmem_to_hbm [thread:$0]  %s3431, 128, %s3433, [#allocation4]
    $region57: #{tpu_custom_call.1} parent=1 // pred_fallthru
      _
    // Predicated region
    $region58: #{tpu_custom_call.1} parent=1 // pred_check
      _
    $region59: #{tpu_custom_call.1} parent=1 // pred_check_branch
      %3437 = sbr.rel (0) target = $region61
    $region60: #{tpu_custom_call.1} parent=1 // pred_region
      %3439 = dma.done [#allocation4], 128
    $region61: #{tpu_custom_call.1} parent=1 // pred_fallthru
      _
    %3440 = vsyncpa [#allocation3], 1
    %3441 = vsyncpa [#allocation6], 1
    %3442 = vsyncpa [#allocation9], 1
    %3443 = vsyncpa [#allocation12], 1
    %3444 = vsyncpa [#allocation4], 1

</llo_original>
